<compile_context>
chip_gen: v5e
topology: v5e:2x2
jax: 0.10.0
libtpu: 0.0.40
codegen_flags: <defaults>
</compile_context>

<pallas_src>
import jax
import jax.numpy as jnp
from jax import lax
from jax.experimental import pallas as pl
from jax.experimental.pallas import tpu as pltpu


# ---------------------------------------------------------------------------
# Parameter construction / packing (host-side, one-time)
# ---------------------------------------------------------------------------

def fold_bn(gamma, beta, mean, var, eps=1e-5):
    scale = gamma / jnp.sqrt(var + eps)
    bias = beta - mean * scale
    return scale[:, None].astype(jnp.float32), bias[:, None].astype(jnp.float32)


def make_params(key, in_dim):
    """Raw per-projection parameters (mirrors the PyTorch module, inference-mode BN)."""
    C, C8 = in_dim, in_dim // 8
    ks = jax.random.split(key, 16)

    def bn(kg, kb, km, kv, n):
        gamma = 1.0 + 0.1 * jax.random.normal(kg, (n,))
        beta = 0.1 * jax.random.normal(kb, (n,))
        mean = 0.1 * jax.random.normal(km, (n,))
        var = jnp.abs(jax.random.normal(kv, (n,))) + 0.5
        return fold_bn(gamma, beta, mean, var)

    wq = 0.1 * jax.random.normal(ks[0], (C8, C), jnp.float32)  # Conv1d (out,in,1) squeezed
    wk = 0.1 * jax.random.normal(ks[1], (C8, C), jnp.float32)
    wv = 0.1 * jax.random.normal(ks[2], (C, C), jnp.float32)
    sq, bq = bn(ks[3], ks[4], ks[5], ks[6], C8)
    sk, bk = bn(ks[7], ks[8], ks[9], ks[10], C8)
    sv, bv = bn(ks[11], ks[12], ks[13], ks[14], C)
    # nn.Parameter(torch.zeros(1)) in the module; use a nonzero deterministic value so
    # the attention path is actually exercised by the test.
    alpha = (0.5 + 0.1 * jax.random.normal(ks[15], (1,))).reshape(1, 1).astype(jnp.float32)
    return dict(wq=wq, sq=sq, bq=bq, wk=wk, sk=sk, bk=bk,
                wv=wv, sv=sv, bv=bv, alpha=alpha)


def pack_caa_params(p):
    """Fuse q/k/v weights, fold BN scale in, pad q/k sections to 16 rows (bf16 tile)."""
    wq, wk, wv = p["wq"], p["wk"], p["wv"]
    C8, C = wq.shape
    assert C % 8 == 0, "in_dim must be divisible by 8"
    # 16-row alignment: bf16 sublane tiles are (16, 128), so 16-aligned q/k sections
    # mean the in-kernel row slices + bf16 casts never straddle a packed tile.
    C8p = ((C8 + 15) // 16) * 16
    pad = C8p - C8

    def fold(w, s):                              # w' = bn_scale * w (zero runtime cost)
        return w * s

    # Invariant: padded WEIGHT and BIAS rows are both exactly zero => padded q/k rows
    # are exactly 0 after ReLU and do not perturb the similarity matmul.
    wq_f = jnp.pad(fold(wq, p["sq"]), ((0, pad), (0, 0)))
    wk_f = jnp.pad(fold(wk, p["sk"]), ((0, pad), (0, 0)))
    bq_p = jnp.pad(p["bq"], ((0, pad), (0, 0)))
    bk_p = jnp.pad(p["bk"], ((0, pad), (0, 0)))
    w_all = jnp.concatenate([wq_f, wk_f, fold(wv, p["sv"])], axis=0)   # (2*C8p + C, C)
    b_all = jnp.concatenate([bq_p, bk_p, p["bv"]], axis=0)             # (2*C8p + C, 1)
    return dict(w_all=w_all.astype(jnp.bfloat16),   # bf16 MXU operands
                b_all=b_all.astype(jnp.float32),    # bias stays f32
                alpha=p["alpha"].astype(jnp.float32),
                c8p=int(C8p))


# ---------------------------------------------------------------------------
# Block-size / VMEM policy
# ---------------------------------------------------------------------------

def _pick_b_blk(B, L, target_lanes=256, max_fold=32):
    """Largest divisor of B so BL = b_blk*L is lane-dense (<= target_lanes, ideally a
    multiple of 128) while keeping G = B // b_blk >= 2 (both v7x TensorCores busy)."""
    divs = [d for d in range(1, B + 1) if B % d == 0]
    cands = [d for d in divs
             if d * L <= target_lanes and d <= max_fold and (B // d >= 2 or B == 1)]
    if not cands:
        cands = [1]
    aligned = [d for d in cands if (d * L) % 128 == 0]
    return max(aligned) if aligned else max(cands)


def _vmem_limit_bytes():
    """~85% of physical VMEM (raises the 32 MiB default scoped limit on v5e/v6e while
    respecting v7x's 64 MiB); falls back to 64 MiB if the query is unavailable."""
    try:
        return int(pltpu.get_tpu_info().vmem_capacity_bytes * 0.85)
    except Exception:
        return 64 * 1024 * 1024


# ---------------------------------------------------------------------------
# Pallas kernel
# ---------------------------------------------------------------------------

def caa_forward(x, packed, b_blk=None):
    """x: (B, L, C) float32 (PyTorch forward input layout); returns (B, C, L)."""
    B, L, C = x.shape
    assert C % 8 == 0, "in_dim must be divisible by 8"
    C8p = packed["c8p"]
    w_all, b_all, alpha = packed["w_all"], packed["b_all"], packed["alpha"]
    O = w_all.shape[0]
    assert O == 2 * C8p + C

    if b_blk is None:
        b_blk = _pick_b_blk(B, L)
    assert B % b_blk == 0
    G = B // b_blk
    BL = b_blk * L

    # Free reshape (collapses contiguous leading dims) — no HBM transpose pass.
    x2 = x.reshape(G, BL, C).astype(jnp.float32)
    vmem_limit = _vmem_limit_bytes()

    def kernel(alpha_ref, x_ref, w_ref, b_ref, o_ref):
        xf = x_ref[...]                                  # (BL, C) f32
        xb = xf.astype(jnp.bfloat16)

        # Fused, BN-folded q/k/v projection: one MXU pass, contracting the channel
        # axis of both operands (no transpose of x). Lane-dense (O, BL) result.
        qkv = lax.dot_general(
            w_ref[...], xb,
            dimension_numbers=(((1,), (1,)), ((), ())),
            preferred_element_type=jnp.float32)          # (O, BL)
        qkv = jnp.maximum(qkv + b_ref[...], 0.0)         # folded-BN bias + ReLU, f32

        # 16-row-aligned sublane slices (C8p is a multiple of 16); padded rows are 0.
        q = qkv[:C8p].astype(jnp.bfloat16)               # (C8p, BL)
        k = qkv[C8p:2 * C8p].astype(jnp.bfloat16)        # (C8p, BL)
        v = qkv[2 * C8p:].astype(jnp.bfloat16)           # (C,   BL)

        # Batched similarity for all b_blk folded elements at once (full-BL lanes):
        # sim[a, b] = sum_c k[c, a] * q[c, b].  Cross-batch entries are masked below.
        sim = lax.dot_general(
            k, q, dimension_numbers=(((0,), (0,)), ((), ())),
            preferred_element_type=jnp.float32)          # (BL, BL)

        if b_blk > 1:
            # Block-diagonal (same folded batch element) mask; compares only.
            row_ids = lax.broadcasted_iota(jnp.int32, (BL, BL), 0)
            col_ids = lax.broadcasted_iota(jnp.int32, (BL, BL), 1)
            same = None
            for i in range(b_blk):                       # static, small unrolled loop
                lo = i * L
                in_r = (row_ids >= lo) & (row_ids < lo + L)
                in_c = (col_ids >= lo) & (col_ids < lo + L)
                blk = in_r & in_c
                same = blk if same is None else (same | blk)
            sim_for_min = jnp.where(same, sim, jnp.float32(jnp.inf))
        else:
            same = None
            sim_for_min = sim

        # softmax(rowmax(sim) - sim) == exp(rowmin(sim) - sim) / rowsum
        # (one XLU row reduction); cross-batch entries forced to exp(-inf) == 0.
        rowmin = jnp.min(sim_for_min, axis=-1, keepdims=True)
        z = rowmin - sim
        if same is not None:
            z = jnp.where(same, z, jnp.float32(-jnp.inf))
        e = jnp.exp(z)
        aff = e * pl.reciprocal(jnp.sum(e, axis=-1, keepdims=True), approx=True)

        out = jnp.dot(v, aff.astype(jnp.bfloat16),
                      preferred_element_type=jnp.float32)   # (C, BL), lane-dense

        # Residual stays f32; single in-kernel XLU transpose of the x block.
        o_ref[...] = alpha_ref[0, 0] * out + xf.T

    def run(single_buffer_consts):
        const_kw = dict(pipeline_mode=pl.Buffered(1)) if single_buffer_consts else {}
        in_specs = [
            pl.BlockSpec(memory_space=pltpu.SMEM),                 # alpha (1, 1)
            # NOTE: raise to pipeline_mode=pl.Buffered(3) if profiling shows exposed
            # x-block DMA (cheap on v5e/v6e; check VMEM budget first on v7x).
            pl.BlockSpec((None, BL, C), lambda g: (g, 0, 0)),      # x block (lead squeezed)
            pl.BlockSpec((O, C), lambda g: (0, 0), **const_kw),    # fused weights (const)
            pl.BlockSpec((O, 1), lambda g: (0, 0), **const_kw),    # fused biases (const)
        ]
        return pl.pallas_call(
            kernel,
            out_shape=jax.ShapeDtypeStruct((G, C, BL), jnp.float32),
            grid_spec=pltpu.PrefetchScalarGridSpec(
                num_scalar_prefetch=0,
                grid=(G,),
                in_specs=in_specs,
                out_specs=pl.BlockSpec((None, C, BL), lambda g: (g, 0, 0)),
            ),
            compiler_params=pltpu.CompilerParams(
                dimension_semantics=("parallel",),
                vmem_limit_bytes=vmem_limit),
        )(alpha, x2, w_all, b_all)

    try:
        out = run(True)        # single-buffer the constant weight/bias blocks
    except Exception:
        out = run(False)       # fallback: default double-buffering (same math)

    if b_blk == 1:
        return out.reshape(B, C, L)
    # Un-fold the lane-packed batch outside the kernel (kernel stores stay lane-dense).
    return out.reshape(G, C, b_blk, L).transpose(0, 2, 1, 3).reshape(B, C, L)


# ---------------------------------------------------------------------------
# Pure-JAX f32 reference (mirrors the PyTorch forward, inference-mode BN)
# ---------------------------------------------------------------------------

def caa_reference(x, p):
    xh = jnp.transpose(x, (0, 2, 1))  # (B, C, L)
    hp = jax.lax.Precision.HIGHEST

    def proj(w, s, b):
        y = jnp.einsum('oc,bcl->bol', w, xh, precision=hp)
        return jnp.maximum(s[None, :, :] * y + b[None, :, :], 0.0)

    q = proj(p["wq"], p["sq"], p["bq"])
    k = proj(p["wk"], p["sk"], p["bk"])
    v = proj(p["wv"], p["sv"], p["bv"])
    sim = jnp.einsum('bci,bcj->bij', k, q, precision=hp)
    aff = jnp.max(sim, axis=-1, keepdims=True) - sim
    aff = jax.nn.softmax(aff, axis=-1)
    out = jnp.einsum('bcl,blj->bcj', v, aff, precision=hp)
    return p["alpha"].reshape(()) * out + xh


if __name__ == "__main__":
    # B=16 (so the batch-folding + G>=2 levers are exercised: b_blk=8 -> BL=128, G=2),
    # L=16 points, in_dim=32 channels. x: (B, L, in_dim); module's Conv1d channels == in_dim.
    B, L, in_dim = 16, 16, 32
    key = jax.random.PRNGKey(0)
    kx, kp = jax.random.split(key)
    x = jax.random.normal(kx, (B, L, in_dim), jnp.float32)

    params = make_params(kp, in_dim)
    packed = pack_caa_params(params)          # one-time host-side packing

    out = caa_forward(x, packed)
    out = jax.block_until_ready(out)

    ref = caa_reference(x, params)
    assert out.shape == (B, in_dim, L)
    max_err = jnp.max(jnp.abs(out - ref))
    # Kernel uses bf16 MXU operands (f32 accumulation) + approx reciprocal, so compare
    # against the pure-f32 reference with a matching tolerance.
    assert jnp.allclose(out, ref, rtol=2e-2, atol=3e-2), f"max abs err = {max_err}"
    print("KERNEL_OK")
</pallas_src>

<mosaic_0001>
module attributes {stable_mosaic.version = 11 : i64} {
  func.func @kernel(%arg0: i32, %arg1: memref<1x1xf32, #tpu.memory_space<smem>>, %arg2: memref<1x128x32xf32, #tpu.memory_space<vmem>>, %arg3: memref<64x32xbf16, #tpu.memory_space<vmem>>, %arg4: memref<64x1xf32, #tpu.memory_space<vmem>>, %arg5: memref<1x32x128xf32, #tpu.memory_space<vmem>>) attributes {dimension_semantics = [#tpu.dimension_semantics<parallel>], iteration_bounds = array<i64: 2>, scalar_prefetch = 0 : i64, scratch_operands = 0 : i64, tpu.core_type = #tpu.core_type<tc>, window_params = [{transform_indices = @transform_0, window_bounds = array<i64: 1, 1>}, {transform_indices = @transform_1, window_bounds = array<i64: 1, 128, 32>}, {pipeline_mode = #tpu.pipeline_mode<synchronous>, transform_indices = @transform_2, window_bounds = array<i64: 64, 32>}, {pipeline_mode = #tpu.pipeline_mode<synchronous>, transform_indices = @transform_3, window_bounds = array<i64: 64, 1>}, {transform_indices = @transform_4, window_bounds = array<i64: 1, 32, 128>}]} {
    %c0 = arith.constant 0 : index
    %c0_0 = arith.constant 0 : index
    %c0_1 = arith.constant 0 : index
    %0 = vector.load %arg2[%c0, %c0_0, %c0_1] : memref<1x128x32xf32, #tpu.memory_space<vmem>>, vector<1x128x32xf32>
    %1 = vector.shape_cast %0 : vector<1x128x32xf32> to vector<128x32xf32>
    %2 = arith.truncf %1 : vector<128x32xf32> to vector<128x32xbf16>
    %c0_2 = arith.constant 0 : index
    %c0_3 = arith.constant 0 : index
    %3 = vector.load %arg3[%c0_2, %c0_3] : memref<64x32xbf16, #tpu.memory_space<vmem>>, vector<64x32xbf16>
    %cst = arith.constant dense<0.000000e+00> : vector<64x128xf32>
    %4 = tpu.matmul %3, %2, %cst {dimension_numbers = #tpu.dot_dimension_numbers<[1], [1], [0], [0], [0, 0, 1, 0], [], []>} : vector<64x32xbf16>, vector<128x32xbf16>, vector<64x128xf32> -> vector<64x128xf32>
    %c0_4 = arith.constant 0 : index
    %c0_5 = arith.constant 0 : index
    %5 = vector.load %arg4[%c0_4, %c0_5] : memref<64x1xf32, #tpu.memory_space<vmem>>, vector<64x1xf32>
    %6 = vector.broadcast %5 : vector<64x1xf32> to vector<64x128xf32>
    %7 = arith.addf %4, %6 : vector<64x128xf32>
    %cst_6 = arith.constant 0.000000e+00 : f32
    %8 = vector.broadcast %cst_6 : f32 to vector<64x128xf32>
    %9 = arith.maximumf %7, %8 : vector<64x128xf32>
    %10 = vector.extract_strided_slice %9 {offsets = [0, 0], sizes = [16, 128], strides = [1, 1]} : vector<64x128xf32> to vector<16x128xf32>
    %11 = arith.truncf %10 : vector<16x128xf32> to vector<16x128xbf16>
    %12 = vector.extract_strided_slice %9 {offsets = [16, 0], sizes = [16, 128], strides = [1, 1]} : vector<64x128xf32> to vector<16x128xf32>
    %13 = arith.truncf %12 : vector<16x128xf32> to vector<16x128xbf16>
    %14 = vector.extract_strided_slice %9 {offsets = [32, 0], sizes = [32, 128], strides = [1, 1]} : vector<64x128xf32> to vector<32x128xf32>
    %15 = arith.truncf %14 : vector<32x128xf32> to vector<32x128xbf16>
    %cst_7 = arith.constant dense<0.000000e+00> : vector<128x128xf32>
    %16 = tpu.matmul %13, %11, %cst_7 {dimension_numbers = #tpu.dot_dimension_numbers<[0], [0], [1], [1], [0, 1, 1, 1], [], []>} : vector<16x128xbf16>, vector<16x128xbf16>, vector<128x128xf32> -> vector<128x128xf32>
    %17 = tpu.iota {dimensions = array<i32: 0>} : vector<128x128xi32>
    %18 = tpu.iota {dimensions = array<i32: 1>} : vector<128x128xi32>
    %c0_i32 = arith.constant 0 : i32
    %19 = vector.broadcast %c0_i32 : i32 to vector<128x128xi32>
    %20 = arith.cmpi sge, %17, %19 : vector<128x128xi32>
    %c16_i32 = arith.constant 16 : i32
    %21 = vector.broadcast %c16_i32 : i32 to vector<128x128xi32>
    %22 = arith.cmpi slt, %17, %21 : vector<128x128xi32>
    %23 = arith.andi %20, %22 : vector<128x128xi1>
    %c0_i32_8 = arith.constant 0 : i32
    %24 = vector.broadcast %c0_i32_8 : i32 to vector<128x128xi32>
    %25 = arith.cmpi sge, %18, %24 : vector<128x128xi32>
    %c16_i32_9 = arith.constant 16 : i32
    %26 = vector.broadcast %c16_i32_9 : i32 to vector<128x128xi32>
    %27 = arith.cmpi slt, %18, %26 : vector<128x128xi32>
    %28 = arith.andi %25, %27 : vector<128x128xi1>
    %29 = arith.andi %23, %28 : vector<128x128xi1>
    %c16_i32_10 = arith.constant 16 : i32
    %30 = vector.broadcast %c16_i32_10 : i32 to vector<128x128xi32>
    %31 = arith.cmpi sge, %17, %30 : vector<128x128xi32>
    %c32_i32 = arith.constant 32 : i32
    %32 = vector.broadcast %c32_i32 : i32 to vector<128x128xi32>
    %33 = arith.cmpi slt, %17, %32 : vector<128x128xi32>
    %34 = arith.andi %31, %33 : vector<128x128xi1>
    %c16_i32_11 = arith.constant 16 : i32
    %35 = vector.broadcast %c16_i32_11 : i32 to vector<128x128xi32>
    %36 = arith.cmpi sge, %18, %35 : vector<128x128xi32>
    %c32_i32_12 = arith.constant 32 : i32
    %37 = vector.broadcast %c32_i32_12 : i32 to vector<128x128xi32>
    %38 = arith.cmpi slt, %18, %37 : vector<128x128xi32>
    %39 = arith.andi %36, %38 : vector<128x128xi1>
    %40 = arith.andi %34, %39 : vector<128x128xi1>
    %41 = arith.ori %29, %40 : vector<128x128xi1>
    %c32_i32_13 = arith.constant 32 : i32
    %42 = vector.broadcast %c32_i32_13 : i32 to vector<128x128xi32>
    %43 = arith.cmpi sge, %17, %42 : vector<128x128xi32>
    %c48_i32 = arith.constant 48 : i32
    %44 = vector.broadcast %c48_i32 : i32 to vector<128x128xi32>
    %45 = arith.cmpi slt, %17, %44 : vector<128x128xi32>
    %46 = arith.andi %43, %45 : vector<128x128xi1>
    %c32_i32_14 = arith.constant 32 : i32
    %47 = vector.broadcast %c32_i32_14 : i32 to vector<128x128xi32>
    %48 = arith.cmpi sge, %18, %47 : vector<128x128xi32>
    %c48_i32_15 = arith.constant 48 : i32
    %49 = vector.broadcast %c48_i32_15 : i32 to vector<128x128xi32>
    %50 = arith.cmpi slt, %18, %49 : vector<128x128xi32>
    %51 = arith.andi %48, %50 : vector<128x128xi1>
    %52 = arith.andi %46, %51 : vector<128x128xi1>
    %53 = arith.ori %41, %52 : vector<128x128xi1>
    %c48_i32_16 = arith.constant 48 : i32
    %54 = vector.broadcast %c48_i32_16 : i32 to vector<128x128xi32>
    %55 = arith.cmpi sge, %17, %54 : vector<128x128xi32>
    %c64_i32 = arith.constant 64 : i32
    %56 = vector.broadcast %c64_i32 : i32 to vector<128x128xi32>
    %57 = arith.cmpi slt, %17, %56 : vector<128x128xi32>
    %58 = arith.andi %55, %57 : vector<128x128xi1>
    %c48_i32_17 = arith.constant 48 : i32
    %59 = vector.broadcast %c48_i32_17 : i32 to vector<128x128xi32>
    %60 = arith.cmpi sge, %18, %59 : vector<128x128xi32>
    %c64_i32_18 = arith.constant 64 : i32
    %61 = vector.broadcast %c64_i32_18 : i32 to vector<128x128xi32>
    %62 = arith.cmpi slt, %18, %61 : vector<128x128xi32>
    %63 = arith.andi %60, %62 : vector<128x128xi1>
    %64 = arith.andi %58, %63 : vector<128x128xi1>
    %65 = arith.ori %53, %64 : vector<128x128xi1>
    %c64_i32_19 = arith.constant 64 : i32
    %66 = vector.broadcast %c64_i32_19 : i32 to vector<128x128xi32>
    %67 = arith.cmpi sge, %17, %66 : vector<128x128xi32>
    %c80_i32 = arith.constant 80 : i32
    %68 = vector.broadcast %c80_i32 : i32 to vector<128x128xi32>
    %69 = arith.cmpi slt, %17, %68 : vector<128x128xi32>
    %70 = arith.andi %67, %69 : vector<128x128xi1>
    %c64_i32_20 = arith.constant 64 : i32
    %71 = vector.broadcast %c64_i32_20 : i32 to vector<128x128xi32>
    %72 = arith.cmpi sge, %18, %71 : vector<128x128xi32>
    %c80_i32_21 = arith.constant 80 : i32
    %73 = vector.broadcast %c80_i32_21 : i32 to vector<128x128xi32>
    %74 = arith.cmpi slt, %18, %73 : vector<128x128xi32>
    %75 = arith.andi %72, %74 : vector<128x128xi1>
    %76 = arith.andi %70, %75 : vector<128x128xi1>
    %77 = arith.ori %65, %76 : vector<128x128xi1>
    %c80_i32_22 = arith.constant 80 : i32
    %78 = vector.broadcast %c80_i32_22 : i32 to vector<128x128xi32>
    %79 = arith.cmpi sge, %17, %78 : vector<128x128xi32>
    %c96_i32 = arith.constant 96 : i32
    %80 = vector.broadcast %c96_i32 : i32 to vector<128x128xi32>
    %81 = arith.cmpi slt, %17, %80 : vector<128x128xi32>
    %82 = arith.andi %79, %81 : vector<128x128xi1>
    %c80_i32_23 = arith.constant 80 : i32
    %83 = vector.broadcast %c80_i32_23 : i32 to vector<128x128xi32>
    %84 = arith.cmpi sge, %18, %83 : vector<128x128xi32>
    %c96_i32_24 = arith.constant 96 : i32
    %85 = vector.broadcast %c96_i32_24 : i32 to vector<128x128xi32>
    %86 = arith.cmpi slt, %18, %85 : vector<128x128xi32>
    %87 = arith.andi %84, %86 : vector<128x128xi1>
    %88 = arith.andi %82, %87 : vector<128x128xi1>
    %89 = arith.ori %77, %88 : vector<128x128xi1>
    %c96_i32_25 = arith.constant 96 : i32
    %90 = vector.broadcast %c96_i32_25 : i32 to vector<128x128xi32>
    %91 = arith.cmpi sge, %17, %90 : vector<128x128xi32>
    %c112_i32 = arith.constant 112 : i32
    %92 = vector.broadcast %c112_i32 : i32 to vector<128x128xi32>
    %93 = arith.cmpi slt, %17, %92 : vector<128x128xi32>
    %94 = arith.andi %91, %93 : vector<128x128xi1>
    %c96_i32_26 = arith.constant 96 : i32
    %95 = vector.broadcast %c96_i32_26 : i32 to vector<128x128xi32>
    %96 = arith.cmpi sge, %18, %95 : vector<128x128xi32>
    %c112_i32_27 = arith.constant 112 : i32
    %97 = vector.broadcast %c112_i32_27 : i32 to vector<128x128xi32>
    %98 = arith.cmpi slt, %18, %97 : vector<128x128xi32>
    %99 = arith.andi %96, %98 : vector<128x128xi1>
    %100 = arith.andi %94, %99 : vector<128x128xi1>
    %101 = arith.ori %89, %100 : vector<128x128xi1>
    %c112_i32_28 = arith.constant 112 : i32
    %102 = vector.broadcast %c112_i32_28 : i32 to vector<128x128xi32>
    %103 = arith.cmpi sge, %17, %102 : vector<128x128xi32>
    %c128_i32 = arith.constant 128 : i32
    %104 = vector.broadcast %c128_i32 : i32 to vector<128x128xi32>
    %105 = arith.cmpi slt, %17, %104 : vector<128x128xi32>
    %106 = arith.andi %103, %105 : vector<128x128xi1>
    %c112_i32_29 = arith.constant 112 : i32
    %107 = vector.broadcast %c112_i32_29 : i32 to vector<128x128xi32>
    %108 = arith.cmpi sge, %18, %107 : vector<128x128xi32>
    %c128_i32_30 = arith.constant 128 : i32
    %109 = vector.broadcast %c128_i32_30 : i32 to vector<128x128xi32>
    %110 = arith.cmpi slt, %18, %109 : vector<128x128xi32>
    %111 = arith.andi %108, %110 : vector<128x128xi1>
    %112 = arith.andi %106, %111 : vector<128x128xi1>
    %113 = arith.ori %101, %112 : vector<128x128xi1>
    %cst_31 = arith.constant 0x7F800000 : f32
    %114 = vector.broadcast %cst_31 : f32 to vector<128x128xf32>
    %115 = arith.select %113, %16, %114 : vector<128x128xi1>, vector<128x128xf32>
    %cst_32 = arith.constant dense<0x7F800000> : vector<128xf32>
    %116 = vector.multi_reduction <minimumf>, %115, %cst_32 [1] : vector<128x128xf32> to vector<128xf32>
    %117 = vector.shape_cast %116 : vector<128xf32> to vector<128x1xf32>
    %118 = vector.broadcast %117 : vector<128x1xf32> to vector<128x128xf32>
    %119 = arith.subf %118, %16 : vector<128x128xf32>
    %cst_33 = arith.constant 0xFF800000 : f32
    %120 = vector.broadcast %cst_33 : f32 to vector<128x128xf32>
    %121 = arith.select %113, %119, %120 : vector<128x128xi1>, vector<128x128xf32>
    %122 = math.exp %121 : vector<128x128xf32>
    %cst_34 = arith.constant dense<0.000000e+00> : vector<128xf32>
    %123 = vector.multi_reduction <add>, %122, %cst_34 [1] : vector<128x128xf32> to vector<128xf32>
    %124 = vector.shape_cast %123 : vector<128xf32> to vector<128x1xf32>
    %125 = tpu.reciprocal %124 {approx = true} : vector<128x1xf32> -> vector<128x1xf32>
    %126 = vector.broadcast %125 : vector<128x1xf32> to vector<128x128xf32>
    %127 = arith.mulf %122, %126 : vector<128x128xf32>
    %128 = arith.truncf %127 : vector<128x128xf32> to vector<128x128xbf16>
    %cst_35 = arith.constant dense<0.000000e+00> : vector<32x128xf32>
    %129 = tpu.matmul %15, %128, %cst_35 {dimension_numbers = #tpu.dot_dimension_numbers<[1], [0], [0], [1], [0, 0, 1, 1], [], []>} : vector<32x128xbf16>, vector<128x128xbf16>, vector<32x128xf32> -> vector<32x128xf32>
    %c0_36 = arith.constant 0 : index
    %c0_37 = arith.constant 0 : index
    %130 = memref.load %arg1[%c0_36, %c0_37] : memref<1x1xf32, #tpu.memory_space<smem>>
    %131 = vector.broadcast %130 : f32 to vector<32x128xf32>
    %132 = arith.mulf %131, %129 : vector<32x128xf32>
    %133 = tpu.transpose %1, [1, 0] : vector<128x32xf32> -> vector<32x128xf32>
    %134 = arith.addf %132, %133 : vector<32x128xf32>
    %c0_38 = arith.constant 0 : index
    %c0_39 = arith.constant 0 : index
    %c0_40 = arith.constant 0 : index
    %135 = vector.load %arg5[%c0_38, %c0_39, %c0_40] : memref<1x32x128xf32, #tpu.memory_space<vmem>>, vector<1x32x128xf32>
    %136 = vector.shape_cast %135 : vector<1x32x128xf32> to vector<32x128xf32>
    %137 = vector.shape_cast %134 : vector<32x128xf32> to vector<1x32x128xf32>
    tpu.vector_store %arg5[%c0_38, %c0_39, %c0_40], %137 {strides = array<i32>} : memref<1x32x128xf32, #tpu.memory_space<vmem>>, vector<1x32x128xf32>,
    return
  }
  func.func @transform_0(%arg0: i32) -> (i32, i32) {
    %c0_i32 = arith.constant 0 : i32
    %c0_i32_0 = arith.constant 0 : i32
    %c0_i32_1 = arith.constant 0 : i32
    return %c0_i32, %c0_i32_0 : i32, i32
  }
  func.func @transform_1(%arg0: i32) -> (i32, i32, i32) {
    %c0_i32 = arith.constant 0 : i32
    %c0_i32_0 = arith.constant 0 : i32
    %c0_i32_1 = arith.constant 0 : i32
    return %arg0, %c0_i32, %c0_i32_0 : i32, i32, i32
  }
  func.func @transform_2(%arg0: i32) -> (i32, i32) {
    %c0_i32 = arith.constant 0 : i32
    %c0_i32_0 = arith.constant 0 : i32
    %c0_i32_1 = arith.constant 0 : i32
    return %c0_i32, %c0_i32_0 : i32, i32
  }
  func.func @transform_3(%arg0: i32) -> (i32, i32) {
    %c0_i32 = arith.constant 0 : i32
    %c0_i32_0 = arith.constant 0 : i32
    %c0_i32_1 = arith.constant 0 : i32
    return %c0_i32, %c0_i32_0 : i32, i32
  }
  func.func @transform_4(%arg0: i32) -> (i32, i32, i32) {
    %c0_i32 = arith.constant 0 : i32
    %c0_i32_0 = arith.constant 0 : i32
    %c0_i32_1 = arith.constant 0 : i32
    return %arg0, %c0_i32, %c0_i32_0 : i32, i32, i32
  }
}

module attributes {stable_mosaic.version = 11 : i64} {
  func.func @kernel(%arg0: i32, %arg1: memref<1x1xf32, #tpu.memory_space<smem>>, %arg2: memref<1x128x32xf32, #tpu.memory_space<vmem>>, %arg3: memref<64x32xbf16, #tpu.memory_space<vmem>>, %arg4: memref<64x1xf32, #tpu.memory_space<vmem>>, %arg5: memref<1x32x128xf32, #tpu.memory_space<vmem>>) attributes {dimension_semantics = [#tpu.dimension_semantics<parallel>], iteration_bounds = array<i64: 2>, scalar_prefetch = 0 : i64, scratch_operands = 0 : i64, tpu.core_type = #tpu.core_type<tc>, window_params = [{transform_indices = @transform_0, window_bounds = array<i64: 1, 1>}, {transform_indices = @transform_1, window_bounds = array<i64: 1, 128, 32>}, {pipeline_mode = #tpu.pipeline_mode<synchronous>, transform_indices = @transform_2, window_bounds = array<i64: 64, 32>}, {pipeline_mode = #tpu.pipeline_mode<synchronous>, transform_indices = @transform_3, window_bounds = array<i64: 64, 1>}, {transform_indices = @transform_4, window_bounds = array<i64: 1, 32, 128>}]} {
    %c0 = arith.constant 0 : index
    %c0_0 = arith.constant 0 : index
    %c0_1 = arith.constant 0 : index
    %0 = vector.load %arg2[%c0, %c0_0, %c0_1] : memref<1x128x32xf32, #tpu.memory_space<vmem>>, vector<1x128x32xf32>
    %1 = vector.shape_cast %0 : vector<1x128x32xf32> to vector<128x32xf32>
    %2 = arith.truncf %1 : vector<128x32xf32> to vector<128x32xbf16>
    %c0_2 = arith.constant 0 : index
    %c0_3 = arith.constant 0 : index
    %3 = vector.load %arg3[%c0_2, %c0_3] : memref<64x32xbf16, #tpu.memory_space<vmem>>, vector<64x32xbf16>
    %cst = arith.constant dense<0.000000e+00> : vector<64x128xf32>
    %4 = tpu.matmul %3, %2, %cst {dimension_numbers = #tpu.dot_dimension_numbers<[1], [1], [0], [0], [0, 0, 1, 0], [], []>} : vector<64x32xbf16>, vector<128x32xbf16>, vector<64x128xf32> -> vector<64x128xf32>
    %c0_4 = arith.constant 0 : index
    %c0_5 = arith.constant 0 : index
    %5 = vector.load %arg4[%c0_4, %c0_5] : memref<64x1xf32, #tpu.memory_space<vmem>>, vector<64x1xf32>
    %6 = vector.broadcast %5 : vector<64x1xf32> to vector<64x128xf32>
    %7 = arith.addf %4, %6 : vector<64x128xf32>
    %cst_6 = arith.constant 0.000000e+00 : f32
    %8 = vector.broadcast %cst_6 : f32 to vector<64x128xf32>
    %9 = arith.maximumf %7, %8 : vector<64x128xf32>
    %10 = vector.extract_strided_slice %9 {offsets = [0, 0], sizes = [16, 128], strides = [1, 1]} : vector<64x128xf32> to vector<16x128xf32>
    %11 = arith.truncf %10 : vector<16x128xf32> to vector<16x128xbf16>
    %12 = vector.extract_strided_slice %9 {offsets = [16, 0], sizes = [16, 128], strides = [1, 1]} : vector<64x128xf32> to vector<16x128xf32>
    %13 = arith.truncf %12 : vector<16x128xf32> to vector<16x128xbf16>
    %14 = vector.extract_strided_slice %9 {offsets = [32, 0], sizes = [32, 128], strides = [1, 1]} : vector<64x128xf32> to vector<32x128xf32>
    %15 = arith.truncf %14 : vector<32x128xf32> to vector<32x128xbf16>
    %cst_7 = arith.constant dense<0.000000e+00> : vector<128x128xf32>
    %16 = tpu.matmul %13, %11, %cst_7 {dimension_numbers = #tpu.dot_dimension_numbers<[0], [0], [1], [1], [0, 1, 1, 1], [], []>} : vector<16x128xbf16>, vector<16x128xbf16>, vector<128x128xf32> -> vector<128x128xf32>
    %17 = tpu.iota {dimensions = array<i32: 0>} : vector<128x128xi32>
    %18 = tpu.iota {dimensions = array<i32: 1>} : vector<128x128xi32>
    %c0_i32 = arith.constant 0 : i32
    %19 = vector.broadcast %c0_i32 : i32 to vector<128x128xi32>
    %20 = arith.cmpi sge, %17, %19 : vector<128x128xi32>
    %c16_i32 = arith.constant 16 : i32
    %21 = vector.broadcast %c16_i32 : i32 to vector<128x128xi32>
    %22 = arith.cmpi slt, %17, %21 : vector<128x128xi32>
    %23 = arith.andi %20, %22 : vector<128x128xi1>
    %c0_i32_8 = arith.constant 0 : i32
    %24 = vector.broadcast %c0_i32_8 : i32 to vector<128x128xi32>
    %25 = arith.cmpi sge, %18, %24 : vector<128x128xi32>
    %c16_i32_9 = arith.constant 16 : i32
    %26 = vector.broadcast %c16_i32_9 : i32 to vector<128x128xi32>
    %27 = arith.cmpi slt, %18, %26 : vector<128x128xi32>
    %28 = arith.andi %25, %27 : vector<128x128xi1>
    %29 = arith.andi %23, %28 : vector<128x128xi1>
    %c16_i32_10 = arith.constant 16 : i32
    %30 = vector.broadcast %c16_i32_10 : i32 to vector<128x128xi32>
    %31 = arith.cmpi sge, %17, %30 : vector<128x128xi32>
    %c32_i32 = arith.constant 32 : i32
    %32 = vector.broadcast %c32_i32 : i32 to vector<128x128xi32>
    %33 = arith.cmpi slt, %17, %32 : vector<128x128xi32>
    %34 = arith.andi %31, %33 : vector<128x128xi1>
    %c16_i32_11 = arith.constant 16 : i32
    %35 = vector.broadcast %c16_i32_11 : i32 to vector<128x128xi32>
    %36 = arith.cmpi sge, %18, %35 : vector<128x128xi32>
    %c32_i32_12 = arith.constant 32 : i32
    %37 = vector.broadcast %c32_i32_12 : i32 to vector<128x128xi32>
    %38 = arith.cmpi slt, %18, %37 : vector<128x128xi32>
    %39 = arith.andi %36, %38 : vector<128x128xi1>
    %40 = arith.andi %34, %39 : vector<128x128xi1>
    %41 = arith.ori %29, %40 : vector<128x128xi1>
    %c32_i32_13 = arith.constant 32 : i32
    %42 = vector.broadcast %c32_i32_13 : i32 to vector<128x128xi32>
    %43 = arith.cmpi sge, %17, %42 : vector<128x128xi32>
    %c48_i32 = arith.constant 48 : i32
    %44 = vector.broadcast %c48_i32 : i32 to vector<128x128xi32>
    %45 = arith.cmpi slt, %17, %44 : vector<128x128xi32>
    %46 = arith.andi %43, %45 : vector<128x128xi1>
    %c32_i32_14 = arith.constant 32 : i32
    %47 = vector.broadcast %c32_i32_14 : i32 to vector<128x128xi32>
    %48 = arith.cmpi sge, %18, %47 : vector<128x128xi32>
    %c48_i32_15 = arith.constant 48 : i32
    %49 = vector.broadcast %c48_i32_15 : i32 to vector<128x128xi32>
    %50 = arith.cmpi slt, %18, %49 : vector<128x128xi32>
    %51 = arith.andi %48, %50 : vector<128x128xi1>
    %52 = arith.andi %46, %51 : vector<128x128xi1>
    %53 = arith.ori %41, %52 : vector<128x128xi1>
    %c48_i32_16 = arith.constant 48 : i32
    %54 = vector.broadcast %c48_i32_16 : i32 to vector<128x128xi32>
    %55 = arith.cmpi sge, %17, %54 : vector<128x128xi32>
    %c64_i32 = arith.constant 64 : i32
    %56 = vector.broadcast %c64_i32 : i32 to vector<128x128xi32>
    %57 = arith.cmpi slt, %17, %56 : vector<128x128xi32>
    %58 = arith.andi %55, %57 : vector<128x128xi1>
    %c48_i32_17 = arith.constant 48 : i32
    %59 = vector.broadcast %c48_i32_17 : i32 to vector<128x128xi32>
    %60 = arith.cmpi sge, %18, %59 : vector<128x128xi32>
    %c64_i32_18 = arith.constant 64 : i32
    %61 = vector.broadcast %c64_i32_18 : i32 to vector<128x128xi32>
    %62 = arith.cmpi slt, %18, %61 : vector<128x128xi32>
    %63 = arith.andi %60, %62 : vector<128x128xi1>
    %64 = arith.andi %58, %63 : vector<128x128xi1>
    %65 = arith.ori %53, %64 : vector<128x128xi1>
    %c64_i32_19 = arith.constant 64 : i32
    %66 = vector.broadcast %c64_i32_19 : i32 to vector<128x128xi32>
    %67 = arith.cmpi sge, %17, %66 : vector<128x128xi32>
    %c80_i32 = arith.constant 80 : i32
    %68 = vector.broadcast %c80_i32 : i32 to vector<128x128xi32>
    %69 = arith.cmpi slt, %17, %68 : vector<128x128xi32>
    %70 = arith.andi %67, %69 : vector<128x128xi1>
    %c64_i32_20 = arith.constant 64 : i32
    %71 = vector.broadcast %c64_i32_20 : i32 to vector<128x128xi32>
    %72 = arith.cmpi sge, %18, %71 : vector<128x128xi32>
    %c80_i32_21 = arith.constant 80 : i32
    %73 = vector.broadcast %c80_i32_21 : i32 to vector<128x128xi32>
    %74 = arith.cmpi slt, %18, %73 : vector<128x128xi32>
    %75 = arith.andi %72, %74 : vector<128x128xi1>
    %76 = arith.andi %70, %75 : vector<128x128xi1>
    %77 = arith.ori %65, %76 : vector<128x128xi1>
    %c80_i32_22 = arith.constant 80 : i32
    %78 = vector.broadcast %c80_i32_22 : i32 to vector<128x128xi32>
    %79 = arith.cmpi sge, %17, %78 : vector<128x128xi32>
    %c96_i32 = arith.constant 96 : i32
    %80 = vector.broadcast %c96_i32 : i32 to vector<128x128xi32>
    %81 = arith.cmpi slt, %17, %80 : vector<128x128xi32>
    %82 = arith.andi %79, %81 : vector<128x128xi1>
    %c80_i32_23 = arith.constant 80 : i32
    %83 = vector.broadcast %c80_i32_23 : i32 to vector<128x128xi32>
    %84 = arith.cmpi sge, %18, %83 : vector<128x128xi32>
    %c96_i32_24 = arith.constant 96 : i32
    %85 = vector.broadcast %c96_i32_24 : i32 to vector<128x128xi32>
    %86 = arith.cmpi slt, %18, %85 : vector<128x128xi32>
    %87 = arith.andi %84, %86 : vector<128x128xi1>
    %88 = arith.andi %82, %87 : vector<128x128xi1>
    %89 = arith.ori %77, %88 : vector<128x128xi1>
    %c96_i32_25 = arith.constant 96 : i32
    %90 = vector.broadcast %c96_i32_25 : i32 to vector<128x128xi32>
    %91 = arith.cmpi sge, %17, %90 : vector<128x128xi32>
    %c112_i32 = arith.constant 112 : i32
    %92 = vector.broadcast %c112_i32 : i32 to vector<128x128xi32>
    %93 = arith.cmpi slt, %17, %92 : vector<128x128xi32>
    %94 = arith.andi %91, %93 : vector<128x128xi1>
    %c96_i32_26 = arith.constant 96 : i32
    %95 = vector.broadcast %c96_i32_26 : i32 to vector<128x128xi32>
    %96 = arith.cmpi sge, %18, %95 : vector<128x128xi32>
    %c112_i32_27 = arith.constant 112 : i32
    %97 = vector.broadcast %c112_i32_27 : i32 to vector<128x128xi32>
    %98 = arith.cmpi slt, %18, %97 : vector<128x128xi32>
    %99 = arith.andi %96, %98 : vector<128x128xi1>
    %100 = arith.andi %94, %99 : vector<128x128xi1>
    %101 = arith.ori %89, %100 : vector<128x128xi1>
    %c112_i32_28 = arith.constant 112 : i32
    %102 = vector.broadcast %c112_i32_28 : i32 to vector<128x128xi32>
    %103 = arith.cmpi sge, %17, %102 : vector<128x128xi32>
    %c128_i32 = arith.constant 128 : i32
    %104 = vector.broadcast %c128_i32 : i32 to vector<128x128xi32>
    %105 = arith.cmpi slt, %17, %104 : vector<128x128xi32>
    %106 = arith.andi %103, %105 : vector<128x128xi1>
    %c112_i32_29 = arith.constant 112 : i32
    %107 = vector.broadcast %c112_i32_29 : i32 to vector<128x128xi32>
    %108 = arith.cmpi sge, %18, %107 : vector<128x128xi32>
    %c128_i32_30 = arith.constant 128 : i32
    %109 = vector.broadcast %c128_i32_30 : i32 to vector<128x128xi32>
    %110 = arith.cmpi slt, %18, %109 : vector<128x128xi32>
    %111 = arith.andi %108, %110 : vector<128x128xi1>
    %112 = arith.andi %106, %111 : vector<128x128xi1>
    %113 = arith.ori %101, %112 : vector<128x128xi1>
    %cst_31 = arith.constant 0x7F800000 : f32
    %114 = vector.broadcast %cst_31 : f32 to vector<128x128xf32>
    %115 = arith.select %113, %16, %114 : vector<128x128xi1>, vector<128x128xf32>
    %cst_32 = arith.constant dense<0x7F800000> : vector<128xf32>
    %116 = vector.multi_reduction <minimumf>, %115, %cst_32 [1] : vector<128x128xf32> to vector<128xf32>
    %117 = vector.shape_cast %116 : vector<128xf32> to vector<128x1xf32>
    %118 = vector.broadcast %117 : vector<128x1xf32> to vector<128x128xf32>
    %119 = arith.subf %118, %16 : vector<128x128xf32>
    %cst_33 = arith.constant 0xFF800000 : f32
    %120 = vector.broadcast %cst_33 : f32 to vector<128x128xf32>
    %121 = arith.select %113, %119, %120 : vector<128x128xi1>, vector<128x128xf32>
    %122 = math.exp %121 : vector<128x128xf32>
    %cst_34 = arith.constant dense<0.000000e+00> : vector<128xf32>
    %123 = vector.multi_reduction <add>, %122, %cst_34 [1] : vector<128x128xf32> to vector<128xf32>
    %124 = vector.shape_cast %123 : vector<128xf32> to vector<128x1xf32>
    %125 = tpu.reciprocal %124 {approx = true} : vector<128x1xf32> -> vector<128x1xf32>
    %126 = vector.broadcast %125 : vector<128x1xf32> to vector<128x128xf32>
    %127 = arith.mulf %122, %126 : vector<128x128xf32>
    %128 = arith.truncf %127 : vector<128x128xf32> to vector<128x128xbf16>
    %cst_35 = arith.constant dense<0.000000e+00> : vector<32x128xf32>
    %129 = tpu.matmul %15, %128, %cst_35 {dimension_numbers = #tpu.dot_dimension_numbers<[1], [0], [0], [1], [0, 0, 1, 1], [], []>} : vector<32x128xbf16>, vector<128x128xbf16>, vector<32x128xf32> -> vector<32x128xf32>
    %c0_36 = arith.constant 0 : index
    %c0_37 = arith.constant 0 : index
    %130 = memref.load %arg1[%c0_36, %c0_37] : memref<1x1xf32, #tpu.memory_space<smem>>
    %131 = vector.broadcast %130 : f32 to vector<32x128xf32>
    %132 = arith.mulf %131, %129 : vector<32x128xf32>
    %133 = tpu.transpose %1, [1, 0] : vector<128x32xf32> -> vector<32x128xf32>
    %134 = arith.addf %132, %133 : vector<32x128xf32>
    %c0_38 = arith.constant 0 : index
    %c0_39 = arith.constant 0 : index
    %c0_40 = arith.constant 0 : index
    %135 = vector.load %arg5[%c0_38, %c0_39, %c0_40] : memref<1x32x128xf32, #tpu.memory_space<vmem>>, vector<1x32x128xf32>
    %136 = vector.shape_cast %135 : vector<1x32x128xf32> to vector<32x128xf32>
    %137 = vector.shape_cast %134 : vector<32x128xf32> to vector<1x32x128xf32>
    tpu.vector_store %arg5[%c0_38, %c0_39, %c0_40], %137 {strides = array<i32>} : memref<1x32x128xf32, #tpu.memory_space<vmem>>, vector<1x32x128xf32>,
    return
  }
  func.func @transform_0(%arg0: i32) -> (i32, i32) {
    %c0_i32 = arith.constant 0 : i32
    %c0_i32_0 = arith.constant 0 : i32
    %c0_i32_1 = arith.constant 0 : i32
    return %c0_i32, %c0_i32_0 : i32, i32
  }
  func.func @transform_1(%arg0: i32) -> (i32, i32, i32) {
    %c0_i32 = arith.constant 0 : i32
    %c0_i32_0 = arith.constant 0 : i32
    %c0_i32_1 = arith.constant 0 : i32
    return %arg0, %c0_i32, %c0_i32_0 : i32, i32, i32
  }
  func.func @transform_2(%arg0: i32) -> (i32, i32) {
    %c0_i32 = arith.constant 0 : i32
    %c0_i32_0 = arith.constant 0 : i32
    %c0_i32_1 = arith.constant 0 : i32
    return %c0_i32, %c0_i32_0 : i32, i32
  }
  func.func @transform_3(%arg0: i32) -> (i32, i32) {
    %c0_i32 = arith.constant 0 : i32
    %c0_i32_0 = arith.constant 0 : i32
    %c0_i32_1 = arith.constant 0 : i32
    return %c0_i32, %c0_i32_0 : i32, i32
  }
  func.func @transform_4(%arg0: i32) -> (i32, i32, i32) {
    %c0_i32 = arith.constant 0 : i32
    %c0_i32_0 = arith.constant 0 : i32
    %c0_i32_1 = arith.constant 0 : i32
    return %arg0, %c0_i32, %c0_i32_0 : i32, i32, i32
  }
}

</mosaic_0001>

<llo_original>
// kernel: tpu_custom_call.1
$region0: #{tpu_custom_call.1}
  #allocation0 [shape = 'u32[]', space=smem, size = 0x4, offset = 0x4, fixed_abs, tag = 'smem constant byte address 0x4 - core index']
  #allocation1 [shape = 'u32[72,128]{1,0:T(1,128)}', space=vmem, size = 0x9000, scoped, tag = 'internal scratch']
  #allocation2 [shape = 'f32[1,1]{1,0:T(1,128)S(6)}', space=smem, size = 0x200, scoped, tag = 'scoped memory for tpu_custom_call.1']
  %s0 = inlined_call_operand.<no memory space> [shape: f32[1,1], index: 0, kind: input, shape index: {}]
  %s1 = inlined_call_operand.vmem [shape: f32[2,128,32], index: 1, kind: input, shape index: {}]
  %s2 = inlined_call_operand.vmem [shape: bf16[64,32], index: 2, kind: input, shape index: {}]
  %s3 = inlined_call_operand.vmem [shape: f32[64,1], index: 3, kind: input, shape index: {}]
  %s4 = inlined_call_operand.hbm [shape: f32[2,32,128], index: 4, kind: output, shape index: {}]
  %s5 = sld [smem:[#allocation0]]
  $region49: #{tpu_custom_call.1} parent=0
    _
  %s7 = ssub.s32 1, %s5
  %s8 = scalar_select 0, %s7, %s5
  %9 = sst [smem:[#allocation2]] %s0
  $region1: #{tpu_custom_call.1} parent=0
    #allocation3 [shape = 'u8[32768]{0}', space=vmem, size = 0x8000, scoped, tag = 'output window, operand 0']
    #allocation4 [shape = 's32[2]{0}', space=sflag, size = 0x8, scoped, tag = 'scoped memory for tpu_custom_call.1']
    %10 = vsyncpa [#allocation4], 0
    %s11 = scalar_lea.sflag [#allocation4], 1
    %12 = vsyncpa %s11, 0
    loop: start=0, step=1, limit=4
    $region2: #{tpu_custom_call.1} parent=1 // loop_pre_header
      _
    $region3: #{tpu_custom_call.1} parent=1 // loop_header
      %s14 = sphi 0, %s18
      %p15 = scmp.ge.s32.totalorder %s14, 4
      %s22 = sphi 0, %s22
      %s24 = sphi 0, %s22
      %s25 = sphi 0, %s24
      %s39 = sphi 0, %s25
      %s45 = sphi 0, %s47
      %s48 = sphi 0, %s45
      %s49 = sphi 0, %s48
      %s65 = sphi 0, %s49
      %s69 = sphi 0, %s69
      %s71 = sphi 0, %s69
      %s72 = sphi 0, %s71
      %s86 = sphi 0, %s72
      %s90 = sphi 0, %s90
      %s92 = sphi 0, %s90
      %s93 = sphi 0, %s92
      %s107 = sphi 0, %s93
      %s113 = sphi 0, %s115
      %s116 = sphi 0, %s113
      %s117 = sphi 0, %s116
      %s133 = sphi 0, %s117
    $region4: #{tpu_custom_call.1} parent=1 // loop_header_branch
      %17 = sbr.rel (%p15) target = $region8
    $region5: #{tpu_custom_call.1} parent=1 // loop_body
      %s19 = ssub.s32 %s14, 1
      %s20 = ssub.s32 %s14, 2
      %s21 = sadd.s32 %s14, 1
      %s23 = sadd.s32 %s22, 1
      %p26 = scmp.eq.s32.totalorder %s14, 1
      %p27 = scmp.ne.s32.totalorder %s22, %s24
      %p28 = scmp.eq.s32.totalorder %s14, 0
      %p29 = por %p27, %p28
      %p30 = scmp.ne.s32.totalorder %s22, %s24
      %p31 = scmp.eq.s32.totalorder %s19, 1
      %p32 = por %p30, %p31
      %p33 = scmp.ne.s32.totalorder %s24, %s25
      %p34 = scmp.eq.s32.totalorder %s19, 0
      %p35 = por %p33, %p34
      %p36 = scmp.ne.s32.totalorder %s24, %s25
      %p37 = scmp.eq.s32.totalorder %s20, 1
      %p38 = por %p36, %p37
      %p40 = scmp.ne.s32.totalorder %s25, %s39
      %p41 = scmp.eq.s32.totalorder %s20, 0
      %p42 = por %p40, %p41
      %s43 = ssub.s32 %s14, %s21
      %p44 = scmp.eq.s32.totalorder %s43, 0
      %s46 = sadd.s32 %s45, 1
      %s47 = scalar_select %p44, %s45, %s46
      %p50 = pneg %p44
      %p51 = scmp.eq.s32.totalorder %s14, 1
      %p52 = por %p50, %p51
      %p53 = scmp.ne.s32.totalorder %s45, %s48
      %p54 = scmp.eq.s32.totalorder %s14, 0
      %p55 = por %p53, %p54
      %p56 = scmp.ne.s32.totalorder %s45, %s48
      %p57 = scmp.eq.s32.totalorder %s19, 1
      %p58 = por %p56, %p57
      %p59 = scmp.ne.s32.totalorder %s48, %s49
      %p60 = scmp.eq.s32.totalorder %s19, 0
      %p61 = por %p59, %p60
      %p62 = scmp.ne.s32.totalorder %s48, %s49
      %p63 = scmp.eq.s32.totalorder %s20, 1
      %p64 = por %p62, %p63
      %p66 = scmp.ne.s32.totalorder %s49, %s65
      %p67 = scmp.eq.s32.totalorder %s20, 0
      %p68 = por %p66, %p67
      %s70 = sadd.s32 %s69, 1
      %p73 = scmp.eq.s32.totalorder %s14, 1
      %p74 = scmp.ne.s32.totalorder %s69, %s71
      %p75 = scmp.eq.s32.totalorder %s14, 0
      %p76 = por %p74, %p75
      %p77 = scmp.ne.s32.totalorder %s69, %s71
      %p78 = scmp.eq.s32.totalorder %s19, 1
      %p79 = por %p77, %p78
      %p80 = scmp.ne.s32.totalorder %s71, %s72
      %p81 = scmp.eq.s32.totalorder %s19, 0
      %p82 = por %p80, %p81
      %p83 = scmp.ne.s32.totalorder %s71, %s72
      %p84 = scmp.eq.s32.totalorder %s20, 1
      %p85 = por %p83, %p84
      %p87 = scmp.ne.s32.totalorder %s72, %s86
      %p88 = scmp.eq.s32.totalorder %s20, 0
      %p89 = por %p87, %p88
      %s91 = sadd.s32 %s90, 1
      %p94 = scmp.eq.s32.totalorder %s14, 1
      %p95 = scmp.ne.s32.totalorder %s90, %s92
      %p96 = scmp.eq.s32.totalorder %s14, 0
      %p97 = por %p95, %p96
      %p98 = scmp.ne.s32.totalorder %s90, %s92
      %p99 = scmp.eq.s32.totalorder %s19, 1
      %p100 = por %p98, %p99
      %p101 = scmp.ne.s32.totalorder %s92, %s93
      %p102 = scmp.eq.s32.totalorder %s19, 0
      %p103 = por %p101, %p102
      %p104 = scmp.ne.s32.totalorder %s92, %s93
      %p105 = scmp.eq.s32.totalorder %s20, 1
      %p106 = por %p104, %p105
      %p108 = scmp.ne.s32.totalorder %s93, %s107
      %p109 = scmp.eq.s32.totalorder %s20, 0
      %p110 = por %p108, %p109
      %s111 = ssub.s32 %s14, %s21
      %p112 = scmp.eq.s32.totalorder %s111, 0
      %s114 = sadd.s32 %s113, 1
      %s115 = scalar_select %p112, %s113, %s114
      %p118 = pneg %p112
      %p119 = scmp.eq.s32.totalorder %s14, 1
      %p120 = por %p118, %p119
      %p121 = scmp.ne.s32.totalorder %s113, %s116
      %p122 = scmp.eq.s32.totalorder %s14, 0
      %p123 = por %p121, %p122
      %p124 = scmp.ne.s32.totalorder %s113, %s116
      %p125 = scmp.eq.s32.totalorder %s19, 1
      %p126 = por %p124, %p125
      %p127 = scmp.ne.s32.totalorder %s116, %s117
      %p128 = scmp.eq.s32.totalorder %s19, 0
      %p129 = por %p127, %p128
      %p130 = scmp.ne.s32.totalorder %s116, %s117
      %p131 = scmp.eq.s32.totalorder %s20, 1
      %p132 = por %p130, %p131
      %p134 = scmp.ne.s32.totalorder %s117, %s133
      %p135 = scmp.eq.s32.totalorder %s20, 0
      %p136 = por %p134, %p135
      %p137 = scmp.le.s32.totalorder 1, %s14
      %p138 = scmp.lt.s32.totalorder %s14, 3
      %p139 = pnand %p137, %p138
      %p140 = pneg %p139
      // Predicated region
      $region9: #{tpu_custom_call.1} parent=5 // pred_check
        _
      $region10: #{tpu_custom_call.1} parent=5 // pred_check_branch
        %142 = sbr.rel (%p139) target = $region12
      $region11: #{tpu_custom_call.1} parent=5 // pred_region
        %s143 = ssub.s32 %s14, 1
        // Predicated region
        $region13: #{tpu_custom_call.1} parent=11 // pred_check
          %p144 = pneg %p35
        $region14: #{tpu_custom_call.1} parent=11 // pred_check_branch
          %146 = sbr.rel (%p144) target = $region16
        $region15: #{tpu_custom_call.1} parent=11 // pred_region
          _
        $region16: #{tpu_custom_call.1} parent=11 // pred_fallthru
          _
        // Predicated region
        $region17: #{tpu_custom_call.1} parent=11 // pred_check
          %p147 = pneg %p82
        $region18: #{tpu_custom_call.1} parent=11 // pred_check_branch
          %149 = sbr.rel (%p147) target = $region20
        $region19: #{tpu_custom_call.1} parent=11 // pred_region
          _
        $region20: #{tpu_custom_call.1} parent=11 // pred_fallthru
          _
        // Predicated region
        $region21: #{tpu_custom_call.1} parent=11 // pred_check
          %p150 = pneg %p103
        $region22: #{tpu_custom_call.1} parent=11 // pred_check_branch
          %152 = sbr.rel (%p150) target = $region24
        $region23: #{tpu_custom_call.1} parent=11 // pred_region
          _
        $region24: #{tpu_custom_call.1} parent=11 // pred_fallthru
          _
      $region12: #{tpu_custom_call.1} parent=5 // pred_fallthru
        _
      %p153 = scmp.lt.s32.totalorder %s14, 2
      // Predicated region
      $region25: #{tpu_custom_call.1} parent=5 // pred_check
        %p154 = pneg %p153
      $region26: #{tpu_custom_call.1} parent=5 // pred_check_branch
        %156 = sbr.rel (%p154) target = $region28
      $region27: #{tpu_custom_call.1} parent=5 // pred_region
        // Predicated region
        $region29: #{tpu_custom_call.1} parent=27 // pred_check
          %p157 = pneg %p55
        $region30: #{tpu_custom_call.1} parent=27 // pred_check_branch
          %159 = sbr.rel (%p157) target = $region32
        $region31: #{tpu_custom_call.1} parent=27 // pred_region
          %p160 = scmp.lt.s32.totalorder %s14, 1
          %s161 = scalar_select %p160, %s14, 1
          %s162 = smul.addr %s161, 16
          %s163 = smul.addr %s162, 8
          %s164 = scalar_lea.vmem %s1, %s163
        $region32: #{tpu_custom_call.1} parent=27 // pred_fallthru
          _
      $region28: #{tpu_custom_call.1} parent=5 // pred_fallthru
        _
      %p165 = scmp.le.s32.totalorder 1, %s14
      %p166 = scmp.lt.s32.totalorder %s14, 3
      %p167 = pnand %p165, %p166
      %p168 = pneg %p167
      // Predicated region
      $region33: #{tpu_custom_call.1} parent=5 // pred_check
        _
      $region34: #{tpu_custom_call.1} parent=5 // pred_check_branch
        %170 = sbr.rel (%p167) target = $region36
      $region35: #{tpu_custom_call.1} parent=5 // pred_region
        %s171 = ssub.s32 %s14, 1
        %p172 = pneg %p35
        %p173 = pneg %p32
        %p174 = scmp.lt.s32.totalorder %s19, 1
        %s175 = scalar_select %p174, %s19, 1
        %s176 = smul.addr %s175, 16
        %s177 = smul.addr %s176, 8
        %s178 = scalar_lea.vmem %s1, %s177
        %p179 = pneg %p61
        %p180 = pneg %p58
        %p181 = pneg %p82
        %p182 = pneg %p79
        %p183 = pneg %p103
        %p184 = pneg %p100
        %p185 = pneg %p129
        %p186 = pneg %p126
        %s187 = sand.u32 %s116, 1
        %s188 = scalar_lea.sflag [#allocation4], %s187
        %s189 = sand.u32 %s116, 1
        %s190 = smul.addr %s189, 32
        %s191 = scalar_lea.vmem [#allocation3], %s190
        %p192 = scmp.lt.s32.totalorder %s19, 1
        %s193 = scalar_select %p192, %s19, 1
        %s194 = smul.addr %s193, 16
        %s195 = smul.addr %s194, 8
        %s196 = scalar_lea.vmem %s1, %s195
        %v198 = vld [vmem:[%s196] sm:$0xff]
        %v199 = vld [vmem:[%s196 + $0x8] sm:$0xff]
        %v200 = vld [vmem:[%s196 + $0x10] sm:$0xff]
        %v201 = vld [vmem:[%s196 + $0x18] sm:$0xff]
        %v202 = vld [vmem:[%s196 + $0x20] sm:$0xff]
        %v203 = vld [vmem:[%s196 + $0x28] sm:$0xff]
        %v204 = vld [vmem:[%s196 + $0x30] sm:$0xff]
        %v205 = vld [vmem:[%s196 + $0x38] sm:$0xff]
        %v206 = vld [vmem:[%s196 + $0x40] sm:$0xff]
        %v207 = vld [vmem:[%s196 + $0x48] sm:$0xff]
        %v208 = vld [vmem:[%s196 + $0x50] sm:$0xff]
        %v209 = vld [vmem:[%s196 + $0x58] sm:$0xff]
        %v210 = vld [vmem:[%s196 + $0x60] sm:$0xff]
        %v211 = vld [vmem:[%s196 + $0x68] sm:$0xff]
        %v212 = vld [vmem:[%s196 + $0x70] sm:$0xff]
        %v213 = vld [vmem:[%s196 + $0x78] sm:$0xff]
        %v214 = vpack.c.bf16 %v199, %v198
        %v215 = vpack.c.bf16 %v201, %v200
        %v216 = vpack.c.bf16 %v203, %v202
        %v217 = vpack.c.bf16 %v205, %v204
        %v218 = vpack.c.bf16 %v207, %v206
        %v219 = vpack.c.bf16 %v209, %v208
        %v220 = vpack.c.bf16 %v211, %v210
        %v221 = vpack.c.bf16 %v213, %v212
        %v222 = vld [vmem:[%s2] sm:$0xf]
        %v223 = vld [vmem:[%s2 + $0x4] sm:$0xf]
        %v224 = vld [vmem:[%s2 + $0x8] sm:$0xf]
        %v225 = vld [vmem:[%s2 + $0xc] sm:$0xf]
        %v226 = vld [vmem:[%s2 + $0x10] sm:$0xf]
        %v227 = vld [vmem:[%s2 + $0x14] sm:$0xf]
        %v228 = vld [vmem:[%s2 + $0x18] sm:$0xf]
        %v229 = vld [vmem:[%s2 + $0x1c] sm:$0xf]
        %v230 = vld [vmem:[%s3] sm:$0xff]
        %v231 = vld [vmem:[%s3 + $0x8] sm:$0xff]
        %v232 = vld [vmem:[%s3 + $0x10] sm:$0xff]
        %v233 = vld [vmem:[%s3 + $0x18] sm:$0xff]
        %v234 = vld [vmem:[%s3 + $0x20] sm:$0xff]
        %v235 = vld [vmem:[%s3 + $0x28] sm:$0xff]
        %v236 = vld [vmem:[%s3 + $0x30] sm:$0xff]
        %v237 = vld [vmem:[%s3 + $0x38] sm:$0xff]
        %239 = vset.pattern.permute.xlu0 0
        %240 = vperm.xlu0 %239, %v230
        %v241 = vpop.permute.xlu0 %240
        %244 = vset.pattern.permute.xlu0 0
        %245 = vperm.xlu0 %244, %v231
        %v246 = vpop.permute.xlu0 %245
        %249 = vset.pattern.permute.xlu0 0
        %250 = vperm.xlu0 %249, %v232
        %v251 = vpop.permute.xlu0 %250
        %254 = vset.pattern.permute.xlu0 0
        %255 = vperm.xlu0 %254, %v233
        %v256 = vpop.permute.xlu0 %255
        %259 = vset.pattern.permute.xlu0 0
        %260 = vperm.xlu0 %259, %v234
        %v261 = vpop.permute.xlu0 %260
        %264 = vset.pattern.permute.xlu0 0
        %265 = vperm.xlu0 %264, %v235
        %v266 = vpop.permute.xlu0 %265
        %269 = vset.pattern.permute.xlu0 0
        %270 = vperm.xlu0 %269, %v236
        %v271 = vpop.permute.xlu0 %270
        %274 = vset.pattern.permute.xlu0 0
        %275 = vperm.xlu0 %274, %v237
        %v276 = vpop.permute.xlu0 %275
        %v286 = vunpack.c.l.b16 %v222
        %v287 = vunpack.c.l.b16 %v223
        %v288 = vunpack.c.l.b16 %v224
        %v289 = vunpack.c.l.b16 %v225
        %v290 = vunpack.c.l.b16 %v226
        %v291 = vunpack.c.l.b16 %v227
        %v292 = vunpack.c.l.b16 %v228
        %v293 = vunpack.c.l.b16 %v229
        %v294 = vpack.c.b16 %v287, %v286
        %v295 = vpack.c.b16 %v289, %v288
        %v296 = vpack.c.b16 %v291, %v290
        %v297 = vpack.c.b16 %v293, %v292
        %vm298 = vcmask 261120
        %v300 = vsel %vm298, %v294, 0
        %v303 = vsel %vm298, %v295, 0
        %v306 = vsel %vm298, %v296, 0
        %v309 = vsel %vm298, %v297, 0
        %v312 = vsel %vm298, %v214, 0
        %v315 = vsel %vm298, %v215, 0
        %v318 = vsel %vm298, %v216, 0
        %v321 = vsel %vm298, %v217, 0
        %v324 = vsel %vm298, %v218, 0
        %v327 = vsel %vm298, %v219, 0
        %v330 = vsel %vm298, %v220, 0
        %v333 = vsel %vm298, %v221, 0
        %335 = vmatpush.bf16.xpose.msra.mxu0 %v333
        %336 = vmatpush.bf16.xpose.msra.mxu0 %v330
        %337 = vmatpush.bf16.xpose.msra.mxu0 %v327
        %338 = vmatpush.bf16.xpose.msra.mxu0 %v324
        %339 = vmatpush.bf16.xpose.msra.mxu0 %v321
        %340 = vmatpush.bf16.xpose.msra.mxu0 %v318
        %341 = vmatpush.bf16.xpose.msra.mxu0 %v315
        %342 = vmatpush.bf16.xpose.msra.mxu0 %v312
        %343 = vmatmul.bf16.gmra.mxu0 %v300
        %v344 = vpop.f32.mrf.mxu0
        %v345 = vadd.f32 %v241, %v344
        %v346 = vpop.f32.mrf.mxu0
        %v347 = vadd.f32 %v246, %v346
        %348 = vmatmul.bf16.gmra.mxu0 %v303
        %v349 = vpop.f32.mrf.mxu0
        %v350 = vadd.f32 %v251, %v349
        %v351 = vpop.f32.mrf.mxu0
        %v352 = vadd.f32 %v256, %v351
        %353 = vmatmul.bf16.gmra.mxu0 %v306
        %v354 = vpop.f32.mrf.mxu0
        %v355 = vadd.f32 %v261, %v354
        %v356 = vpop.f32.mrf.mxu0
        %v357 = vadd.f32 %v266, %v356
        %358 = vmatmul.bf16.gmra.mxu0 %v309
        %v359 = vpop.f32.mrf.mxu0
        %v360 = vadd.f32 %v271, %v359
        %v361 = vpop.f32.mrf.mxu0
        %v362 = vadd.f32 %v276, %v361
        %363 = vdwg.mxu0
        %v364 = vmax.f32 %v345, 0.0
        %v365 = vmax.f32 %v347, 0.0
        %v366 = vmax.f32 %v350, 0.0
        %v367 = vmax.f32 %v352, 0.0
        %v368 = vmax.f32 %v355, 0.0
        %v369 = vmax.f32 %v357, 0.0
        %v370 = vmax.f32 %v360, 0.0
        %v371 = vmax.f32 %v362, 0.0
        %v372 = vpack.c.bf16 %v365, %v364
        %v373 = vpack.c.bf16 %v367, %v366
        %v374 = vpack.c.bf16 %v369, %v368
        %v375 = vpack.c.bf16 %v371, %v370
        %376 = vxpose.xlu0.c.b16.start [1/8] %v373, 128
        %377 = vxpose.xlu0.c.b16.cont [2/8] 0, 128
        %378 = vxpose.xlu0.c.b16.cont [3/8] 0, 128
        %379 = vxpose.xlu0.c.b16.cont [4/8] 0, 128
        %380 = vxpose.xlu0.c.b16.cont [5/8] 0, 128
        %381 = vxpose.xlu0.c.b16.cont [6/8] 0, 128
        %382 = vxpose.xlu0.c.b16.cont [7/8] 0, 128
        %383 = vxpose.xlu0.c.b16.end [8/8] 0, 128
        %v384 = vpop.trf.xlu0
        %v385 = vpop.trf.xlu0
        %v386 = vpop.trf.xlu0
        %v387 = vpop.trf.xlu0
        %v388 = vpop.trf.xlu0
        %v389 = vpop.trf.xlu0
        %v390 = vpop.trf.xlu0
        %v391 = vpop.trf.xlu0
        %vm392 = vcmask 130048
        %v394 = vsel %vm392, %v384, 0
        %v397 = vsel %vm392, %v385, 0
        %v400 = vsel %vm392, %v386, 0
        %v403 = vsel %vm392, %v387, 0
        %v406 = vsel %vm392, %v388, 0
        %v409 = vsel %vm392, %v389, 0
        %v412 = vsel %vm392, %v390, 0
        %v415 = vsel %vm392, %v391, 0
        %417 = vmatpush.bf16.msra.mxu0 0
        %418 = vmatpush.bf16.msra.mxu0 0
        %419 = vmatpush.bf16.msra.mxu0 0
        %420 = vmatpush.bf16.msra.mxu0 0
        %421 = vmatpush.bf16.msra.mxu0 0
        %422 = vmatpush.bf16.msra.mxu0 0
        %423 = vmatpush.bf16.msra.mxu0 0
        %424 = vmatpush.bf16.msra.mxu0 %v372
        %425 = vmatmul.bf16.gmra.mxu0 %v394
        %v426 = vpop.f32.mrf.mxu0
        %v427 = vadd.f32 0.0, %v426
        %v428 = vpop.f32.mrf.mxu0
        %v429 = vadd.f32 0.0, %v428
        %430 = vmatmul.bf16.gmra.mxu0 %v397
        %v431 = vpop.f32.mrf.mxu0
        %v432 = vadd.f32 0.0, %v431
        %v433 = vpop.f32.mrf.mxu0
        %v434 = vadd.f32 0.0, %v433
        %435 = vmatmul.bf16.gmra.mxu0 %v400
        %v436 = vpop.f32.mrf.mxu0
        %v437 = vadd.f32 0.0, %v436
        %v438 = vpop.f32.mrf.mxu0
        %v439 = vadd.f32 0.0, %v438
        %440 = vmatmul.bf16.gmra.mxu0 %v403
        %v441 = vpop.f32.mrf.mxu0
        %v442 = vadd.f32 0.0, %v441
        %v443 = vpop.f32.mrf.mxu0
        %v444 = vadd.f32 0.0, %v443
        %445 = vmatmul.bf16.gmra.mxu0 %v406
        %v446 = vpop.f32.mrf.mxu0
        %v447 = vadd.f32 0.0, %v446
        %v448 = vpop.f32.mrf.mxu0
        %v449 = vadd.f32 0.0, %v448
        %450 = vmatmul.bf16.gmra.mxu0 %v409
        %v451 = vpop.f32.mrf.mxu0
        %v452 = vadd.f32 0.0, %v451
        %v453 = vpop.f32.mrf.mxu0
        %v454 = vadd.f32 0.0, %v453
        %455 = vmatmul.bf16.gmra.mxu0 %v412
        %v456 = vpop.f32.mrf.mxu0
        %v457 = vadd.f32 0.0, %v456
        %v458 = vpop.f32.mrf.mxu0
        %v459 = vadd.f32 0.0, %v458
        %460 = vmatmul.bf16.gmra.mxu0 %v415
        %v461 = vpop.f32.mrf.mxu0
        %v462 = vadd.f32 0.0, %v461
        %v463 = vpop.f32.mrf.mxu0
        %v464 = vadd.f32 0.0, %v463
        %465 = vdwg.mxu0
        %v466 = vlaneseq
        %v467 = vshrl.u32 %v466, 7
        %v468 = vadd.s32 %v467, 8
        %v469 = vadd.s32 %v467, 16
        %v470 = vadd.s32 %v467, 24
        %v471 = vadd.s32 %v467, 32
        %v472 = vadd.s32 %v467, 40
        %v473 = vadd.s32 %v467, 48
        %v474 = vadd.s32 %v467, 56
        %v475 = vadd.s32 %v467, 64
        %v476 = vadd.s32 %v467, 72
        %v477 = vadd.s32 %v467, 80
        %v478 = vadd.s32 %v467, 88
        %v479 = vadd.s32 %v467, 96
        %v480 = vadd.s32 %v467, 104
        %v481 = vadd.s32 %v467, 112
        %v482 = vadd.s32 %v467, 120
        %v483 = vlaneseq
        %v484 = vand.u32 %v483, 127
        %vm485 = vcmp.ge.s32.totalorder %v467, 0
        %vm486 = vcmp.ge.s32.totalorder %v468, 0
        %vm487 = vcmp.ge.s32.totalorder %v469, 0
        %vm488 = vcmp.ge.s32.totalorder %v470, 0
        %vm489 = vcmp.ge.s32.totalorder %v471, 0
        %vm490 = vcmp.ge.s32.totalorder %v472, 0
        %vm491 = vcmp.ge.s32.totalorder %v473, 0
        %vm492 = vcmp.ge.s32.totalorder %v474, 0
        %vm493 = vcmp.ge.s32.totalorder %v475, 0
        %vm494 = vcmp.ge.s32.totalorder %v476, 0
        %vm495 = vcmp.ge.s32.totalorder %v477, 0
        %vm496 = vcmp.ge.s32.totalorder %v478, 0
        %vm497 = vcmp.ge.s32.totalorder %v479, 0
        %vm498 = vcmp.ge.s32.totalorder %v480, 0
        %vm499 = vcmp.ge.s32.totalorder %v481, 0
        %vm500 = vcmp.ge.s32.totalorder %v482, 0
        %vm501 = vcmp.lt.s32.totalorder %v467, 16
        %vm502 = vcmp.lt.s32.totalorder %v468, 16
        %vm503 = vcmp.lt.s32.totalorder %v469, 16
        %vm504 = vcmp.lt.s32.totalorder %v470, 16
        %vm505 = vcmp.lt.s32.totalorder %v471, 16
        %vm506 = vcmp.lt.s32.totalorder %v472, 16
        %vm507 = vcmp.lt.s32.totalorder %v473, 16
        %vm508 = vcmp.lt.s32.totalorder %v474, 16
        %vm509 = vcmp.lt.s32.totalorder %v475, 16
        %vm510 = vcmp.lt.s32.totalorder %v476, 16
        %vm511 = vcmp.lt.s32.totalorder %v477, 16
        %vm512 = vcmp.lt.s32.totalorder %v478, 16
        %vm513 = vcmp.lt.s32.totalorder %v479, 16
        %vm514 = vcmp.lt.s32.totalorder %v480, 16
        %vm515 = vcmp.lt.s32.totalorder %v481, 16
        %vm516 = vcmp.lt.s32.totalorder %v482, 16
        %vm517 = vmand %vm485, %vm501
        %vm518 = vmand %vm486, %vm502
        %vm519 = vmand %vm487, %vm503
        %vm520 = vmand %vm488, %vm504
        %vm521 = vmand %vm489, %vm505
        %vm522 = vmand %vm490, %vm506
        %vm523 = vmand %vm491, %vm507
        %vm524 = vmand %vm492, %vm508
        %vm525 = vmand %vm493, %vm509
        %vm526 = vmand %vm494, %vm510
        %vm527 = vmand %vm495, %vm511
        %vm528 = vmand %vm496, %vm512
        %vm529 = vmand %vm497, %vm513
        %vm530 = vmand %vm498, %vm514
        %vm531 = vmand %vm499, %vm515
        %vm532 = vmand %vm500, %vm516
        %vm533 = vcmp.ge.s32.totalorder %v484, 0
        %vm534 = vcmp.lt.s32.totalorder %v484, 16
        %vm535 = vmand %vm533, %vm534
        %vm536 = vmand %vm517, %vm535
        %vm537 = vmand %vm518, %vm535
        %vm538 = vmand %vm519, %vm535
        %vm539 = vmand %vm520, %vm535
        %vm540 = vmand %vm521, %vm535
        %vm541 = vmand %vm522, %vm535
        %vm542 = vmand %vm523, %vm535
        %vm543 = vmand %vm524, %vm535
        %vm544 = vmand %vm525, %vm535
        %vm545 = vmand %vm526, %vm535
        %vm546 = vmand %vm527, %vm535
        %vm547 = vmand %vm528, %vm535
        %vm548 = vmand %vm529, %vm535
        %vm549 = vmand %vm530, %vm535
        %vm550 = vmand %vm531, %vm535
        %vm551 = vmand %vm532, %vm535
        %vm552 = vcmp.ge.s32.totalorder %v467, 16
        %vm553 = vcmp.ge.s32.totalorder %v468, 16
        %vm554 = vcmp.ge.s32.totalorder %v469, 16
        %vm555 = vcmp.ge.s32.totalorder %v470, 16
        %vm556 = vcmp.ge.s32.totalorder %v471, 16
        %vm557 = vcmp.ge.s32.totalorder %v472, 16
        %vm558 = vcmp.ge.s32.totalorder %v473, 16
        %vm559 = vcmp.ge.s32.totalorder %v474, 16
        %vm560 = vcmp.ge.s32.totalorder %v475, 16
        %vm561 = vcmp.ge.s32.totalorder %v476, 16
        %vm562 = vcmp.ge.s32.totalorder %v477, 16
        %vm563 = vcmp.ge.s32.totalorder %v478, 16
        %vm564 = vcmp.ge.s32.totalorder %v479, 16
        %vm565 = vcmp.ge.s32.totalorder %v480, 16
        %vm566 = vcmp.ge.s32.totalorder %v481, 16
        %vm567 = vcmp.ge.s32.totalorder %v482, 16
        %vm568 = vcmp.lt.s32.totalorder %v467, 32
        %vm569 = vcmp.lt.s32.totalorder %v468, 32
        %vm570 = vcmp.lt.s32.totalorder %v469, 32
        %vm571 = vcmp.lt.s32.totalorder %v470, 32
        %vm572 = vcmp.lt.s32.totalorder %v471, 32
        %vm573 = vcmp.lt.s32.totalorder %v472, 32
        %vm574 = vcmp.lt.s32.totalorder %v473, 32
        %vm575 = vcmp.lt.s32.totalorder %v474, 32
        %vm576 = vcmp.lt.s32.totalorder %v475, 32
        %vm577 = vcmp.lt.s32.totalorder %v476, 32
        %vm578 = vcmp.lt.s32.totalorder %v477, 32
        %vm579 = vcmp.lt.s32.totalorder %v478, 32
        %vm580 = vcmp.lt.s32.totalorder %v479, 32
        %vm581 = vcmp.lt.s32.totalorder %v480, 32
        %vm582 = vcmp.lt.s32.totalorder %v481, 32
        %vm583 = vcmp.lt.s32.totalorder %v482, 32
        %vm584 = vmand %vm552, %vm568
        %vm585 = vmand %vm553, %vm569
        %vm586 = vmand %vm554, %vm570
        %vm587 = vmand %vm555, %vm571
        %vm588 = vmand %vm556, %vm572
        %vm589 = vmand %vm557, %vm573
        %vm590 = vmand %vm558, %vm574
        %vm591 = vmand %vm559, %vm575
        %vm592 = vmand %vm560, %vm576
        %vm593 = vmand %vm561, %vm577
        %vm594 = vmand %vm562, %vm578
        %vm595 = vmand %vm563, %vm579
        %vm596 = vmand %vm564, %vm580
        %vm597 = vmand %vm565, %vm581
        %vm598 = vmand %vm566, %vm582
        %vm599 = vmand %vm567, %vm583
        %vm600 = vcmp.ge.s32.totalorder %v484, 16
        %vm601 = vcmp.lt.s32.totalorder %v484, 32
        %vm602 = vmand %vm600, %vm601
        %vm603 = vmand %vm584, %vm602
        %vm604 = vmand %vm585, %vm602
        %vm605 = vmand %vm586, %vm602
        %vm606 = vmand %vm587, %vm602
        %vm607 = vmand %vm588, %vm602
        %vm608 = vmand %vm589, %vm602
        %vm609 = vmand %vm590, %vm602
        %vm610 = vmand %vm591, %vm602
        %vm611 = vmand %vm592, %vm602
        %vm612 = vmand %vm593, %vm602
        %vm613 = vmand %vm594, %vm602
        %vm614 = vmand %vm595, %vm602
        %vm615 = vmand %vm596, %vm602
        %vm616 = vmand %vm597, %vm602
        %vm617 = vmand %vm598, %vm602
        %vm618 = vmand %vm599, %vm602
        %vm619 = vmor %vm536, %vm603
        %vm620 = vmor %vm537, %vm604
        %vm621 = vmor %vm538, %vm605
        %vm622 = vmor %vm539, %vm606
        %vm623 = vmor %vm540, %vm607
        %vm624 = vmor %vm541, %vm608
        %vm625 = vmor %vm542, %vm609
        %vm626 = vmor %vm543, %vm610
        %vm627 = vmor %vm544, %vm611
        %vm628 = vmor %vm545, %vm612
        %vm629 = vmor %vm546, %vm613
        %vm630 = vmor %vm547, %vm614
        %vm631 = vmor %vm548, %vm615
        %vm632 = vmor %vm549, %vm616
        %vm633 = vmor %vm550, %vm617
        %vm634 = vmor %vm551, %vm618
        %vm635 = vcmp.ge.s32.totalorder %v467, 32
        %vm636 = vcmp.ge.s32.totalorder %v468, 32
        %vm637 = vcmp.ge.s32.totalorder %v469, 32
        %vm638 = vcmp.ge.s32.totalorder %v470, 32
        %vm639 = vcmp.ge.s32.totalorder %v471, 32
        %vm640 = vcmp.ge.s32.totalorder %v472, 32
        %vm641 = vcmp.ge.s32.totalorder %v473, 32
        %vm642 = vcmp.ge.s32.totalorder %v474, 32
        %vm643 = vcmp.ge.s32.totalorder %v475, 32
        %vm644 = vcmp.ge.s32.totalorder %v476, 32
        %vm645 = vcmp.ge.s32.totalorder %v477, 32
        %vm646 = vcmp.ge.s32.totalorder %v478, 32
        %vm647 = vcmp.ge.s32.totalorder %v479, 32
        %vm648 = vcmp.ge.s32.totalorder %v480, 32
        %vm649 = vcmp.ge.s32.totalorder %v481, 32
        %vm650 = vcmp.ge.s32.totalorder %v482, 32
        %vm651 = vcmp.lt.s32.totalorder %v467, 48
        %vm652 = vcmp.lt.s32.totalorder %v468, 48
        %vm653 = vcmp.lt.s32.totalorder %v469, 48
        %vm654 = vcmp.lt.s32.totalorder %v470, 48
        %vm655 = vcmp.lt.s32.totalorder %v471, 48
        %vm656 = vcmp.lt.s32.totalorder %v472, 48
        %vm657 = vcmp.lt.s32.totalorder %v473, 48
        %vm658 = vcmp.lt.s32.totalorder %v474, 48
        %vm659 = vcmp.lt.s32.totalorder %v475, 48
        %vm660 = vcmp.lt.s32.totalorder %v476, 48
        %vm661 = vcmp.lt.s32.totalorder %v477, 48
        %vm662 = vcmp.lt.s32.totalorder %v478, 48
        %vm663 = vcmp.lt.s32.totalorder %v479, 48
        %vm664 = vcmp.lt.s32.totalorder %v480, 48
        %vm665 = vcmp.lt.s32.totalorder %v481, 48
        %vm666 = vcmp.lt.s32.totalorder %v482, 48
        %vm667 = vmand %vm635, %vm651
        %vm668 = vmand %vm636, %vm652
        %vm669 = vmand %vm637, %vm653
        %vm670 = vmand %vm638, %vm654
        %vm671 = vmand %vm639, %vm655
        %vm672 = vmand %vm640, %vm656
        %vm673 = vmand %vm641, %vm657
        %vm674 = vmand %vm642, %vm658
        %vm675 = vmand %vm643, %vm659
        %vm676 = vmand %vm644, %vm660
        %vm677 = vmand %vm645, %vm661
        %vm678 = vmand %vm646, %vm662
        %vm679 = vmand %vm647, %vm663
        %vm680 = vmand %vm648, %vm664
        %vm681 = vmand %vm649, %vm665
        %vm682 = vmand %vm650, %vm666
        %vm683 = vcmp.ge.s32.totalorder %v484, 32
        %vm684 = vcmp.lt.s32.totalorder %v484, 48
        %vm685 = vmand %vm683, %vm684
        %vm686 = vmand %vm667, %vm685
        %vm687 = vmand %vm668, %vm685
        %vm688 = vmand %vm669, %vm685
        %vm689 = vmand %vm670, %vm685
        %vm690 = vmand %vm671, %vm685
        %vm691 = vmand %vm672, %vm685
        %vm692 = vmand %vm673, %vm685
        %vm693 = vmand %vm674, %vm685
        %vm694 = vmand %vm675, %vm685
        %vm695 = vmand %vm676, %vm685
        %vm696 = vmand %vm677, %vm685
        %vm697 = vmand %vm678, %vm685
        %vm698 = vmand %vm679, %vm685
        %vm699 = vmand %vm680, %vm685
        %vm700 = vmand %vm681, %vm685
        %vm701 = vmand %vm682, %vm685
        %vm702 = vmor %vm619, %vm686
        %vm703 = vmor %vm620, %vm687
        %vm704 = vmor %vm621, %vm688
        %vm705 = vmor %vm622, %vm689
        %vm706 = vmor %vm623, %vm690
        %vm707 = vmor %vm624, %vm691
        %vm708 = vmor %vm625, %vm692
        %vm709 = vmor %vm626, %vm693
        %vm710 = vmor %vm627, %vm694
        %vm711 = vmor %vm628, %vm695
        %vm712 = vmor %vm629, %vm696
        %vm713 = vmor %vm630, %vm697
        %vm714 = vmor %vm631, %vm698
        %vm715 = vmor %vm632, %vm699
        %vm716 = vmor %vm633, %vm700
        %vm717 = vmor %vm634, %vm701
        %vm718 = vcmp.ge.s32.totalorder %v467, 48
        %vm719 = vcmp.ge.s32.totalorder %v468, 48
        %vm720 = vcmp.ge.s32.totalorder %v469, 48
        %vm721 = vcmp.ge.s32.totalorder %v470, 48
        %vm722 = vcmp.ge.s32.totalorder %v471, 48
        %vm723 = vcmp.ge.s32.totalorder %v472, 48
        %vm724 = vcmp.ge.s32.totalorder %v473, 48
        %vm725 = vcmp.ge.s32.totalorder %v474, 48
        %vm726 = vcmp.ge.s32.totalorder %v475, 48
        %vm727 = vcmp.ge.s32.totalorder %v476, 48
        %vm728 = vcmp.ge.s32.totalorder %v477, 48
        %vm729 = vcmp.ge.s32.totalorder %v478, 48
        %vm730 = vcmp.ge.s32.totalorder %v479, 48
        %vm731 = vcmp.ge.s32.totalorder %v480, 48
        %vm732 = vcmp.ge.s32.totalorder %v481, 48
        %vm733 = vcmp.ge.s32.totalorder %v482, 48
        %vm734 = vcmp.lt.s32.totalorder %v467, 64
        %vm735 = vcmp.lt.s32.totalorder %v468, 64
        %vm736 = vcmp.lt.s32.totalorder %v469, 64
        %vm737 = vcmp.lt.s32.totalorder %v470, 64
        %vm738 = vcmp.lt.s32.totalorder %v471, 64
        %vm739 = vcmp.lt.s32.totalorder %v472, 64
        %vm740 = vcmp.lt.s32.totalorder %v473, 64
        %vm741 = vcmp.lt.s32.totalorder %v474, 64
        %vm742 = vcmp.lt.s32.totalorder %v475, 64
        %vm743 = vcmp.lt.s32.totalorder %v476, 64
        %vm744 = vcmp.lt.s32.totalorder %v477, 64
        %vm745 = vcmp.lt.s32.totalorder %v478, 64
        %vm746 = vcmp.lt.s32.totalorder %v479, 64
        %vm747 = vcmp.lt.s32.totalorder %v480, 64
        %vm748 = vcmp.lt.s32.totalorder %v481, 64
        %vm749 = vcmp.lt.s32.totalorder %v482, 64
        %vm750 = vmand %vm718, %vm734
        %vm751 = vmand %vm719, %vm735
        %vm752 = vmand %vm720, %vm736
        %vm753 = vmand %vm721, %vm737
        %vm754 = vmand %vm722, %vm738
        %vm755 = vmand %vm723, %vm739
        %vm756 = vmand %vm724, %vm740
        %vm757 = vmand %vm725, %vm741
        %vm758 = vmand %vm726, %vm742
        %vm759 = vmand %vm727, %vm743
        %vm760 = vmand %vm728, %vm744
        %vm761 = vmand %vm729, %vm745
        %vm762 = vmand %vm730, %vm746
        %vm763 = vmand %vm731, %vm747
        %vm764 = vmand %vm732, %vm748
        %vm765 = vmand %vm733, %vm749
        %vm766 = vcmp.ge.s32.totalorder %v484, 48
        %vm767 = vcmp.lt.s32.totalorder %v484, 64
        %vm768 = vmand %vm766, %vm767
        %vm769 = vmand %vm750, %vm768
        %vm770 = vmand %vm751, %vm768
        %vm771 = vmand %vm752, %vm768
        %vm772 = vmand %vm753, %vm768
        %vm773 = vmand %vm754, %vm768
        %vm774 = vmand %vm755, %vm768
        %vm775 = vmand %vm756, %vm768
        %vm776 = vmand %vm757, %vm768
        %vm777 = vmand %vm758, %vm768
        %vm778 = vmand %vm759, %vm768
        %vm779 = vmand %vm760, %vm768
        %vm780 = vmand %vm761, %vm768
        %vm781 = vmand %vm762, %vm768
        %vm782 = vmand %vm763, %vm768
        %vm783 = vmand %vm764, %vm768
        %vm784 = vmand %vm765, %vm768
        %vm785 = vmor %vm702, %vm769
        %vm786 = vmor %vm703, %vm770
        %vm787 = vmor %vm704, %vm771
        %vm788 = vmor %vm705, %vm772
        %vm789 = vmor %vm706, %vm773
        %vm790 = vmor %vm707, %vm774
        %vm791 = vmor %vm708, %vm775
        %vm792 = vmor %vm709, %vm776
        %vm793 = vmor %vm710, %vm777
        %vm794 = vmor %vm711, %vm778
        %vm795 = vmor %vm712, %vm779
        %vm796 = vmor %vm713, %vm780
        %vm797 = vmor %vm714, %vm781
        %vm798 = vmor %vm715, %vm782
        %vm799 = vmor %vm716, %vm783
        %vm800 = vmor %vm717, %vm784
        %vm801 = vcmp.ge.s32.totalorder %v467, 64
        %vm802 = vcmp.ge.s32.totalorder %v468, 64
        %vm803 = vcmp.ge.s32.totalorder %v469, 64
        %vm804 = vcmp.ge.s32.totalorder %v470, 64
        %vm805 = vcmp.ge.s32.totalorder %v471, 64
        %vm806 = vcmp.ge.s32.totalorder %v472, 64
        %vm807 = vcmp.ge.s32.totalorder %v473, 64
        %vm808 = vcmp.ge.s32.totalorder %v474, 64
        %vm809 = vcmp.ge.s32.totalorder %v475, 64
        %vm810 = vcmp.ge.s32.totalorder %v476, 64
        %vm811 = vcmp.ge.s32.totalorder %v477, 64
        %vm812 = vcmp.ge.s32.totalorder %v478, 64
        %vm813 = vcmp.ge.s32.totalorder %v479, 64
        %vm814 = vcmp.ge.s32.totalorder %v480, 64
        %vm815 = vcmp.ge.s32.totalorder %v481, 64
        %vm816 = vcmp.ge.s32.totalorder %v482, 64
        %vm817 = vcmp.lt.s32.totalorder %v467, 80
        %vm818 = vcmp.lt.s32.totalorder %v468, 80
        %vm819 = vcmp.lt.s32.totalorder %v469, 80
        %vm820 = vcmp.lt.s32.totalorder %v470, 80
        %vm821 = vcmp.lt.s32.totalorder %v471, 80
        %vm822 = vcmp.lt.s32.totalorder %v472, 80
        %vm823 = vcmp.lt.s32.totalorder %v473, 80
        %vm824 = vcmp.lt.s32.totalorder %v474, 80
        %vm825 = vcmp.lt.s32.totalorder %v475, 80
        %vm826 = vcmp.lt.s32.totalorder %v476, 80
        %vm827 = vcmp.lt.s32.totalorder %v477, 80
        %vm828 = vcmp.lt.s32.totalorder %v478, 80
        %vm829 = vcmp.lt.s32.totalorder %v479, 80
        %vm830 = vcmp.lt.s32.totalorder %v480, 80
        %vm831 = vcmp.lt.s32.totalorder %v481, 80
        %vm832 = vcmp.lt.s32.totalorder %v482, 80
        %vm833 = vmand %vm801, %vm817
        %vm834 = vmand %vm802, %vm818
        %vm835 = vmand %vm803, %vm819
        %vm836 = vmand %vm804, %vm820
        %vm837 = vmand %vm805, %vm821
        %vm838 = vmand %vm806, %vm822
        %vm839 = vmand %vm807, %vm823
        %vm840 = vmand %vm808, %vm824
        %vm841 = vmand %vm809, %vm825
        %vm842 = vmand %vm810, %vm826
        %vm843 = vmand %vm811, %vm827
        %vm844 = vmand %vm812, %vm828
        %vm845 = vmand %vm813, %vm829
        %vm846 = vmand %vm814, %vm830
        %vm847 = vmand %vm815, %vm831
        %vm848 = vmand %vm816, %vm832
        %vm849 = vcmp.ge.s32.totalorder %v484, 64
        %vm850 = vcmp.lt.s32.totalorder %v484, 80
        %vm851 = vmand %vm849, %vm850
        %vm852 = vmand %vm833, %vm851
        %vm853 = vmand %vm834, %vm851
        %vm854 = vmand %vm835, %vm851
        %vm855 = vmand %vm836, %vm851
        %vm856 = vmand %vm837, %vm851
        %vm857 = vmand %vm838, %vm851
        %vm858 = vmand %vm839, %vm851
        %vm859 = vmand %vm840, %vm851
        %vm860 = vmand %vm841, %vm851
        %vm861 = vmand %vm842, %vm851
        %vm862 = vmand %vm843, %vm851
        %vm863 = vmand %vm844, %vm851
        %vm864 = vmand %vm845, %vm851
        %vm865 = vmand %vm846, %vm851
        %vm866 = vmand %vm847, %vm851
        %vm867 = vmand %vm848, %vm851
        %vm868 = vmor %vm785, %vm852
        %vm869 = vmor %vm786, %vm853
        %vm870 = vmor %vm787, %vm854
        %vm871 = vmor %vm788, %vm855
        %vm872 = vmor %vm789, %vm856
        %vm873 = vmor %vm790, %vm857
        %vm874 = vmor %vm791, %vm858
        %vm875 = vmor %vm792, %vm859
        %vm876 = vmor %vm793, %vm860
        %vm877 = vmor %vm794, %vm861
        %vm878 = vmor %vm795, %vm862
        %vm879 = vmor %vm796, %vm863
        %vm880 = vmor %vm797, %vm864
        %vm881 = vmor %vm798, %vm865
        %vm882 = vmor %vm799, %vm866
        %vm883 = vmor %vm800, %vm867
        %vm884 = vcmp.ge.s32.totalorder %v467, 80
        %vm885 = vcmp.ge.s32.totalorder %v468, 80
        %vm886 = vcmp.ge.s32.totalorder %v469, 80
        %vm887 = vcmp.ge.s32.totalorder %v470, 80
        %vm888 = vcmp.ge.s32.totalorder %v471, 80
        %vm889 = vcmp.ge.s32.totalorder %v472, 80
        %vm890 = vcmp.ge.s32.totalorder %v473, 80
        %vm891 = vcmp.ge.s32.totalorder %v474, 80
        %vm892 = vcmp.ge.s32.totalorder %v475, 80
        %vm893 = vcmp.ge.s32.totalorder %v476, 80
        %vm894 = vcmp.ge.s32.totalorder %v477, 80
        %vm895 = vcmp.ge.s32.totalorder %v478, 80
        %vm896 = vcmp.ge.s32.totalorder %v479, 80
        %vm897 = vcmp.ge.s32.totalorder %v480, 80
        %vm898 = vcmp.ge.s32.totalorder %v481, 80
        %vm899 = vcmp.ge.s32.totalorder %v482, 80
        %vm900 = vcmp.lt.s32.totalorder %v467, 96
        %vm901 = vcmp.lt.s32.totalorder %v468, 96
        %vm902 = vcmp.lt.s32.totalorder %v469, 96
        %vm903 = vcmp.lt.s32.totalorder %v470, 96
        %vm904 = vcmp.lt.s32.totalorder %v471, 96
        %vm905 = vcmp.lt.s32.totalorder %v472, 96
        %vm906 = vcmp.lt.s32.totalorder %v473, 96
        %vm907 = vcmp.lt.s32.totalorder %v474, 96
        %vm908 = vcmp.lt.s32.totalorder %v475, 96
        %vm909 = vcmp.lt.s32.totalorder %v476, 96
        %vm910 = vcmp.lt.s32.totalorder %v477, 96
        %vm911 = vcmp.lt.s32.totalorder %v478, 96
        %vm912 = vcmp.lt.s32.totalorder %v479, 96
        %vm913 = vcmp.lt.s32.totalorder %v480, 96
        %vm914 = vcmp.lt.s32.totalorder %v481, 96
        %vm915 = vcmp.lt.s32.totalorder %v482, 96
        %vm916 = vmand %vm884, %vm900
        %vm917 = vmand %vm885, %vm901
        %vm918 = vmand %vm886, %vm902
        %vm919 = vmand %vm887, %vm903
        %vm920 = vmand %vm888, %vm904
        %vm921 = vmand %vm889, %vm905
        %vm922 = vmand %vm890, %vm906
        %vm923 = vmand %vm891, %vm907
        %vm924 = vmand %vm892, %vm908
        %vm925 = vmand %vm893, %vm909
        %vm926 = vmand %vm894, %vm910
        %vm927 = vmand %vm895, %vm911
        %vm928 = vmand %vm896, %vm912
        %vm929 = vmand %vm897, %vm913
        %vm930 = vmand %vm898, %vm914
        %vm931 = vmand %vm899, %vm915
        %vm932 = vcmp.ge.s32.totalorder %v484, 80
        %vm933 = vcmp.lt.s32.totalorder %v484, 96
        %vm934 = vmand %vm932, %vm933
        %vm935 = vmand %vm916, %vm934
        %vm936 = vmand %vm917, %vm934
        %vm937 = vmand %vm918, %vm934
        %vm938 = vmand %vm919, %vm934
        %vm939 = vmand %vm920, %vm934
        %vm940 = vmand %vm921, %vm934
        %vm941 = vmand %vm922, %vm934
        %vm942 = vmand %vm923, %vm934
        %vm943 = vmand %vm924, %vm934
        %vm944 = vmand %vm925, %vm934
        %vm945 = vmand %vm926, %vm934
        %vm946 = vmand %vm927, %vm934
        %vm947 = vmand %vm928, %vm934
        %vm948 = vmand %vm929, %vm934
        %vm949 = vmand %vm930, %vm934
        %vm950 = vmand %vm931, %vm934
        %vm951 = vmor %vm868, %vm935
        %vm952 = vmor %vm869, %vm936
        %vm953 = vmor %vm870, %vm937
        %vm954 = vmor %vm871, %vm938
        %vm955 = vmor %vm872, %vm939
        %vm956 = vmor %vm873, %vm940
        %vm957 = vmor %vm874, %vm941
        %vm958 = vmor %vm875, %vm942
        %vm959 = vmor %vm876, %vm943
        %vm960 = vmor %vm877, %vm944
        %vm961 = vmor %vm878, %vm945
        %vm962 = vmor %vm879, %vm946
        %vm963 = vmor %vm880, %vm947
        %vm964 = vmor %vm881, %vm948
        %vm965 = vmor %vm882, %vm949
        %vm966 = vmor %vm883, %vm950
        %vm967 = vcmp.ge.s32.totalorder %v467, 96
        %vm968 = vcmp.ge.s32.totalorder %v468, 96
        %vm969 = vcmp.ge.s32.totalorder %v469, 96
        %vm970 = vcmp.ge.s32.totalorder %v470, 96
        %vm971 = vcmp.ge.s32.totalorder %v471, 96
        %vm972 = vcmp.ge.s32.totalorder %v472, 96
        %vm973 = vcmp.ge.s32.totalorder %v473, 96
        %vm974 = vcmp.ge.s32.totalorder %v474, 96
        %vm975 = vcmp.ge.s32.totalorder %v475, 96
        %vm976 = vcmp.ge.s32.totalorder %v476, 96
        %vm977 = vcmp.ge.s32.totalorder %v477, 96
        %vm978 = vcmp.ge.s32.totalorder %v478, 96
        %vm979 = vcmp.ge.s32.totalorder %v479, 96
        %vm980 = vcmp.ge.s32.totalorder %v480, 96
        %vm981 = vcmp.ge.s32.totalorder %v481, 96
        %vm982 = vcmp.ge.s32.totalorder %v482, 96
        %vm983 = vcmp.lt.s32.totalorder %v467, 112
        %vm984 = vcmp.lt.s32.totalorder %v468, 112
        %vm985 = vcmp.lt.s32.totalorder %v469, 112
        %vm986 = vcmp.lt.s32.totalorder %v470, 112
        %vm987 = vcmp.lt.s32.totalorder %v471, 112
        %vm988 = vcmp.lt.s32.totalorder %v472, 112
        %vm989 = vcmp.lt.s32.totalorder %v473, 112
        %vm990 = vcmp.lt.s32.totalorder %v474, 112
        %vm991 = vcmp.lt.s32.totalorder %v475, 112
        %vm992 = vcmp.lt.s32.totalorder %v476, 112
        %vm993 = vcmp.lt.s32.totalorder %v477, 112
        %vm994 = vcmp.lt.s32.totalorder %v478, 112
        %vm995 = vcmp.lt.s32.totalorder %v479, 112
        %vm996 = vcmp.lt.s32.totalorder %v480, 112
        %vm997 = vcmp.lt.s32.totalorder %v481, 112
        %vm998 = vcmp.lt.s32.totalorder %v482, 112
        %vm999 = vmand %vm967, %vm983
        %vm1000 = vmand %vm968, %vm984
        %vm1001 = vmand %vm969, %vm985
        %vm1002 = vmand %vm970, %vm986
        %vm1003 = vmand %vm971, %vm987
        %vm1004 = vmand %vm972, %vm988
        %vm1005 = vmand %vm973, %vm989
        %vm1006 = vmand %vm974, %vm990
        %vm1007 = vmand %vm975, %vm991
        %vm1008 = vmand %vm976, %vm992
        %vm1009 = vmand %vm977, %vm993
        %vm1010 = vmand %vm978, %vm994
        %vm1011 = vmand %vm979, %vm995
        %vm1012 = vmand %vm980, %vm996
        %vm1013 = vmand %vm981, %vm997
        %vm1014 = vmand %vm982, %vm998
        %vm1015 = vcmp.ge.s32.totalorder %v484, 96
        %vm1016 = vcmp.lt.s32.totalorder %v484, 112
        %vm1017 = vmand %vm1015, %vm1016
        %vm1018 = vmand %vm999, %vm1017
        %vm1019 = vmand %vm1000, %vm1017
        %vm1020 = vmand %vm1001, %vm1017
        %vm1021 = vmand %vm1002, %vm1017
        %vm1022 = vmand %vm1003, %vm1017
        %vm1023 = vmand %vm1004, %vm1017
        %vm1024 = vmand %vm1005, %vm1017
        %vm1025 = vmand %vm1006, %vm1017
        %vm1026 = vmand %vm1007, %vm1017
        %vm1027 = vmand %vm1008, %vm1017
        %vm1028 = vmand %vm1009, %vm1017
        %vm1029 = vmand %vm1010, %vm1017
        %vm1030 = vmand %vm1011, %vm1017
        %vm1031 = vmand %vm1012, %vm1017
        %vm1032 = vmand %vm1013, %vm1017
        %vm1033 = vmand %vm1014, %vm1017
        %vm1034 = vmor %vm951, %vm1018
        %vm1035 = vmor %vm952, %vm1019
        %vm1036 = vmor %vm953, %vm1020
        %vm1037 = vmor %vm954, %vm1021
        %vm1038 = vmor %vm955, %vm1022
        %vm1039 = vmor %vm956, %vm1023
        %vm1040 = vmor %vm957, %vm1024
        %vm1041 = vmor %vm958, %vm1025
        %vm1042 = vmor %vm959, %vm1026
        %vm1043 = vmor %vm960, %vm1027
        %vm1044 = vmor %vm961, %vm1028
        %vm1045 = vmor %vm962, %vm1029
        %vm1046 = vmor %vm963, %vm1030
        %vm1047 = vmor %vm964, %vm1031
        %vm1048 = vmor %vm965, %vm1032
        %vm1049 = vmor %vm966, %vm1033
        %vm1050 = vcmp.ge.s32.totalorder %v467, 112
        %vm1051 = vcmp.ge.s32.totalorder %v468, 112
        %vm1052 = vcmp.ge.s32.totalorder %v469, 112
        %vm1053 = vcmp.ge.s32.totalorder %v470, 112
        %vm1054 = vcmp.ge.s32.totalorder %v471, 112
        %vm1055 = vcmp.ge.s32.totalorder %v472, 112
        %vm1056 = vcmp.ge.s32.totalorder %v473, 112
        %vm1057 = vcmp.ge.s32.totalorder %v474, 112
        %vm1058 = vcmp.ge.s32.totalorder %v475, 112
        %vm1059 = vcmp.ge.s32.totalorder %v476, 112
        %vm1060 = vcmp.ge.s32.totalorder %v477, 112
        %vm1061 = vcmp.ge.s32.totalorder %v478, 112
        %vm1062 = vcmp.ge.s32.totalorder %v479, 112
        %vm1063 = vcmp.ge.s32.totalorder %v480, 112
        %vm1064 = vcmp.ge.s32.totalorder %v481, 112
        %vm1065 = vcmp.ge.s32.totalorder %v482, 112
        %vm1066 = vcmp.lt.s32.totalorder %v467, 128
        %vm1067 = vcmp.lt.s32.totalorder %v468, 128
        %vm1068 = vcmp.lt.s32.totalorder %v469, 128
        %vm1069 = vcmp.lt.s32.totalorder %v470, 128
        %vm1070 = vcmp.lt.s32.totalorder %v471, 128
        %vm1071 = vcmp.lt.s32.totalorder %v472, 128
        %vm1072 = vcmp.lt.s32.totalorder %v473, 128
        %vm1073 = vcmp.lt.s32.totalorder %v474, 128
        %vm1074 = vcmp.lt.s32.totalorder %v475, 128
        %vm1075 = vcmp.lt.s32.totalorder %v476, 128
        %vm1076 = vcmp.lt.s32.totalorder %v477, 128
        %vm1077 = vcmp.lt.s32.totalorder %v478, 128
        %vm1078 = vcmp.lt.s32.totalorder %v479, 128
        %vm1079 = vcmp.lt.s32.totalorder %v480, 128
        %vm1080 = vcmp.lt.s32.totalorder %v481, 128
        %vm1081 = vcmp.lt.s32.totalorder %v482, 128
        %vm1082 = vmand %vm1050, %vm1066
        %vm1083 = vmand %vm1051, %vm1067
        %vm1084 = vmand %vm1052, %vm1068
        %vm1085 = vmand %vm1053, %vm1069
        %vm1086 = vmand %vm1054, %vm1070
        %vm1087 = vmand %vm1055, %vm1071
        %vm1088 = vmand %vm1056, %vm1072
        %vm1089 = vmand %vm1057, %vm1073
        %vm1090 = vmand %vm1058, %vm1074
        %vm1091 = vmand %vm1059, %vm1075
        %vm1092 = vmand %vm1060, %vm1076
        %vm1093 = vmand %vm1061, %vm1077
        %vm1094 = vmand %vm1062, %vm1078
        %vm1095 = vmand %vm1063, %vm1079
        %vm1096 = vmand %vm1064, %vm1080
        %vm1097 = vmand %vm1065, %vm1081
        %vm1098 = vcmp.ge.s32.totalorder %v484, 112
        %vm1099 = vcmp.lt.s32.totalorder %v484, 128
        %vm1100 = vmand %vm1098, %vm1099
        %vm1101 = vmand %vm1082, %vm1100
        %vm1102 = vmand %vm1083, %vm1100
        %vm1103 = vmand %vm1084, %vm1100
        %vm1104 = vmand %vm1085, %vm1100
        %vm1105 = vmand %vm1086, %vm1100
        %vm1106 = vmand %vm1087, %vm1100
        %vm1107 = vmand %vm1088, %vm1100
        %vm1108 = vmand %vm1089, %vm1100
        %vm1109 = vmand %vm1090, %vm1100
        %vm1110 = vmand %vm1091, %vm1100
        %vm1111 = vmand %vm1092, %vm1100
        %vm1112 = vmand %vm1093, %vm1100
        %vm1113 = vmand %vm1094, %vm1100
        %vm1114 = vmand %vm1095, %vm1100
        %vm1115 = vmand %vm1096, %vm1100
        %vm1116 = vmand %vm1097, %vm1100
        %vm1117 = vmor %vm1034, %vm1101
        %vm1118 = vmor %vm1035, %vm1102
        %vm1119 = vmor %vm1036, %vm1103
        %vm1120 = vmor %vm1037, %vm1104
        %vm1121 = vmor %vm1038, %vm1105
        %vm1122 = vmor %vm1039, %vm1106
        %vm1123 = vmor %vm1040, %vm1107
        %vm1124 = vmor %vm1041, %vm1108
        %vm1125 = vmor %vm1042, %vm1109
        %vm1126 = vmor %vm1043, %vm1110
        %vm1127 = vmor %vm1044, %vm1111
        %vm1128 = vmor %vm1045, %vm1112
        %vm1129 = vmor %vm1046, %vm1113
        %vm1130 = vmor %vm1047, %vm1114
        %vm1131 = vmor %vm1048, %vm1115
        %vm1132 = vmor %vm1049, %vm1116
        %v1133 = vsel %vm1117, %v427, inf
        %v1134 = vsel %vm1118, %v429, inf
        %v1135 = vsel %vm1119, %v432, inf
        %v1136 = vsel %vm1120, %v434, inf
        %v1137 = vsel %vm1121, %v437, inf
        %v1138 = vsel %vm1122, %v439, inf
        %v1139 = vsel %vm1123, %v442, inf
        %v1140 = vsel %vm1124, %v444, inf
        %v1141 = vsel %vm1125, %v447, inf
        %v1142 = vsel %vm1126, %v449, inf
        %v1143 = vsel %vm1127, %v452, inf
        %v1144 = vsel %vm1128, %v454, inf
        %v1145 = vsel %vm1129, %v457, inf
        %v1146 = vsel %vm1130, %v459, inf
        %v1147 = vsel %vm1131, %v462, inf
        %v1148 = vsel %vm1132, %v464, inf
        %1149 = vmin.xlane.f32.xlu0 %v1133
        %v1150 = vpop.xlane.xlu0 %1149
        %1151 = vmin.xlane.f32.xlu0 %v1134
        %v1152 = vpop.xlane.xlu0 %1151
        %1153 = vmin.xlane.f32.xlu0 %v1135
        %v1154 = vpop.xlane.xlu0 %1153
        %1155 = vmin.xlane.f32.xlu0 %v1136
        %v1156 = vpop.xlane.xlu0 %1155
        %1157 = vmin.xlane.f32.xlu0 %v1137
        %v1158 = vpop.xlane.xlu0 %1157
        %1159 = vmin.xlane.f32.xlu0 %v1138
        %v1160 = vpop.xlane.xlu0 %1159
        %1161 = vmin.xlane.f32.xlu0 %v1139
        %v1162 = vpop.xlane.xlu0 %1161
        %1163 = vmin.xlane.f32.xlu0 %v1140
        %v1164 = vpop.xlane.xlu0 %1163
        %1165 = vmin.xlane.f32.xlu0 %v1141
        %v1166 = vpop.xlane.xlu0 %1165
        %1167 = vmin.xlane.f32.xlu0 %v1142
        %v1168 = vpop.xlane.xlu0 %1167
        %1169 = vmin.xlane.f32.xlu0 %v1143
        %v1170 = vpop.xlane.xlu0 %1169
        %1171 = vmin.xlane.f32.xlu0 %v1144
        %v1172 = vpop.xlane.xlu0 %1171
        %1173 = vmin.xlane.f32.xlu0 %v1145
        %v1174 = vpop.xlane.xlu0 %1173
        %1175 = vmin.xlane.f32.xlu0 %v1146
        %v1176 = vpop.xlane.xlu0 %1175
        %1177 = vmin.xlane.f32.xlu0 %v1147
        %v1178 = vpop.xlane.xlu0 %1177
        %1179 = vmin.xlane.f32.xlu0 %v1148
        %v1180 = vpop.xlane.xlu0 %1179
        %v1181 = vsub.f32 %v1150, %v427
        %v1182 = vsub.f32 %v1152, %v429
        %v1183 = vsub.f32 %v1154, %v432
        %v1184 = vsub.f32 %v1156, %v434
        %v1185 = vsub.f32 %v1158, %v437
        %v1186 = vsub.f32 %v1160, %v439
        %v1187 = vsub.f32 %v1162, %v442
        %v1188 = vsub.f32 %v1164, %v444
        %v1189 = vsub.f32 %v1166, %v447
        %v1190 = vsub.f32 %v1168, %v449
        %v1191 = vsub.f32 %v1170, %v452
        %v1192 = vsub.f32 %v1172, %v454
        %v1193 = vsub.f32 %v1174, %v457
        %v1194 = vsub.f32 %v1176, %v459
        %v1195 = vsub.f32 %v1178, %v462
        %v1196 = vsub.f32 %v1180, %v464
        %v1197 = vsel %vm1117, %v1181, -inf
        %v1198 = vsel %vm1118, %v1182, -inf
        %v1199 = vsel %vm1119, %v1183, -inf
        %v1200 = vsel %vm1120, %v1184, -inf
        %v1201 = vsel %vm1121, %v1185, -inf
        %v1202 = vsel %vm1122, %v1186, -inf
        %v1203 = vsel %vm1123, %v1187, -inf
        %v1204 = vsel %vm1124, %v1188, -inf
        %v1205 = vsel %vm1125, %v1189, -inf
        %v1206 = vsel %vm1126, %v1190, -inf
        %v1207 = vsel %vm1127, %v1191, -inf
        %v1208 = vsel %vm1128, %v1192, -inf
        %v1209 = vsel %vm1129, %v1193, -inf
        %v1210 = vsel %vm1130, %v1194, -inf
        %v1211 = vsel %vm1131, %v1195, -inf
        %v1212 = vsel %vm1132, %v1196, -inf
        %v1213 = vmul.f32 %v1197, 1.442695
        %v1214 = vpow.pop %v1213
        %v1215 = vmul.f32 %v1198, 1.442695
        %v1216 = vpow.pop %v1215
        %v1217 = vmul.f32 %v1199, 1.442695
        %v1218 = vpow.pop %v1217
        %v1219 = vmul.f32 %v1200, 1.442695
        %v1220 = vpow.pop %v1219
        %v1221 = vmul.f32 %v1201, 1.442695
        %v1222 = vpow.pop %v1221
        %v1223 = vmul.f32 %v1202, 1.442695
        %v1224 = vpow.pop %v1223
        %v1225 = vmul.f32 %v1203, 1.442695
        %v1226 = vpow.pop %v1225
        %v1227 = vmul.f32 %v1204, 1.442695
        %v1228 = vpow.pop %v1227
        %v1229 = vmul.f32 %v1205, 1.442695
        %v1230 = vpow.pop %v1229
        %v1231 = vmul.f32 %v1206, 1.442695
        %v1232 = vpow.pop %v1231
        %v1233 = vmul.f32 %v1207, 1.442695
        %v1234 = vpow.pop %v1233
        %v1235 = vmul.f32 %v1208, 1.442695
        %v1236 = vpow.pop %v1235
        %v1237 = vmul.f32 %v1209, 1.442695
        %v1238 = vpow.pop %v1237
        %v1239 = vmul.f32 %v1210, 1.442695
        %v1240 = vpow.pop %v1239
        %v1241 = vmul.f32 %v1211, 1.442695
        %v1242 = vpow.pop %v1241
        %v1243 = vmul.f32 %v1212, 1.442695
        %v1244 = vpow.pop %v1243
        %1245 = vadd.xlane.f32.xlu0 %v1214
        %v1246 = vpop.xlane.xlu0 %1245
        %1247 = vadd.xlane.f32.xlu0 %v1216
        %v1248 = vpop.xlane.xlu0 %1247
        %1249 = vadd.xlane.f32.xlu0 %v1218
        %v1250 = vpop.xlane.xlu0 %1249
        %1251 = vadd.xlane.f32.xlu0 %v1220
        %v1252 = vpop.xlane.xlu0 %1251
        %1253 = vadd.xlane.f32.xlu0 %v1222
        %v1254 = vpop.xlane.xlu0 %1253
        %1255 = vadd.xlane.f32.xlu0 %v1224
        %v1256 = vpop.xlane.xlu0 %1255
        %1257 = vadd.xlane.f32.xlu0 %v1226
        %v1258 = vpop.xlane.xlu0 %1257
        %1259 = vadd.xlane.f32.xlu0 %v1228
        %v1260 = vpop.xlane.xlu0 %1259
        %1261 = vadd.xlane.f32.xlu0 %v1230
        %v1262 = vpop.xlane.xlu0 %1261
        %1263 = vadd.xlane.f32.xlu0 %v1232
        %v1264 = vpop.xlane.xlu0 %1263
        %1265 = vadd.xlane.f32.xlu0 %v1234
        %v1266 = vpop.xlane.xlu0 %1265
        %1267 = vadd.xlane.f32.xlu0 %v1236
        %v1268 = vpop.xlane.xlu0 %1267
        %1269 = vadd.xlane.f32.xlu0 %v1238
        %v1270 = vpop.xlane.xlu0 %1269
        %1271 = vadd.xlane.f32.xlu0 %v1240
        %v1272 = vpop.xlane.xlu0 %1271
        %1273 = vadd.xlane.f32.xlu0 %v1242
        %v1274 = vpop.xlane.xlu0 %1273
        %1275 = vadd.xlane.f32.xlu0 %v1244
        %v1276 = vpop.xlane.xlu0 %1275
        %v1277 = vrcp.pop %v1246
        %v1278 = vrcp.pop %v1248
        %v1279 = vrcp.pop %v1250
        %v1280 = vrcp.pop %v1252
        %v1281 = vrcp.pop %v1254
        %v1282 = vrcp.pop %v1256
        %v1283 = vrcp.pop %v1258
        %v1284 = vrcp.pop %v1260
        %v1285 = vrcp.pop %v1262
        %v1286 = vrcp.pop %v1264
        %v1287 = vrcp.pop %v1266
        %v1288 = vrcp.pop %v1268
        %v1289 = vrcp.pop %v1270
        %v1290 = vrcp.pop %v1272
        %v1291 = vrcp.pop %v1274
        %v1292 = vrcp.pop %v1276
        %v1293 = vmul.f32 %v1214, %v1277
        %v1294 = vmul.f32 %v1216, %v1278
        %v1295 = vmul.f32 %v1218, %v1279
        %v1296 = vmul.f32 %v1220, %v1280
        %v1297 = vmul.f32 %v1222, %v1281
        %v1298 = vmul.f32 %v1224, %v1282
        %v1299 = vmul.f32 %v1226, %v1283
        %v1300 = vmul.f32 %v1228, %v1284
        %v1301 = vmul.f32 %v1230, %v1285
        %v1302 = vmul.f32 %v1232, %v1286
        %v1303 = vmul.f32 %v1234, %v1287
        %v1304 = vmul.f32 %v1236, %v1288
        %v1305 = vmul.f32 %v1238, %v1289
        %v1306 = vmul.f32 %v1240, %v1290
        %v1307 = vmul.f32 %v1242, %v1291
        %v1308 = vmul.f32 %v1244, %v1292
        %v1309 = vpack.c.bf16 %v1294, %v1293
        %v1310 = vpack.c.bf16 %v1296, %v1295
        %v1311 = vpack.c.bf16 %v1298, %v1297
        %v1312 = vpack.c.bf16 %v1300, %v1299
        %v1313 = vpack.c.bf16 %v1302, %v1301
        %v1314 = vpack.c.bf16 %v1304, %v1303
        %v1315 = vpack.c.bf16 %v1306, %v1305
        %v1316 = vpack.c.bf16 %v1308, %v1307
        %1317 = vmatpush.bf16.msra.mxu0 %v1316
        %1318 = vmatpush.bf16.msra.mxu0 %v1315
        %1319 = vmatpush.bf16.msra.mxu0 %v1314
        %1320 = vmatpush.bf16.msra.mxu0 %v1313
        %1321 = vmatpush.bf16.msra.mxu0 %v1312
        %1322 = vmatpush.bf16.msra.mxu0 %v1311
        %1323 = vmatpush.bf16.msra.mxu0 %v1310
        %1324 = vmatpush.bf16.msra.mxu0 %v1309
        %1325 = vmatmul.bf16.gmra.mxu0 %v374
        %v1326 = vpop.f32.mrf.mxu0
        %v1327 = vadd.f32 0.0, %v1326
        %v1328 = vpop.f32.mrf.mxu0
        %v1329 = vadd.f32 0.0, %v1328
        %1330 = vmatmul.bf16.gmra.mxu0 %v375
        %v1331 = vpop.f32.mrf.mxu0
        %v1332 = vadd.f32 0.0, %v1331
        %v1333 = vpop.f32.mrf.mxu0
        %v1334 = vadd.f32 0.0, %v1333
        %1335 = vdwg.mxu0
        %s1336 = sld [smem:[#allocation2]]
        %v1337 = vstv %s1336
        %v1338 = vmul.f32 %v1337, %v1327
        %v1339 = vmul.f32 %v1337, %v1329
        %v1340 = vmul.f32 %v1337, %v1332
        %v1341 = vmul.f32 %v1337, %v1334
        %1342 = vxpose.xlu0.b32.start [1/16] %v198, 128
        %1343 = vxpose.xlu0.b32.cont [2/16] %v199, 128
        %1344 = vxpose.xlu0.b32.cont [3/16] %v200, 128
        %1345 = vxpose.xlu0.b32.cont [4/16] %v201, 128
        %1346 = vxpose.xlu0.b32.cont [5/16] %v202, 128
        %1347 = vxpose.xlu0.b32.cont [6/16] %v203, 128
        %1348 = vxpose.xlu0.b32.cont [7/16] %v204, 128
        %1349 = vxpose.xlu0.b32.cont [8/16] %v205, 128
        %1350 = vxpose.xlu0.b32.cont [9/16] %v206, 128
        %1351 = vxpose.xlu0.b32.cont [10/16] %v207, 128
        %1352 = vxpose.xlu0.b32.cont [11/16] %v208, 128
        %1353 = vxpose.xlu0.b32.cont [12/16] %v209, 128
        %1354 = vxpose.xlu0.b32.cont [13/16] %v210, 128
        %1355 = vxpose.xlu0.b32.cont [14/16] %v211, 128
        %1356 = vxpose.xlu0.b32.cont [15/16] %v212, 128
        %1357 = vxpose.xlu0.b32.end [16/16] %v213, 128
        %v1358 = vpop.trf.xlu0
        %v1359 = vpop.trf.xlu0
        %v1360 = vpop.trf.xlu0
        %v1361 = vpop.trf.xlu0
        %v1362 = vpop.trf.xlu0
        %v1363 = vpop.trf.xlu0
        %v1364 = vpop.trf.xlu0
        %v1365 = vpop.trf.xlu0
        %v1366 = vpop.trf.xlu0
        %v1367 = vpop.trf.xlu0
        %v1368 = vpop.trf.xlu0
        %v1369 = vpop.trf.xlu0
        %v1370 = vpop.trf.xlu0
        %v1371 = vpop.trf.xlu0
        %v1372 = vpop.trf.xlu0
        %v1373 = vpop.trf.xlu0
        %v1374 = vadd.f32 %v1338, %v1358
        %v1375 = vadd.f32 %v1339, %v1359
        %v1376 = vadd.f32 %v1340, %v1360
        %v1377 = vadd.f32 %v1341, %v1361
        %1378 = vst [vmem:[%s191] sm:$0xff] %v1374
        %1379 = vst [vmem:[%s191 + $0x8] sm:$0xff] %v1375
        %1380 = vst [vmem:[%s191 + $0x10] sm:$0xff] %v1376
        %1381 = vst [vmem:[%s191 + $0x18] sm:$0xff] %v1377
        %s1382 = sand.u32 %s116, 1
        %s1383 = scalar_lea.sflag [#allocation4], %s1382
        %s1384 = sand.u32 %s116, 1
        %s1385 = smul.addr %s1384, 32
        %s1386 = scalar_lea.vmem [#allocation3], %s1385
        // Predicated region
        $region37: #{tpu_custom_call.1} parent=35 // pred_check
          %p1387 = pneg %p126
        $region38: #{tpu_custom_call.1} parent=35 // pred_check_branch
          %1389 = sbr.rel (%p1387) target = $region40
        $region39: #{tpu_custom_call.1} parent=35 // pred_region
          %1391 = vsyncadd %s1383, 0
          %s1392 = smul.addr %s19, 4
          %s1393 = smul.addr %s1392, 8
          %s1394 = scalar_lea.hbm %s4, %s1393
          %s1395 = sshll.u32 %s1386, 4
          %s1396 = int_to_ptr.vmem [resolvable:$true] %s1395
          %s1397 = sshll.u32 %s1394, 4
          %s1398 = int_to_ptr.hbm [resolvable:$true] %s1397
          %1403 = dma.vmem_to_hbm [thread:$0]  %s1396, 512, %s1398, %s1383, 128, 128, 8
        $region40: #{tpu_custom_call.1} parent=35 // pred_fallthru
          _
      $region36: #{tpu_custom_call.1} parent=5 // pred_fallthru
        _
      %p1404 = scmp.le.s32.totalorder 2, %s14
      // Predicated region
      $region41: #{tpu_custom_call.1} parent=5 // pred_check
        %p1405 = pneg %p1404
      $region42: #{tpu_custom_call.1} parent=5 // pred_check_branch
        %1407 = sbr.rel (%p1405) target = $region44
      $region43: #{tpu_custom_call.1} parent=5 // pred_region
        %s1408 = ssub.s32 %s14, 2
        // Predicated region
        $region45: #{tpu_custom_call.1} parent=43 // pred_check
          %p1409 = pneg %p132
        $region46: #{tpu_custom_call.1} parent=43 // pred_check_branch
          %1411 = sbr.rel (%p1409) target = $region48
        $region47: #{tpu_custom_call.1} parent=43 // pred_region
          %s1412 = sand.u32 %s117, 1
          %s1413 = scalar_lea.sflag [#allocation4], %s1412
          %s1414 = sand.u32 %s117, 1
          %s1415 = smul.addr %s1414, 32
          %s1416 = scalar_lea.vmem [#allocation3], %s1415
          %1418 = dma.done %s1413, 512
        $region48: #{tpu_custom_call.1} parent=43 // pred_fallthru
          _
      $region44: #{tpu_custom_call.1} parent=5 // pred_fallthru
        _
    $region6: #{tpu_custom_call.1} parent=1 // loop_footer
      %s18 = sadd.s32 1, %s14
    $region7: #{tpu_custom_call.1} parent=1 // loop_footer_branch
      %13 = sbr.rel target = $region3
    $region8: #{tpu_custom_call.1} parent=1 // loop_exit
      _
    %1419 = vsyncpa [#allocation4], 1
    %s1420 = scalar_lea.sflag [#allocation4], 1
    %1421 = vsyncpa %s1420, 1

// kernel: tpu_custom_call.1
$region0: #{tpu_custom_call.1}
  #allocation0 [shape = 'u32[]', space=smem, size = 0x4, offset = 0x4, fixed_abs, tag = 'smem constant byte address 0x4 - core index']
  #allocation1 [shape = 'u32[72,128]{1,0:T(1,128)}', space=vmem, size = 0x9000, scoped, tag = 'internal scratch']
  #allocation2 [shape = 'f32[1,1]{1,0:T(1,128)S(6)}', space=smem, size = 0x200, scoped, tag = 'scoped memory for tpu_custom_call.1']
  %s0 = inlined_call_operand.<no memory space> [shape: f32[1,1], index: 0, kind: input, shape index: {}]
  %s1 = inlined_call_operand.vmem [shape: f32[2,128,32], index: 1, kind: input, shape index: {}]
  %s2 = inlined_call_operand.vmem [shape: bf16[64,32], index: 2, kind: input, shape index: {}]
  %s3 = inlined_call_operand.vmem [shape: f32[64,1], index: 3, kind: input, shape index: {}]
  %s4 = inlined_call_operand.hbm [shape: f32[2,32,128], index: 4, kind: output, shape index: {}]
  %s5 = sld [smem:[#allocation0]]
  $region49: #{tpu_custom_call.1} parent=0
    _
  %s7 = ssub.s32 1, %s5
  %s8 = scalar_select 0, %s7, %s5
  %9 = sst [smem:[#allocation2]] %s0
  $region1: #{tpu_custom_call.1} parent=0
    #allocation3 [shape = 'u8[32768]{0}', space=vmem, size = 0x8000, scoped, tag = 'output window, operand 0']
    #allocation4 [shape = 's32[2]{0}', space=sflag, size = 0x8, scoped, tag = 'scoped memory for tpu_custom_call.1']
    %10 = vsyncpa [#allocation4], 0
    %s11 = scalar_lea.sflag [#allocation4], 1
    %12 = vsyncpa %s11, 0
    loop: start=0, step=1, limit=4
    $region2: #{tpu_custom_call.1} parent=1 // loop_pre_header
      _
    $region3: #{tpu_custom_call.1} parent=1 // loop_header
      %s14 = sphi 0, %s18
      %p15 = scmp.ge.s32.totalorder %s14, 4
      %s22 = sphi 0, %s22
      %s24 = sphi 0, %s22
      %s25 = sphi 0, %s24
      %s39 = sphi 0, %s25
      %s45 = sphi 0, %s47
      %s48 = sphi 0, %s45
      %s49 = sphi 0, %s48
      %s65 = sphi 0, %s49
      %s69 = sphi 0, %s69
      %s71 = sphi 0, %s69
      %s72 = sphi 0, %s71
      %s86 = sphi 0, %s72
      %s90 = sphi 0, %s90
      %s92 = sphi 0, %s90
      %s93 = sphi 0, %s92
      %s107 = sphi 0, %s93
      %s113 = sphi 0, %s115
      %s116 = sphi 0, %s113
      %s117 = sphi 0, %s116
      %s133 = sphi 0, %s117
    $region4: #{tpu_custom_call.1} parent=1 // loop_header_branch
      %17 = sbr.rel (%p15) target = $region8
    $region5: #{tpu_custom_call.1} parent=1 // loop_body
      %s19 = ssub.s32 %s14, 1
      %s20 = ssub.s32 %s14, 2
      %s21 = sadd.s32 %s14, 1
      %s23 = sadd.s32 %s22, 1
      %p26 = scmp.eq.s32.totalorder %s14, 1
      %p27 = scmp.ne.s32.totalorder %s22, %s24
      %p28 = scmp.eq.s32.totalorder %s14, 0
      %p29 = por %p27, %p28
      %p30 = scmp.ne.s32.totalorder %s22, %s24
      %p31 = scmp.eq.s32.totalorder %s19, 1
      %p32 = por %p30, %p31
      %p33 = scmp.ne.s32.totalorder %s24, %s25
      %p34 = scmp.eq.s32.totalorder %s19, 0
      %p35 = por %p33, %p34
      %p36 = scmp.ne.s32.totalorder %s24, %s25
      %p37 = scmp.eq.s32.totalorder %s20, 1
      %p38 = por %p36, %p37
      %p40 = scmp.ne.s32.totalorder %s25, %s39
      %p41 = scmp.eq.s32.totalorder %s20, 0
      %p42 = por %p40, %p41
      %s43 = ssub.s32 %s14, %s21
      %p44 = scmp.eq.s32.totalorder %s43, 0
      %s46 = sadd.s32 %s45, 1
      %s47 = scalar_select %p44, %s45, %s46
      %p50 = pneg %p44
      %p51 = scmp.eq.s32.totalorder %s14, 1
      %p52 = por %p50, %p51
      %p53 = scmp.ne.s32.totalorder %s45, %s48
      %p54 = scmp.eq.s32.totalorder %s14, 0
      %p55 = por %p53, %p54
      %p56 = scmp.ne.s32.totalorder %s45, %s48
      %p57 = scmp.eq.s32.totalorder %s19, 1
      %p58 = por %p56, %p57
      %p59 = scmp.ne.s32.totalorder %s48, %s49
      %p60 = scmp.eq.s32.totalorder %s19, 0
      %p61 = por %p59, %p60
      %p62 = scmp.ne.s32.totalorder %s48, %s49
      %p63 = scmp.eq.s32.totalorder %s20, 1
      %p64 = por %p62, %p63
      %p66 = scmp.ne.s32.totalorder %s49, %s65
      %p67 = scmp.eq.s32.totalorder %s20, 0
      %p68 = por %p66, %p67
      %s70 = sadd.s32 %s69, 1
      %p73 = scmp.eq.s32.totalorder %s14, 1
      %p74 = scmp.ne.s32.totalorder %s69, %s71
      %p75 = scmp.eq.s32.totalorder %s14, 0
      %p76 = por %p74, %p75
      %p77 = scmp.ne.s32.totalorder %s69, %s71
      %p78 = scmp.eq.s32.totalorder %s19, 1
      %p79 = por %p77, %p78
      %p80 = scmp.ne.s32.totalorder %s71, %s72
      %p81 = scmp.eq.s32.totalorder %s19, 0
      %p82 = por %p80, %p81
      %p83 = scmp.ne.s32.totalorder %s71, %s72
      %p84 = scmp.eq.s32.totalorder %s20, 1
      %p85 = por %p83, %p84
      %p87 = scmp.ne.s32.totalorder %s72, %s86
      %p88 = scmp.eq.s32.totalorder %s20, 0
      %p89 = por %p87, %p88
      %s91 = sadd.s32 %s90, 1
      %p94 = scmp.eq.s32.totalorder %s14, 1
      %p95 = scmp.ne.s32.totalorder %s90, %s92
      %p96 = scmp.eq.s32.totalorder %s14, 0
      %p97 = por %p95, %p96
      %p98 = scmp.ne.s32.totalorder %s90, %s92
      %p99 = scmp.eq.s32.totalorder %s19, 1
      %p100 = por %p98, %p99
      %p101 = scmp.ne.s32.totalorder %s92, %s93
      %p102 = scmp.eq.s32.totalorder %s19, 0
      %p103 = por %p101, %p102
      %p104 = scmp.ne.s32.totalorder %s92, %s93
      %p105 = scmp.eq.s32.totalorder %s20, 1
      %p106 = por %p104, %p105
      %p108 = scmp.ne.s32.totalorder %s93, %s107
      %p109 = scmp.eq.s32.totalorder %s20, 0
      %p110 = por %p108, %p109
      %s111 = ssub.s32 %s14, %s21
      %p112 = scmp.eq.s32.totalorder %s111, 0
      %s114 = sadd.s32 %s113, 1
      %s115 = scalar_select %p112, %s113, %s114
      %p118 = pneg %p112
      %p119 = scmp.eq.s32.totalorder %s14, 1
      %p120 = por %p118, %p119
      %p121 = scmp.ne.s32.totalorder %s113, %s116
      %p122 = scmp.eq.s32.totalorder %s14, 0
      %p123 = por %p121, %p122
      %p124 = scmp.ne.s32.totalorder %s113, %s116
      %p125 = scmp.eq.s32.totalorder %s19, 1
      %p126 = por %p124, %p125
      %p127 = scmp.ne.s32.totalorder %s116, %s117
      %p128 = scmp.eq.s32.totalorder %s19, 0
      %p129 = por %p127, %p128
      %p130 = scmp.ne.s32.totalorder %s116, %s117
      %p131 = scmp.eq.s32.totalorder %s20, 1
      %p132 = por %p130, %p131
      %p134 = scmp.ne.s32.totalorder %s117, %s133
      %p135 = scmp.eq.s32.totalorder %s20, 0
      %p136 = por %p134, %p135
      %p137 = scmp.le.s32.totalorder 1, %s14
      %p138 = scmp.lt.s32.totalorder %s14, 3
      %p139 = pnand %p137, %p138
      %p140 = pneg %p139
      // Predicated region
      $region9: #{tpu_custom_call.1} parent=5 // pred_check
        _
      $region10: #{tpu_custom_call.1} parent=5 // pred_check_branch
        %142 = sbr.rel (%p139) target = $region12
      $region11: #{tpu_custom_call.1} parent=5 // pred_region
        %s143 = ssub.s32 %s14, 1
        // Predicated region
        $region13: #{tpu_custom_call.1} parent=11 // pred_check
          %p144 = pneg %p35
        $region14: #{tpu_custom_call.1} parent=11 // pred_check_branch
          %146 = sbr.rel (%p144) target = $region16
        $region15: #{tpu_custom_call.1} parent=11 // pred_region
          _
        $region16: #{tpu_custom_call.1} parent=11 // pred_fallthru
          _
        // Predicated region
        $region17: #{tpu_custom_call.1} parent=11 // pred_check
          %p147 = pneg %p82
        $region18: #{tpu_custom_call.1} parent=11 // pred_check_branch
          %149 = sbr.rel (%p147) target = $region20
        $region19: #{tpu_custom_call.1} parent=11 // pred_region
          _
        $region20: #{tpu_custom_call.1} parent=11 // pred_fallthru
          _
        // Predicated region
        $region21: #{tpu_custom_call.1} parent=11 // pred_check
          %p150 = pneg %p103
        $region22: #{tpu_custom_call.1} parent=11 // pred_check_branch
          %152 = sbr.rel (%p150) target = $region24
        $region23: #{tpu_custom_call.1} parent=11 // pred_region
          _
        $region24: #{tpu_custom_call.1} parent=11 // pred_fallthru
          _
      $region12: #{tpu_custom_call.1} parent=5 // pred_fallthru
        _
      %p153 = scmp.lt.s32.totalorder %s14, 2
      // Predicated region
      $region25: #{tpu_custom_call.1} parent=5 // pred_check
        %p154 = pneg %p153
      $region26: #{tpu_custom_call.1} parent=5 // pred_check_branch
        %156 = sbr.rel (%p154) target = $region28
      $region27: #{tpu_custom_call.1} parent=5 // pred_region
        // Predicated region
        $region29: #{tpu_custom_call.1} parent=27 // pred_check
          %p157 = pneg %p55
        $region30: #{tpu_custom_call.1} parent=27 // pred_check_branch
          %159 = sbr.rel (%p157) target = $region32
        $region31: #{tpu_custom_call.1} parent=27 // pred_region
          %p160 = scmp.lt.s32.totalorder %s14, 1
          %s161 = scalar_select %p160, %s14, 1
          %s162 = smul.addr %s161, 16
          %s163 = smul.addr %s162, 8
          %s164 = scalar_lea.vmem %s1, %s163
        $region32: #{tpu_custom_call.1} parent=27 // pred_fallthru
          _
      $region28: #{tpu_custom_call.1} parent=5 // pred_fallthru
        _
      %p165 = scmp.le.s32.totalorder 1, %s14
      %p166 = scmp.lt.s32.totalorder %s14, 3
      %p167 = pnand %p165, %p166
      %p168 = pneg %p167
      // Predicated region
      $region33: #{tpu_custom_call.1} parent=5 // pred_check
        _
      $region34: #{tpu_custom_call.1} parent=5 // pred_check_branch
        %170 = sbr.rel (%p167) target = $region36
      $region35: #{tpu_custom_call.1} parent=5 // pred_region
        %s171 = ssub.s32 %s14, 1
        %p172 = pneg %p35
        %p173 = pneg %p32
        %p174 = scmp.lt.s32.totalorder %s19, 1
        %s175 = scalar_select %p174, %s19, 1
        %s176 = smul.addr %s175, 16
        %s177 = smul.addr %s176, 8
        %s178 = scalar_lea.vmem %s1, %s177
        %p179 = pneg %p61
        %p180 = pneg %p58
        %p181 = pneg %p82
        %p182 = pneg %p79
        %p183 = pneg %p103
        %p184 = pneg %p100
        %p185 = pneg %p129
        %p186 = pneg %p126
        %s187 = sand.u32 %s116, 1
        %s188 = scalar_lea.sflag [#allocation4], %s187
        %s189 = sand.u32 %s116, 1
        %s190 = smul.addr %s189, 32
        %s191 = scalar_lea.vmem [#allocation3], %s190
        %p192 = scmp.lt.s32.totalorder %s19, 1
        %s193 = scalar_select %p192, %s19, 1
        %s194 = smul.addr %s193, 16
        %s195 = smul.addr %s194, 8
        %s196 = scalar_lea.vmem %s1, %s195
        %v198 = vld [vmem:[%s196] sm:$0xff]
        %v199 = vld [vmem:[%s196 + $0x8] sm:$0xff]
        %v200 = vld [vmem:[%s196 + $0x10] sm:$0xff]
        %v201 = vld [vmem:[%s196 + $0x18] sm:$0xff]
        %v202 = vld [vmem:[%s196 + $0x20] sm:$0xff]
        %v203 = vld [vmem:[%s196 + $0x28] sm:$0xff]
        %v204 = vld [vmem:[%s196 + $0x30] sm:$0xff]
        %v205 = vld [vmem:[%s196 + $0x38] sm:$0xff]
        %v206 = vld [vmem:[%s196 + $0x40] sm:$0xff]
        %v207 = vld [vmem:[%s196 + $0x48] sm:$0xff]
        %v208 = vld [vmem:[%s196 + $0x50] sm:$0xff]
        %v209 = vld [vmem:[%s196 + $0x58] sm:$0xff]
        %v210 = vld [vmem:[%s196 + $0x60] sm:$0xff]
        %v211 = vld [vmem:[%s196 + $0x68] sm:$0xff]
        %v212 = vld [vmem:[%s196 + $0x70] sm:$0xff]
        %v213 = vld [vmem:[%s196 + $0x78] sm:$0xff]
        %v214 = vpack.c.bf16 %v199, %v198
        %v215 = vpack.c.bf16 %v201, %v200
        %v216 = vpack.c.bf16 %v203, %v202
        %v217 = vpack.c.bf16 %v205, %v204
        %v218 = vpack.c.bf16 %v207, %v206
        %v219 = vpack.c.bf16 %v209, %v208
        %v220 = vpack.c.bf16 %v211, %v210
        %v221 = vpack.c.bf16 %v213, %v212
        %v222 = vld [vmem:[%s2] sm:$0xf]
        %v223 = vld [vmem:[%s2 + $0x4] sm:$0xf]
        %v224 = vld [vmem:[%s2 + $0x8] sm:$0xf]
        %v225 = vld [vmem:[%s2 + $0xc] sm:$0xf]
        %v226 = vld [vmem:[%s2 + $0x10] sm:$0xf]
        %v227 = vld [vmem:[%s2 + $0x14] sm:$0xf]
        %v228 = vld [vmem:[%s2 + $0x18] sm:$0xf]
        %v229 = vld [vmem:[%s2 + $0x1c] sm:$0xf]
        %v230 = vld [vmem:[%s3] sm:$0xff]
        %v231 = vld [vmem:[%s3 + $0x8] sm:$0xff]
        %v232 = vld [vmem:[%s3 + $0x10] sm:$0xff]
        %v233 = vld [vmem:[%s3 + $0x18] sm:$0xff]
        %v234 = vld [vmem:[%s3 + $0x20] sm:$0xff]
        %v235 = vld [vmem:[%s3 + $0x28] sm:$0xff]
        %v236 = vld [vmem:[%s3 + $0x30] sm:$0xff]
        %v237 = vld [vmem:[%s3 + $0x38] sm:$0xff]
        %239 = vset.pattern.permute.xlu0 0
        %240 = vperm.xlu0 %239, %v230
        %v241 = vpop.permute.xlu0 %240
        %244 = vset.pattern.permute.xlu0 0
        %245 = vperm.xlu0 %244, %v231
        %v246 = vpop.permute.xlu0 %245
        %249 = vset.pattern.permute.xlu0 0
        %250 = vperm.xlu0 %249, %v232
        %v251 = vpop.permute.xlu0 %250
        %254 = vset.pattern.permute.xlu0 0
        %255 = vperm.xlu0 %254, %v233
        %v256 = vpop.permute.xlu0 %255
        %259 = vset.pattern.permute.xlu0 0
        %260 = vperm.xlu0 %259, %v234
        %v261 = vpop.permute.xlu0 %260
        %264 = vset.pattern.permute.xlu0 0
        %265 = vperm.xlu0 %264, %v235
        %v266 = vpop.permute.xlu0 %265
        %269 = vset.pattern.permute.xlu0 0
        %270 = vperm.xlu0 %269, %v236
        %v271 = vpop.permute.xlu0 %270
        %274 = vset.pattern.permute.xlu0 0
        %275 = vperm.xlu0 %274, %v237
        %v276 = vpop.permute.xlu0 %275
        %v286 = vunpack.c.l.b16 %v222
        %v287 = vunpack.c.l.b16 %v223
        %v288 = vunpack.c.l.b16 %v224
        %v289 = vunpack.c.l.b16 %v225
        %v290 = vunpack.c.l.b16 %v226
        %v291 = vunpack.c.l.b16 %v227
        %v292 = vunpack.c.l.b16 %v228
        %v293 = vunpack.c.l.b16 %v229
        %v294 = vpack.c.b16 %v287, %v286
        %v295 = vpack.c.b16 %v289, %v288
        %v296 = vpack.c.b16 %v291, %v290
        %v297 = vpack.c.b16 %v293, %v292
        %vm298 = vcmask 261120
        %v300 = vsel %vm298, %v294, 0
        %v303 = vsel %vm298, %v295, 0
        %v306 = vsel %vm298, %v296, 0
        %v309 = vsel %vm298, %v297, 0
        %v312 = vsel %vm298, %v214, 0
        %v315 = vsel %vm298, %v215, 0
        %v318 = vsel %vm298, %v216, 0
        %v321 = vsel %vm298, %v217, 0
        %v324 = vsel %vm298, %v218, 0
        %v327 = vsel %vm298, %v219, 0
        %v330 = vsel %vm298, %v220, 0
        %v333 = vsel %vm298, %v221, 0
        %335 = vmatpush.bf16.xpose.msra.mxu0 %v333
        %336 = vmatpush.bf16.xpose.msra.mxu0 %v330
        %337 = vmatpush.bf16.xpose.msra.mxu0 %v327
        %338 = vmatpush.bf16.xpose.msra.mxu0 %v324
        %339 = vmatpush.bf16.xpose.msra.mxu0 %v321
        %340 = vmatpush.bf16.xpose.msra.mxu0 %v318
        %341 = vmatpush.bf16.xpose.msra.mxu0 %v315
        %342 = vmatpush.bf16.xpose.msra.mxu0 %v312
        %343 = vmatmul.bf16.gmra.mxu0 %v300
        %v344 = vpop.f32.mrf.mxu0
        %v345 = vadd.f32 %v241, %v344
        %v346 = vpop.f32.mrf.mxu0
        %v347 = vadd.f32 %v246, %v346
        %348 = vmatmul.bf16.gmra.mxu0 %v303
        %v349 = vpop.f32.mrf.mxu0
        %v350 = vadd.f32 %v251, %v349
        %v351 = vpop.f32.mrf.mxu0
        %v352 = vadd.f32 %v256, %v351
        %353 = vmatmul.bf16.gmra.mxu0 %v306
        %v354 = vpop.f32.mrf.mxu0
        %v355 = vadd.f32 %v261, %v354
        %v356 = vpop.f32.mrf.mxu0
        %v357 = vadd.f32 %v266, %v356
        %358 = vmatmul.bf16.gmra.mxu0 %v309
        %v359 = vpop.f32.mrf.mxu0
        %v360 = vadd.f32 %v271, %v359
        %v361 = vpop.f32.mrf.mxu0
        %v362 = vadd.f32 %v276, %v361
        %363 = vdwg.mxu0
        %v364 = vmax.f32 %v345, 0.0
        %v365 = vmax.f32 %v347, 0.0
        %v366 = vmax.f32 %v350, 0.0
        %v367 = vmax.f32 %v352, 0.0
        %v368 = vmax.f32 %v355, 0.0
        %v369 = vmax.f32 %v357, 0.0
        %v370 = vmax.f32 %v360, 0.0
        %v371 = vmax.f32 %v362, 0.0
        %v372 = vpack.c.bf16 %v365, %v364
        %v373 = vpack.c.bf16 %v367, %v366
        %v374 = vpack.c.bf16 %v369, %v368
        %v375 = vpack.c.bf16 %v371, %v370
        %376 = vxpose.xlu0.c.b16.start [1/8] %v373, 128
        %377 = vxpose.xlu0.c.b16.cont [2/8] 0, 128
        %378 = vxpose.xlu0.c.b16.cont [3/8] 0, 128
        %379 = vxpose.xlu0.c.b16.cont [4/8] 0, 128
        %380 = vxpose.xlu0.c.b16.cont [5/8] 0, 128
        %381 = vxpose.xlu0.c.b16.cont [6/8] 0, 128
        %382 = vxpose.xlu0.c.b16.cont [7/8] 0, 128
        %383 = vxpose.xlu0.c.b16.end [8/8] 0, 128
        %v384 = vpop.trf.xlu0
        %v385 = vpop.trf.xlu0
        %v386 = vpop.trf.xlu0
        %v387 = vpop.trf.xlu0
        %v388 = vpop.trf.xlu0
        %v389 = vpop.trf.xlu0
        %v390 = vpop.trf.xlu0
        %v391 = vpop.trf.xlu0
        %vm392 = vcmask 130048
        %v394 = vsel %vm392, %v384, 0
        %v397 = vsel %vm392, %v385, 0
        %v400 = vsel %vm392, %v386, 0
        %v403 = vsel %vm392, %v387, 0
        %v406 = vsel %vm392, %v388, 0
        %v409 = vsel %vm392, %v389, 0
        %v412 = vsel %vm392, %v390, 0
        %v415 = vsel %vm392, %v391, 0
        %417 = vmatpush.bf16.msra.mxu0 0
        %418 = vmatpush.bf16.msra.mxu0 0
        %419 = vmatpush.bf16.msra.mxu0 0
        %420 = vmatpush.bf16.msra.mxu0 0
        %421 = vmatpush.bf16.msra.mxu0 0
        %422 = vmatpush.bf16.msra.mxu0 0
        %423 = vmatpush.bf16.msra.mxu0 0
        %424 = vmatpush.bf16.msra.mxu0 %v372
        %425 = vmatmul.bf16.gmra.mxu0 %v394
        %v426 = vpop.f32.mrf.mxu0
        %v427 = vadd.f32 0.0, %v426
        %v428 = vpop.f32.mrf.mxu0
        %v429 = vadd.f32 0.0, %v428
        %430 = vmatmul.bf16.gmra.mxu0 %v397
        %v431 = vpop.f32.mrf.mxu0
        %v432 = vadd.f32 0.0, %v431
        %v433 = vpop.f32.mrf.mxu0
        %v434 = vadd.f32 0.0, %v433
        %435 = vmatmul.bf16.gmra.mxu0 %v400
        %v436 = vpop.f32.mrf.mxu0
        %v437 = vadd.f32 0.0, %v436
        %v438 = vpop.f32.mrf.mxu0
        %v439 = vadd.f32 0.0, %v438
        %440 = vmatmul.bf16.gmra.mxu0 %v403
        %v441 = vpop.f32.mrf.mxu0
        %v442 = vadd.f32 0.0, %v441
        %v443 = vpop.f32.mrf.mxu0
        %v444 = vadd.f32 0.0, %v443
        %445 = vmatmul.bf16.gmra.mxu0 %v406
        %v446 = vpop.f32.mrf.mxu0
        %v447 = vadd.f32 0.0, %v446
        %v448 = vpop.f32.mrf.mxu0
        %v449 = vadd.f32 0.0, %v448
        %450 = vmatmul.bf16.gmra.mxu0 %v409
        %v451 = vpop.f32.mrf.mxu0
        %v452 = vadd.f32 0.0, %v451
        %v453 = vpop.f32.mrf.mxu0
        %v454 = vadd.f32 0.0, %v453
        %455 = vmatmul.bf16.gmra.mxu0 %v412
        %v456 = vpop.f32.mrf.mxu0
        %v457 = vadd.f32 0.0, %v456
        %v458 = vpop.f32.mrf.mxu0
        %v459 = vadd.f32 0.0, %v458
        %460 = vmatmul.bf16.gmra.mxu0 %v415
        %v461 = vpop.f32.mrf.mxu0
        %v462 = vadd.f32 0.0, %v461
        %v463 = vpop.f32.mrf.mxu0
        %v464 = vadd.f32 0.0, %v463
        %465 = vdwg.mxu0
        %v466 = vlaneseq
        %v467 = vshrl.u32 %v466, 7
        %v468 = vadd.s32 %v467, 8
        %v469 = vadd.s32 %v467, 16
        %v470 = vadd.s32 %v467, 24
        %v471 = vadd.s32 %v467, 32
        %v472 = vadd.s32 %v467, 40
        %v473 = vadd.s32 %v467, 48
        %v474 = vadd.s32 %v467, 56
        %v475 = vadd.s32 %v467, 64
        %v476 = vadd.s32 %v467, 72
        %v477 = vadd.s32 %v467, 80
        %v478 = vadd.s32 %v467, 88
        %v479 = vadd.s32 %v467, 96
        %v480 = vadd.s32 %v467, 104
        %v481 = vadd.s32 %v467, 112
        %v482 = vadd.s32 %v467, 120
        %v483 = vlaneseq
        %v484 = vand.u32 %v483, 127
        %vm485 = vcmp.ge.s32.totalorder %v467, 0
        %vm486 = vcmp.ge.s32.totalorder %v468, 0
        %vm487 = vcmp.ge.s32.totalorder %v469, 0
        %vm488 = vcmp.ge.s32.totalorder %v470, 0
        %vm489 = vcmp.ge.s32.totalorder %v471, 0
        %vm490 = vcmp.ge.s32.totalorder %v472, 0
        %vm491 = vcmp.ge.s32.totalorder %v473, 0
        %vm492 = vcmp.ge.s32.totalorder %v474, 0
        %vm493 = vcmp.ge.s32.totalorder %v475, 0
        %vm494 = vcmp.ge.s32.totalorder %v476, 0
        %vm495 = vcmp.ge.s32.totalorder %v477, 0
        %vm496 = vcmp.ge.s32.totalorder %v478, 0
        %vm497 = vcmp.ge.s32.totalorder %v479, 0
        %vm498 = vcmp.ge.s32.totalorder %v480, 0
        %vm499 = vcmp.ge.s32.totalorder %v481, 0
        %vm500 = vcmp.ge.s32.totalorder %v482, 0
        %vm501 = vcmp.lt.s32.totalorder %v467, 16
        %vm502 = vcmp.lt.s32.totalorder %v468, 16
        %vm503 = vcmp.lt.s32.totalorder %v469, 16
        %vm504 = vcmp.lt.s32.totalorder %v470, 16
        %vm505 = vcmp.lt.s32.totalorder %v471, 16
        %vm506 = vcmp.lt.s32.totalorder %v472, 16
        %vm507 = vcmp.lt.s32.totalorder %v473, 16
        %vm508 = vcmp.lt.s32.totalorder %v474, 16
        %vm509 = vcmp.lt.s32.totalorder %v475, 16
        %vm510 = vcmp.lt.s32.totalorder %v476, 16
        %vm511 = vcmp.lt.s32.totalorder %v477, 16
        %vm512 = vcmp.lt.s32.totalorder %v478, 16
        %vm513 = vcmp.lt.s32.totalorder %v479, 16
        %vm514 = vcmp.lt.s32.totalorder %v480, 16
        %vm515 = vcmp.lt.s32.totalorder %v481, 16
        %vm516 = vcmp.lt.s32.totalorder %v482, 16
        %vm517 = vmand %vm485, %vm501
        %vm518 = vmand %vm486, %vm502
        %vm519 = vmand %vm487, %vm503
        %vm520 = vmand %vm488, %vm504
        %vm521 = vmand %vm489, %vm505
        %vm522 = vmand %vm490, %vm506
        %vm523 = vmand %vm491, %vm507
        %vm524 = vmand %vm492, %vm508
        %vm525 = vmand %vm493, %vm509
        %vm526 = vmand %vm494, %vm510
        %vm527 = vmand %vm495, %vm511
        %vm528 = vmand %vm496, %vm512
        %vm529 = vmand %vm497, %vm513
        %vm530 = vmand %vm498, %vm514
        %vm531 = vmand %vm499, %vm515
        %vm532 = vmand %vm500, %vm516
        %vm533 = vcmp.ge.s32.totalorder %v484, 0
        %vm534 = vcmp.lt.s32.totalorder %v484, 16
        %vm535 = vmand %vm533, %vm534
        %vm536 = vmand %vm517, %vm535
        %vm537 = vmand %vm518, %vm535
        %vm538 = vmand %vm519, %vm535
        %vm539 = vmand %vm520, %vm535
        %vm540 = vmand %vm521, %vm535
        %vm541 = vmand %vm522, %vm535
        %vm542 = vmand %vm523, %vm535
        %vm543 = vmand %vm524, %vm535
        %vm544 = vmand %vm525, %vm535
        %vm545 = vmand %vm526, %vm535
        %vm546 = vmand %vm527, %vm535
        %vm547 = vmand %vm528, %vm535
        %vm548 = vmand %vm529, %vm535
        %vm549 = vmand %vm530, %vm535
        %vm550 = vmand %vm531, %vm535
        %vm551 = vmand %vm532, %vm535
        %vm552 = vcmp.ge.s32.totalorder %v467, 16
        %vm553 = vcmp.ge.s32.totalorder %v468, 16
        %vm554 = vcmp.ge.s32.totalorder %v469, 16
        %vm555 = vcmp.ge.s32.totalorder %v470, 16
        %vm556 = vcmp.ge.s32.totalorder %v471, 16
        %vm557 = vcmp.ge.s32.totalorder %v472, 16
        %vm558 = vcmp.ge.s32.totalorder %v473, 16
        %vm559 = vcmp.ge.s32.totalorder %v474, 16
        %vm560 = vcmp.ge.s32.totalorder %v475, 16
        %vm561 = vcmp.ge.s32.totalorder %v476, 16
        %vm562 = vcmp.ge.s32.totalorder %v477, 16
        %vm563 = vcmp.ge.s32.totalorder %v478, 16
        %vm564 = vcmp.ge.s32.totalorder %v479, 16
        %vm565 = vcmp.ge.s32.totalorder %v480, 16
        %vm566 = vcmp.ge.s32.totalorder %v481, 16
        %vm567 = vcmp.ge.s32.totalorder %v482, 16
        %vm568 = vcmp.lt.s32.totalorder %v467, 32
        %vm569 = vcmp.lt.s32.totalorder %v468, 32
        %vm570 = vcmp.lt.s32.totalorder %v469, 32
        %vm571 = vcmp.lt.s32.totalorder %v470, 32
        %vm572 = vcmp.lt.s32.totalorder %v471, 32
        %vm573 = vcmp.lt.s32.totalorder %v472, 32
        %vm574 = vcmp.lt.s32.totalorder %v473, 32
        %vm575 = vcmp.lt.s32.totalorder %v474, 32
        %vm576 = vcmp.lt.s32.totalorder %v475, 32
        %vm577 = vcmp.lt.s32.totalorder %v476, 32
        %vm578 = vcmp.lt.s32.totalorder %v477, 32
        %vm579 = vcmp.lt.s32.totalorder %v478, 32
        %vm580 = vcmp.lt.s32.totalorder %v479, 32
        %vm581 = vcmp.lt.s32.totalorder %v480, 32
        %vm582 = vcmp.lt.s32.totalorder %v481, 32
        %vm583 = vcmp.lt.s32.totalorder %v482, 32
        %vm584 = vmand %vm552, %vm568
        %vm585 = vmand %vm553, %vm569
        %vm586 = vmand %vm554, %vm570
        %vm587 = vmand %vm555, %vm571
        %vm588 = vmand %vm556, %vm572
        %vm589 = vmand %vm557, %vm573
        %vm590 = vmand %vm558, %vm574
        %vm591 = vmand %vm559, %vm575
        %vm592 = vmand %vm560, %vm576
        %vm593 = vmand %vm561, %vm577
        %vm594 = vmand %vm562, %vm578
        %vm595 = vmand %vm563, %vm579
        %vm596 = vmand %vm564, %vm580
        %vm597 = vmand %vm565, %vm581
        %vm598 = vmand %vm566, %vm582
        %vm599 = vmand %vm567, %vm583
        %vm600 = vcmp.ge.s32.totalorder %v484, 16
        %vm601 = vcmp.lt.s32.totalorder %v484, 32
        %vm602 = vmand %vm600, %vm601
        %vm603 = vmand %vm584, %vm602
        %vm604 = vmand %vm585, %vm602
        %vm605 = vmand %vm586, %vm602
        %vm606 = vmand %vm587, %vm602
        %vm607 = vmand %vm588, %vm602
        %vm608 = vmand %vm589, %vm602
        %vm609 = vmand %vm590, %vm602
        %vm610 = vmand %vm591, %vm602
        %vm611 = vmand %vm592, %vm602
        %vm612 = vmand %vm593, %vm602
        %vm613 = vmand %vm594, %vm602
        %vm614 = vmand %vm595, %vm602
        %vm615 = vmand %vm596, %vm602
        %vm616 = vmand %vm597, %vm602
        %vm617 = vmand %vm598, %vm602
        %vm618 = vmand %vm599, %vm602
        %vm619 = vmor %vm536, %vm603
        %vm620 = vmor %vm537, %vm604
        %vm621 = vmor %vm538, %vm605
        %vm622 = vmor %vm539, %vm606
        %vm623 = vmor %vm540, %vm607
        %vm624 = vmor %vm541, %vm608
        %vm625 = vmor %vm542, %vm609
        %vm626 = vmor %vm543, %vm610
        %vm627 = vmor %vm544, %vm611
        %vm628 = vmor %vm545, %vm612
        %vm629 = vmor %vm546, %vm613
        %vm630 = vmor %vm547, %vm614
        %vm631 = vmor %vm548, %vm615
        %vm632 = vmor %vm549, %vm616
        %vm633 = vmor %vm550, %vm617
        %vm634 = vmor %vm551, %vm618
        %vm635 = vcmp.ge.s32.totalorder %v467, 32
        %vm636 = vcmp.ge.s32.totalorder %v468, 32
        %vm637 = vcmp.ge.s32.totalorder %v469, 32
        %vm638 = vcmp.ge.s32.totalorder %v470, 32
        %vm639 = vcmp.ge.s32.totalorder %v471, 32
        %vm640 = vcmp.ge.s32.totalorder %v472, 32
        %vm641 = vcmp.ge.s32.totalorder %v473, 32
        %vm642 = vcmp.ge.s32.totalorder %v474, 32
        %vm643 = vcmp.ge.s32.totalorder %v475, 32
        %vm644 = vcmp.ge.s32.totalorder %v476, 32
        %vm645 = vcmp.ge.s32.totalorder %v477, 32
        %vm646 = vcmp.ge.s32.totalorder %v478, 32
        %vm647 = vcmp.ge.s32.totalorder %v479, 32
        %vm648 = vcmp.ge.s32.totalorder %v480, 32
        %vm649 = vcmp.ge.s32.totalorder %v481, 32
        %vm650 = vcmp.ge.s32.totalorder %v482, 32
        %vm651 = vcmp.lt.s32.totalorder %v467, 48
        %vm652 = vcmp.lt.s32.totalorder %v468, 48
        %vm653 = vcmp.lt.s32.totalorder %v469, 48
        %vm654 = vcmp.lt.s32.totalorder %v470, 48
        %vm655 = vcmp.lt.s32.totalorder %v471, 48
        %vm656 = vcmp.lt.s32.totalorder %v472, 48
        %vm657 = vcmp.lt.s32.totalorder %v473, 48
        %vm658 = vcmp.lt.s32.totalorder %v474, 48
        %vm659 = vcmp.lt.s32.totalorder %v475, 48
        %vm660 = vcmp.lt.s32.totalorder %v476, 48
        %vm661 = vcmp.lt.s32.totalorder %v477, 48
        %vm662 = vcmp.lt.s32.totalorder %v478, 48
        %vm663 = vcmp.lt.s32.totalorder %v479, 48
        %vm664 = vcmp.lt.s32.totalorder %v480, 48
        %vm665 = vcmp.lt.s32.totalorder %v481, 48
        %vm666 = vcmp.lt.s32.totalorder %v482, 48
        %vm667 = vmand %vm635, %vm651
        %vm668 = vmand %vm636, %vm652
        %vm669 = vmand %vm637, %vm653
        %vm670 = vmand %vm638, %vm654
        %vm671 = vmand %vm639, %vm655
        %vm672 = vmand %vm640, %vm656
        %vm673 = vmand %vm641, %vm657
        %vm674 = vmand %vm642, %vm658
        %vm675 = vmand %vm643, %vm659
        %vm676 = vmand %vm644, %vm660
        %vm677 = vmand %vm645, %vm661
        %vm678 = vmand %vm646, %vm662
        %vm679 = vmand %vm647, %vm663
        %vm680 = vmand %vm648, %vm664
        %vm681 = vmand %vm649, %vm665
        %vm682 = vmand %vm650, %vm666
        %vm683 = vcmp.ge.s32.totalorder %v484, 32
        %vm684 = vcmp.lt.s32.totalorder %v484, 48
        %vm685 = vmand %vm683, %vm684
        %vm686 = vmand %vm667, %vm685
        %vm687 = vmand %vm668, %vm685
        %vm688 = vmand %vm669, %vm685
        %vm689 = vmand %vm670, %vm685
        %vm690 = vmand %vm671, %vm685
        %vm691 = vmand %vm672, %vm685
        %vm692 = vmand %vm673, %vm685
        %vm693 = vmand %vm674, %vm685
        %vm694 = vmand %vm675, %vm685
        %vm695 = vmand %vm676, %vm685
        %vm696 = vmand %vm677, %vm685
        %vm697 = vmand %vm678, %vm685
        %vm698 = vmand %vm679, %vm685
        %vm699 = vmand %vm680, %vm685
        %vm700 = vmand %vm681, %vm685
        %vm701 = vmand %vm682, %vm685
        %vm702 = vmor %vm619, %vm686
        %vm703 = vmor %vm620, %vm687
        %vm704 = vmor %vm621, %vm688
        %vm705 = vmor %vm622, %vm689
        %vm706 = vmor %vm623, %vm690
        %vm707 = vmor %vm624, %vm691
        %vm708 = vmor %vm625, %vm692
        %vm709 = vmor %vm626, %vm693
        %vm710 = vmor %vm627, %vm694
        %vm711 = vmor %vm628, %vm695
        %vm712 = vmor %vm629, %vm696
        %vm713 = vmor %vm630, %vm697
        %vm714 = vmor %vm631, %vm698
        %vm715 = vmor %vm632, %vm699
        %vm716 = vmor %vm633, %vm700
        %vm717 = vmor %vm634, %vm701
        %vm718 = vcmp.ge.s32.totalorder %v467, 48
        %vm719 = vcmp.ge.s32.totalorder %v468, 48
        %vm720 = vcmp.ge.s32.totalorder %v469, 48
        %vm721 = vcmp.ge.s32.totalorder %v470, 48
        %vm722 = vcmp.ge.s32.totalorder %v471, 48
        %vm723 = vcmp.ge.s32.totalorder %v472, 48
        %vm724 = vcmp.ge.s32.totalorder %v473, 48
        %vm725 = vcmp.ge.s32.totalorder %v474, 48
        %vm726 = vcmp.ge.s32.totalorder %v475, 48
        %vm727 = vcmp.ge.s32.totalorder %v476, 48
        %vm728 = vcmp.ge.s32.totalorder %v477, 48
        %vm729 = vcmp.ge.s32.totalorder %v478, 48
        %vm730 = vcmp.ge.s32.totalorder %v479, 48
        %vm731 = vcmp.ge.s32.totalorder %v480, 48
        %vm732 = vcmp.ge.s32.totalorder %v481, 48
        %vm733 = vcmp.ge.s32.totalorder %v482, 48
        %vm734 = vcmp.lt.s32.totalorder %v467, 64
        %vm735 = vcmp.lt.s32.totalorder %v468, 64
        %vm736 = vcmp.lt.s32.totalorder %v469, 64
        %vm737 = vcmp.lt.s32.totalorder %v470, 64
        %vm738 = vcmp.lt.s32.totalorder %v471, 64
        %vm739 = vcmp.lt.s32.totalorder %v472, 64
        %vm740 = vcmp.lt.s32.totalorder %v473, 64
        %vm741 = vcmp.lt.s32.totalorder %v474, 64
        %vm742 = vcmp.lt.s32.totalorder %v475, 64
        %vm743 = vcmp.lt.s32.totalorder %v476, 64
        %vm744 = vcmp.lt.s32.totalorder %v477, 64
        %vm745 = vcmp.lt.s32.totalorder %v478, 64
        %vm746 = vcmp.lt.s32.totalorder %v479, 64
        %vm747 = vcmp.lt.s32.totalorder %v480, 64
        %vm748 = vcmp.lt.s32.totalorder %v481, 64
        %vm749 = vcmp.lt.s32.totalorder %v482, 64
        %vm750 = vmand %vm718, %vm734
        %vm751 = vmand %vm719, %vm735
        %vm752 = vmand %vm720, %vm736
        %vm753 = vmand %vm721, %vm737
        %vm754 = vmand %vm722, %vm738
        %vm755 = vmand %vm723, %vm739
        %vm756 = vmand %vm724, %vm740
        %vm757 = vmand %vm725, %vm741
        %vm758 = vmand %vm726, %vm742
        %vm759 = vmand %vm727, %vm743
        %vm760 = vmand %vm728, %vm744
        %vm761 = vmand %vm729, %vm745
        %vm762 = vmand %vm730, %vm746
        %vm763 = vmand %vm731, %vm747
        %vm764 = vmand %vm732, %vm748
        %vm765 = vmand %vm733, %vm749
        %vm766 = vcmp.ge.s32.totalorder %v484, 48
        %vm767 = vcmp.lt.s32.totalorder %v484, 64
        %vm768 = vmand %vm766, %vm767
        %vm769 = vmand %vm750, %vm768
        %vm770 = vmand %vm751, %vm768
        %vm771 = vmand %vm752, %vm768
        %vm772 = vmand %vm753, %vm768
        %vm773 = vmand %vm754, %vm768
        %vm774 = vmand %vm755, %vm768
        %vm775 = vmand %vm756, %vm768
        %vm776 = vmand %vm757, %vm768
        %vm777 = vmand %vm758, %vm768
        %vm778 = vmand %vm759, %vm768
        %vm779 = vmand %vm760, %vm768
        %vm780 = vmand %vm761, %vm768
        %vm781 = vmand %vm762, %vm768
        %vm782 = vmand %vm763, %vm768
        %vm783 = vmand %vm764, %vm768
        %vm784 = vmand %vm765, %vm768
        %vm785 = vmor %vm702, %vm769
        %vm786 = vmor %vm703, %vm770
        %vm787 = vmor %vm704, %vm771
        %vm788 = vmor %vm705, %vm772
        %vm789 = vmor %vm706, %vm773
        %vm790 = vmor %vm707, %vm774
        %vm791 = vmor %vm708, %vm775
        %vm792 = vmor %vm709, %vm776
        %vm793 = vmor %vm710, %vm777
        %vm794 = vmor %vm711, %vm778
        %vm795 = vmor %vm712, %vm779
        %vm796 = vmor %vm713, %vm780
        %vm797 = vmor %vm714, %vm781
        %vm798 = vmor %vm715, %vm782
        %vm799 = vmor %vm716, %vm783
        %vm800 = vmor %vm717, %vm784
        %vm801 = vcmp.ge.s32.totalorder %v467, 64
        %vm802 = vcmp.ge.s32.totalorder %v468, 64
        %vm803 = vcmp.ge.s32.totalorder %v469, 64
        %vm804 = vcmp.ge.s32.totalorder %v470, 64
        %vm805 = vcmp.ge.s32.totalorder %v471, 64
        %vm806 = vcmp.ge.s32.totalorder %v472, 64
        %vm807 = vcmp.ge.s32.totalorder %v473, 64
        %vm808 = vcmp.ge.s32.totalorder %v474, 64
        %vm809 = vcmp.ge.s32.totalorder %v475, 64
        %vm810 = vcmp.ge.s32.totalorder %v476, 64
        %vm811 = vcmp.ge.s32.totalorder %v477, 64
        %vm812 = vcmp.ge.s32.totalorder %v478, 64
        %vm813 = vcmp.ge.s32.totalorder %v479, 64
        %vm814 = vcmp.ge.s32.totalorder %v480, 64
        %vm815 = vcmp.ge.s32.totalorder %v481, 64
        %vm816 = vcmp.ge.s32.totalorder %v482, 64
        %vm817 = vcmp.lt.s32.totalorder %v467, 80
        %vm818 = vcmp.lt.s32.totalorder %v468, 80
        %vm819 = vcmp.lt.s32.totalorder %v469, 80
        %vm820 = vcmp.lt.s32.totalorder %v470, 80
        %vm821 = vcmp.lt.s32.totalorder %v471, 80
        %vm822 = vcmp.lt.s32.totalorder %v472, 80
        %vm823 = vcmp.lt.s32.totalorder %v473, 80
        %vm824 = vcmp.lt.s32.totalorder %v474, 80
        %vm825 = vcmp.lt.s32.totalorder %v475, 80
        %vm826 = vcmp.lt.s32.totalorder %v476, 80
        %vm827 = vcmp.lt.s32.totalorder %v477, 80
        %vm828 = vcmp.lt.s32.totalorder %v478, 80
        %vm829 = vcmp.lt.s32.totalorder %v479, 80
        %vm830 = vcmp.lt.s32.totalorder %v480, 80
        %vm831 = vcmp.lt.s32.totalorder %v481, 80
        %vm832 = vcmp.lt.s32.totalorder %v482, 80
        %vm833 = vmand %vm801, %vm817
        %vm834 = vmand %vm802, %vm818
        %vm835 = vmand %vm803, %vm819
        %vm836 = vmand %vm804, %vm820
        %vm837 = vmand %vm805, %vm821
        %vm838 = vmand %vm806, %vm822
        %vm839 = vmand %vm807, %vm823
        %vm840 = vmand %vm808, %vm824
        %vm841 = vmand %vm809, %vm825
        %vm842 = vmand %vm810, %vm826
        %vm843 = vmand %vm811, %vm827
        %vm844 = vmand %vm812, %vm828
        %vm845 = vmand %vm813, %vm829
        %vm846 = vmand %vm814, %vm830
        %vm847 = vmand %vm815, %vm831
        %vm848 = vmand %vm816, %vm832
        %vm849 = vcmp.ge.s32.totalorder %v484, 64
        %vm850 = vcmp.lt.s32.totalorder %v484, 80
        %vm851 = vmand %vm849, %vm850
        %vm852 = vmand %vm833, %vm851
        %vm853 = vmand %vm834, %vm851
        %vm854 = vmand %vm835, %vm851
        %vm855 = vmand %vm836, %vm851
        %vm856 = vmand %vm837, %vm851
        %vm857 = vmand %vm838, %vm851
        %vm858 = vmand %vm839, %vm851
        %vm859 = vmand %vm840, %vm851
        %vm860 = vmand %vm841, %vm851
        %vm861 = vmand %vm842, %vm851
        %vm862 = vmand %vm843, %vm851
        %vm863 = vmand %vm844, %vm851
        %vm864 = vmand %vm845, %vm851
        %vm865 = vmand %vm846, %vm851
        %vm866 = vmand %vm847, %vm851
        %vm867 = vmand %vm848, %vm851
        %vm868 = vmor %vm785, %vm852
        %vm869 = vmor %vm786, %vm853
        %vm870 = vmor %vm787, %vm854
        %vm871 = vmor %vm788, %vm855
        %vm872 = vmor %vm789, %vm856
        %vm873 = vmor %vm790, %vm857
        %vm874 = vmor %vm791, %vm858
        %vm875 = vmor %vm792, %vm859
        %vm876 = vmor %vm793, %vm860
        %vm877 = vmor %vm794, %vm861
        %vm878 = vmor %vm795, %vm862
        %vm879 = vmor %vm796, %vm863
        %vm880 = vmor %vm797, %vm864
        %vm881 = vmor %vm798, %vm865
        %vm882 = vmor %vm799, %vm866
        %vm883 = vmor %vm800, %vm867
        %vm884 = vcmp.ge.s32.totalorder %v467, 80
        %vm885 = vcmp.ge.s32.totalorder %v468, 80
        %vm886 = vcmp.ge.s32.totalorder %v469, 80
        %vm887 = vcmp.ge.s32.totalorder %v470, 80
        %vm888 = vcmp.ge.s32.totalorder %v471, 80
        %vm889 = vcmp.ge.s32.totalorder %v472, 80
        %vm890 = vcmp.ge.s32.totalorder %v473, 80
        %vm891 = vcmp.ge.s32.totalorder %v474, 80
        %vm892 = vcmp.ge.s32.totalorder %v475, 80
        %vm893 = vcmp.ge.s32.totalorder %v476, 80
        %vm894 = vcmp.ge.s32.totalorder %v477, 80
        %vm895 = vcmp.ge.s32.totalorder %v478, 80
        %vm896 = vcmp.ge.s32.totalorder %v479, 80
        %vm897 = vcmp.ge.s32.totalorder %v480, 80
        %vm898 = vcmp.ge.s32.totalorder %v481, 80
        %vm899 = vcmp.ge.s32.totalorder %v482, 80
        %vm900 = vcmp.lt.s32.totalorder %v467, 96
        %vm901 = vcmp.lt.s32.totalorder %v468, 96
        %vm902 = vcmp.lt.s32.totalorder %v469, 96
        %vm903 = vcmp.lt.s32.totalorder %v470, 96
        %vm904 = vcmp.lt.s32.totalorder %v471, 96
        %vm905 = vcmp.lt.s32.totalorder %v472, 96
        %vm906 = vcmp.lt.s32.totalorder %v473, 96
        %vm907 = vcmp.lt.s32.totalorder %v474, 96
        %vm908 = vcmp.lt.s32.totalorder %v475, 96
        %vm909 = vcmp.lt.s32.totalorder %v476, 96
        %vm910 = vcmp.lt.s32.totalorder %v477, 96
        %vm911 = vcmp.lt.s32.totalorder %v478, 96
        %vm912 = vcmp.lt.s32.totalorder %v479, 96
        %vm913 = vcmp.lt.s32.totalorder %v480, 96
        %vm914 = vcmp.lt.s32.totalorder %v481, 96
        %vm915 = vcmp.lt.s32.totalorder %v482, 96
        %vm916 = vmand %vm884, %vm900
        %vm917 = vmand %vm885, %vm901
        %vm918 = vmand %vm886, %vm902
        %vm919 = vmand %vm887, %vm903
        %vm920 = vmand %vm888, %vm904
        %vm921 = vmand %vm889, %vm905
        %vm922 = vmand %vm890, %vm906
        %vm923 = vmand %vm891, %vm907
        %vm924 = vmand %vm892, %vm908
        %vm925 = vmand %vm893, %vm909
        %vm926 = vmand %vm894, %vm910
        %vm927 = vmand %vm895, %vm911
        %vm928 = vmand %vm896, %vm912
        %vm929 = vmand %vm897, %vm913
        %vm930 = vmand %vm898, %vm914
        %vm931 = vmand %vm899, %vm915
        %vm932 = vcmp.ge.s32.totalorder %v484, 80
        %vm933 = vcmp.lt.s32.totalorder %v484, 96
        %vm934 = vmand %vm932, %vm933
        %vm935 = vmand %vm916, %vm934
        %vm936 = vmand %vm917, %vm934
        %vm937 = vmand %vm918, %vm934
        %vm938 = vmand %vm919, %vm934
        %vm939 = vmand %vm920, %vm934
        %vm940 = vmand %vm921, %vm934
        %vm941 = vmand %vm922, %vm934
        %vm942 = vmand %vm923, %vm934
        %vm943 = vmand %vm924, %vm934
        %vm944 = vmand %vm925, %vm934
        %vm945 = vmand %vm926, %vm934
        %vm946 = vmand %vm927, %vm934
        %vm947 = vmand %vm928, %vm934
        %vm948 = vmand %vm929, %vm934
        %vm949 = vmand %vm930, %vm934
        %vm950 = vmand %vm931, %vm934
        %vm951 = vmor %vm868, %vm935
        %vm952 = vmor %vm869, %vm936
        %vm953 = vmor %vm870, %vm937
        %vm954 = vmor %vm871, %vm938
        %vm955 = vmor %vm872, %vm939
        %vm956 = vmor %vm873, %vm940
        %vm957 = vmor %vm874, %vm941
        %vm958 = vmor %vm875, %vm942
        %vm959 = vmor %vm876, %vm943
        %vm960 = vmor %vm877, %vm944
        %vm961 = vmor %vm878, %vm945
        %vm962 = vmor %vm879, %vm946
        %vm963 = vmor %vm880, %vm947
        %vm964 = vmor %vm881, %vm948
        %vm965 = vmor %vm882, %vm949
        %vm966 = vmor %vm883, %vm950
        %vm967 = vcmp.ge.s32.totalorder %v467, 96
        %vm968 = vcmp.ge.s32.totalorder %v468, 96
        %vm969 = vcmp.ge.s32.totalorder %v469, 96
        %vm970 = vcmp.ge.s32.totalorder %v470, 96
        %vm971 = vcmp.ge.s32.totalorder %v471, 96
        %vm972 = vcmp.ge.s32.totalorder %v472, 96
        %vm973 = vcmp.ge.s32.totalorder %v473, 96
        %vm974 = vcmp.ge.s32.totalorder %v474, 96
        %vm975 = vcmp.ge.s32.totalorder %v475, 96
        %vm976 = vcmp.ge.s32.totalorder %v476, 96
        %vm977 = vcmp.ge.s32.totalorder %v477, 96
        %vm978 = vcmp.ge.s32.totalorder %v478, 96
        %vm979 = vcmp.ge.s32.totalorder %v479, 96
        %vm980 = vcmp.ge.s32.totalorder %v480, 96
        %vm981 = vcmp.ge.s32.totalorder %v481, 96
        %vm982 = vcmp.ge.s32.totalorder %v482, 96
        %vm983 = vcmp.lt.s32.totalorder %v467, 112
        %vm984 = vcmp.lt.s32.totalorder %v468, 112
        %vm985 = vcmp.lt.s32.totalorder %v469, 112
        %vm986 = vcmp.lt.s32.totalorder %v470, 112
        %vm987 = vcmp.lt.s32.totalorder %v471, 112
        %vm988 = vcmp.lt.s32.totalorder %v472, 112
        %vm989 = vcmp.lt.s32.totalorder %v473, 112
        %vm990 = vcmp.lt.s32.totalorder %v474, 112
        %vm991 = vcmp.lt.s32.totalorder %v475, 112
        %vm992 = vcmp.lt.s32.totalorder %v476, 112
        %vm993 = vcmp.lt.s32.totalorder %v477, 112
        %vm994 = vcmp.lt.s32.totalorder %v478, 112
        %vm995 = vcmp.lt.s32.totalorder %v479, 112
        %vm996 = vcmp.lt.s32.totalorder %v480, 112
        %vm997 = vcmp.lt.s32.totalorder %v481, 112
        %vm998 = vcmp.lt.s32.totalorder %v482, 112
        %vm999 = vmand %vm967, %vm983
        %vm1000 = vmand %vm968, %vm984
        %vm1001 = vmand %vm969, %vm985
        %vm1002 = vmand %vm970, %vm986
        %vm1003 = vmand %vm971, %vm987
        %vm1004 = vmand %vm972, %vm988
        %vm1005 = vmand %vm973, %vm989
        %vm1006 = vmand %vm974, %vm990
        %vm1007 = vmand %vm975, %vm991
        %vm1008 = vmand %vm976, %vm992
        %vm1009 = vmand %vm977, %vm993
        %vm1010 = vmand %vm978, %vm994
        %vm1011 = vmand %vm979, %vm995
        %vm1012 = vmand %vm980, %vm996
        %vm1013 = vmand %vm981, %vm997
        %vm1014 = vmand %vm982, %vm998
        %vm1015 = vcmp.ge.s32.totalorder %v484, 96
        %vm1016 = vcmp.lt.s32.totalorder %v484, 112
        %vm1017 = vmand %vm1015, %vm1016
        %vm1018 = vmand %vm999, %vm1017
        %vm1019 = vmand %vm1000, %vm1017
        %vm1020 = vmand %vm1001, %vm1017
        %vm1021 = vmand %vm1002, %vm1017
        %vm1022 = vmand %vm1003, %vm1017
        %vm1023 = vmand %vm1004, %vm1017
        %vm1024 = vmand %vm1005, %vm1017
        %vm1025 = vmand %vm1006, %vm1017
        %vm1026 = vmand %vm1007, %vm1017
        %vm1027 = vmand %vm1008, %vm1017
        %vm1028 = vmand %vm1009, %vm1017
        %vm1029 = vmand %vm1010, %vm1017
        %vm1030 = vmand %vm1011, %vm1017
        %vm1031 = vmand %vm1012, %vm1017
        %vm1032 = vmand %vm1013, %vm1017
        %vm1033 = vmand %vm1014, %vm1017
        %vm1034 = vmor %vm951, %vm1018
        %vm1035 = vmor %vm952, %vm1019
        %vm1036 = vmor %vm953, %vm1020
        %vm1037 = vmor %vm954, %vm1021
        %vm1038 = vmor %vm955, %vm1022
        %vm1039 = vmor %vm956, %vm1023
        %vm1040 = vmor %vm957, %vm1024
        %vm1041 = vmor %vm958, %vm1025
        %vm1042 = vmor %vm959, %vm1026
        %vm1043 = vmor %vm960, %vm1027
        %vm1044 = vmor %vm961, %vm1028
        %vm1045 = vmor %vm962, %vm1029
        %vm1046 = vmor %vm963, %vm1030
        %vm1047 = vmor %vm964, %vm1031
        %vm1048 = vmor %vm965, %vm1032
        %vm1049 = vmor %vm966, %vm1033
        %vm1050 = vcmp.ge.s32.totalorder %v467, 112
        %vm1051 = vcmp.ge.s32.totalorder %v468, 112
        %vm1052 = vcmp.ge.s32.totalorder %v469, 112
        %vm1053 = vcmp.ge.s32.totalorder %v470, 112
        %vm1054 = vcmp.ge.s32.totalorder %v471, 112
        %vm1055 = vcmp.ge.s32.totalorder %v472, 112
        %vm1056 = vcmp.ge.s32.totalorder %v473, 112
        %vm1057 = vcmp.ge.s32.totalorder %v474, 112
        %vm1058 = vcmp.ge.s32.totalorder %v475, 112
        %vm1059 = vcmp.ge.s32.totalorder %v476, 112
        %vm1060 = vcmp.ge.s32.totalorder %v477, 112
        %vm1061 = vcmp.ge.s32.totalorder %v478, 112
        %vm1062 = vcmp.ge.s32.totalorder %v479, 112
        %vm1063 = vcmp.ge.s32.totalorder %v480, 112
        %vm1064 = vcmp.ge.s32.totalorder %v481, 112
        %vm1065 = vcmp.ge.s32.totalorder %v482, 112
        %vm1066 = vcmp.lt.s32.totalorder %v467, 128
        %vm1067 = vcmp.lt.s32.totalorder %v468, 128
        %vm1068 = vcmp.lt.s32.totalorder %v469, 128
        %vm1069 = vcmp.lt.s32.totalorder %v470, 128
        %vm1070 = vcmp.lt.s32.totalorder %v471, 128
        %vm1071 = vcmp.lt.s32.totalorder %v472, 128
        %vm1072 = vcmp.lt.s32.totalorder %v473, 128
        %vm1073 = vcmp.lt.s32.totalorder %v474, 128
        %vm1074 = vcmp.lt.s32.totalorder %v475, 128
        %vm1075 = vcmp.lt.s32.totalorder %v476, 128
        %vm1076 = vcmp.lt.s32.totalorder %v477, 128
        %vm1077 = vcmp.lt.s32.totalorder %v478, 128
        %vm1078 = vcmp.lt.s32.totalorder %v479, 128
        %vm1079 = vcmp.lt.s32.totalorder %v480, 128
        %vm1080 = vcmp.lt.s32.totalorder %v481, 128
        %vm1081 = vcmp.lt.s32.totalorder %v482, 128
        %vm1082 = vmand %vm1050, %vm1066
        %vm1083 = vmand %vm1051, %vm1067
        %vm1084 = vmand %vm1052, %vm1068
        %vm1085 = vmand %vm1053, %vm1069
        %vm1086 = vmand %vm1054, %vm1070
        %vm1087 = vmand %vm1055, %vm1071
        %vm1088 = vmand %vm1056, %vm1072
        %vm1089 = vmand %vm1057, %vm1073
        %vm1090 = vmand %vm1058, %vm1074
        %vm1091 = vmand %vm1059, %vm1075
        %vm1092 = vmand %vm1060, %vm1076
        %vm1093 = vmand %vm1061, %vm1077
        %vm1094 = vmand %vm1062, %vm1078
        %vm1095 = vmand %vm1063, %vm1079
        %vm1096 = vmand %vm1064, %vm1080
        %vm1097 = vmand %vm1065, %vm1081
        %vm1098 = vcmp.ge.s32.totalorder %v484, 112
        %vm1099 = vcmp.lt.s32.totalorder %v484, 128
        %vm1100 = vmand %vm1098, %vm1099
        %vm1101 = vmand %vm1082, %vm1100
        %vm1102 = vmand %vm1083, %vm1100
        %vm1103 = vmand %vm1084, %vm1100
        %vm1104 = vmand %vm1085, %vm1100
        %vm1105 = vmand %vm1086, %vm1100
        %vm1106 = vmand %vm1087, %vm1100
        %vm1107 = vmand %vm1088, %vm1100
        %vm1108 = vmand %vm1089, %vm1100
        %vm1109 = vmand %vm1090, %vm1100
        %vm1110 = vmand %vm1091, %vm1100
        %vm1111 = vmand %vm1092, %vm1100
        %vm1112 = vmand %vm1093, %vm1100
        %vm1113 = vmand %vm1094, %vm1100
        %vm1114 = vmand %vm1095, %vm1100
        %vm1115 = vmand %vm1096, %vm1100
        %vm1116 = vmand %vm1097, %vm1100
        %vm1117 = vmor %vm1034, %vm1101
        %vm1118 = vmor %vm1035, %vm1102
        %vm1119 = vmor %vm1036, %vm1103
        %vm1120 = vmor %vm1037, %vm1104
        %vm1121 = vmor %vm1038, %vm1105
        %vm1122 = vmor %vm1039, %vm1106
        %vm1123 = vmor %vm1040, %vm1107
        %vm1124 = vmor %vm1041, %vm1108
        %vm1125 = vmor %vm1042, %vm1109
        %vm1126 = vmor %vm1043, %vm1110
        %vm1127 = vmor %vm1044, %vm1111
        %vm1128 = vmor %vm1045, %vm1112
        %vm1129 = vmor %vm1046, %vm1113
        %vm1130 = vmor %vm1047, %vm1114
        %vm1131 = vmor %vm1048, %vm1115
        %vm1132 = vmor %vm1049, %vm1116
        %v1133 = vsel %vm1117, %v427, inf
        %v1134 = vsel %vm1118, %v429, inf
        %v1135 = vsel %vm1119, %v432, inf
        %v1136 = vsel %vm1120, %v434, inf
        %v1137 = vsel %vm1121, %v437, inf
        %v1138 = vsel %vm1122, %v439, inf
        %v1139 = vsel %vm1123, %v442, inf
        %v1140 = vsel %vm1124, %v444, inf
        %v1141 = vsel %vm1125, %v447, inf
        %v1142 = vsel %vm1126, %v449, inf
        %v1143 = vsel %vm1127, %v452, inf
        %v1144 = vsel %vm1128, %v454, inf
        %v1145 = vsel %vm1129, %v457, inf
        %v1146 = vsel %vm1130, %v459, inf
        %v1147 = vsel %vm1131, %v462, inf
        %v1148 = vsel %vm1132, %v464, inf
        %1149 = vmin.xlane.f32.xlu0 %v1133
        %v1150 = vpop.xlane.xlu0 %1149
        %1151 = vmin.xlane.f32.xlu0 %v1134
        %v1152 = vpop.xlane.xlu0 %1151
        %1153 = vmin.xlane.f32.xlu0 %v1135
        %v1154 = vpop.xlane.xlu0 %1153
        %1155 = vmin.xlane.f32.xlu0 %v1136
        %v1156 = vpop.xlane.xlu0 %1155
        %1157 = vmin.xlane.f32.xlu0 %v1137
        %v1158 = vpop.xlane.xlu0 %1157
        %1159 = vmin.xlane.f32.xlu0 %v1138
        %v1160 = vpop.xlane.xlu0 %1159
        %1161 = vmin.xlane.f32.xlu0 %v1139
        %v1162 = vpop.xlane.xlu0 %1161
        %1163 = vmin.xlane.f32.xlu0 %v1140
        %v1164 = vpop.xlane.xlu0 %1163
        %1165 = vmin.xlane.f32.xlu0 %v1141
        %v1166 = vpop.xlane.xlu0 %1165
        %1167 = vmin.xlane.f32.xlu0 %v1142
        %v1168 = vpop.xlane.xlu0 %1167
        %1169 = vmin.xlane.f32.xlu0 %v1143
        %v1170 = vpop.xlane.xlu0 %1169
        %1171 = vmin.xlane.f32.xlu0 %v1144
        %v1172 = vpop.xlane.xlu0 %1171
        %1173 = vmin.xlane.f32.xlu0 %v1145
        %v1174 = vpop.xlane.xlu0 %1173
        %1175 = vmin.xlane.f32.xlu0 %v1146
        %v1176 = vpop.xlane.xlu0 %1175
        %1177 = vmin.xlane.f32.xlu0 %v1147
        %v1178 = vpop.xlane.xlu0 %1177
        %1179 = vmin.xlane.f32.xlu0 %v1148
        %v1180 = vpop.xlane.xlu0 %1179
        %v1181 = vsub.f32 %v1150, %v427
        %v1182 = vsub.f32 %v1152, %v429
        %v1183 = vsub.f32 %v1154, %v432
        %v1184 = vsub.f32 %v1156, %v434
        %v1185 = vsub.f32 %v1158, %v437
        %v1186 = vsub.f32 %v1160, %v439
        %v1187 = vsub.f32 %v1162, %v442
        %v1188 = vsub.f32 %v1164, %v444
        %v1189 = vsub.f32 %v1166, %v447
        %v1190 = vsub.f32 %v1168, %v449
        %v1191 = vsub.f32 %v1170, %v452
        %v1192 = vsub.f32 %v1172, %v454
        %v1193 = vsub.f32 %v1174, %v457
        %v1194 = vsub.f32 %v1176, %v459
        %v1195 = vsub.f32 %v1178, %v462
        %v1196 = vsub.f32 %v1180, %v464
        %v1197 = vsel %vm1117, %v1181, -inf
        %v1198 = vsel %vm1118, %v1182, -inf
        %v1199 = vsel %vm1119, %v1183, -inf
        %v1200 = vsel %vm1120, %v1184, -inf
        %v1201 = vsel %vm1121, %v1185, -inf
        %v1202 = vsel %vm1122, %v1186, -inf
        %v1203 = vsel %vm1123, %v1187, -inf
        %v1204 = vsel %vm1124, %v1188, -inf
        %v1205 = vsel %vm1125, %v1189, -inf
        %v1206 = vsel %vm1126, %v1190, -inf
        %v1207 = vsel %vm1127, %v1191, -inf
        %v1208 = vsel %vm1128, %v1192, -inf
        %v1209 = vsel %vm1129, %v1193, -inf
        %v1210 = vsel %vm1130, %v1194, -inf
        %v1211 = vsel %vm1131, %v1195, -inf
        %v1212 = vsel %vm1132, %v1196, -inf
        %v1213 = vmul.f32 %v1197, 1.442695
        %v1214 = vpow.pop %v1213
        %v1215 = vmul.f32 %v1198, 1.442695
        %v1216 = vpow.pop %v1215
        %v1217 = vmul.f32 %v1199, 1.442695
        %v1218 = vpow.pop %v1217
        %v1219 = vmul.f32 %v1200, 1.442695
        %v1220 = vpow.pop %v1219
        %v1221 = vmul.f32 %v1201, 1.442695
        %v1222 = vpow.pop %v1221
        %v1223 = vmul.f32 %v1202, 1.442695
        %v1224 = vpow.pop %v1223
        %v1225 = vmul.f32 %v1203, 1.442695
        %v1226 = vpow.pop %v1225
        %v1227 = vmul.f32 %v1204, 1.442695
        %v1228 = vpow.pop %v1227
        %v1229 = vmul.f32 %v1205, 1.442695
        %v1230 = vpow.pop %v1229
        %v1231 = vmul.f32 %v1206, 1.442695
        %v1232 = vpow.pop %v1231
        %v1233 = vmul.f32 %v1207, 1.442695
        %v1234 = vpow.pop %v1233
        %v1235 = vmul.f32 %v1208, 1.442695
        %v1236 = vpow.pop %v1235
        %v1237 = vmul.f32 %v1209, 1.442695
        %v1238 = vpow.pop %v1237
        %v1239 = vmul.f32 %v1210, 1.442695
        %v1240 = vpow.pop %v1239
        %v1241 = vmul.f32 %v1211, 1.442695
        %v1242 = vpow.pop %v1241
        %v1243 = vmul.f32 %v1212, 1.442695
        %v1244 = vpow.pop %v1243
        %1245 = vadd.xlane.f32.xlu0 %v1214
        %v1246 = vpop.xlane.xlu0 %1245
        %1247 = vadd.xlane.f32.xlu0 %v1216
        %v1248 = vpop.xlane.xlu0 %1247
        %1249 = vadd.xlane.f32.xlu0 %v1218
        %v1250 = vpop.xlane.xlu0 %1249
        %1251 = vadd.xlane.f32.xlu0 %v1220
        %v1252 = vpop.xlane.xlu0 %1251
        %1253 = vadd.xlane.f32.xlu0 %v1222
        %v1254 = vpop.xlane.xlu0 %1253
        %1255 = vadd.xlane.f32.xlu0 %v1224
        %v1256 = vpop.xlane.xlu0 %1255
        %1257 = vadd.xlane.f32.xlu0 %v1226
        %v1258 = vpop.xlane.xlu0 %1257
        %1259 = vadd.xlane.f32.xlu0 %v1228
        %v1260 = vpop.xlane.xlu0 %1259
        %1261 = vadd.xlane.f32.xlu0 %v1230
        %v1262 = vpop.xlane.xlu0 %1261
        %1263 = vadd.xlane.f32.xlu0 %v1232
        %v1264 = vpop.xlane.xlu0 %1263
        %1265 = vadd.xlane.f32.xlu0 %v1234
        %v1266 = vpop.xlane.xlu0 %1265
        %1267 = vadd.xlane.f32.xlu0 %v1236
        %v1268 = vpop.xlane.xlu0 %1267
        %1269 = vadd.xlane.f32.xlu0 %v1238
        %v1270 = vpop.xlane.xlu0 %1269
        %1271 = vadd.xlane.f32.xlu0 %v1240
        %v1272 = vpop.xlane.xlu0 %1271
        %1273 = vadd.xlane.f32.xlu0 %v1242
        %v1274 = vpop.xlane.xlu0 %1273
        %1275 = vadd.xlane.f32.xlu0 %v1244
        %v1276 = vpop.xlane.xlu0 %1275
        %v1277 = vrcp.pop %v1246
        %v1278 = vrcp.pop %v1248
        %v1279 = vrcp.pop %v1250
        %v1280 = vrcp.pop %v1252
        %v1281 = vrcp.pop %v1254
        %v1282 = vrcp.pop %v1256
        %v1283 = vrcp.pop %v1258
        %v1284 = vrcp.pop %v1260
        %v1285 = vrcp.pop %v1262
        %v1286 = vrcp.pop %v1264
        %v1287 = vrcp.pop %v1266
        %v1288 = vrcp.pop %v1268
        %v1289 = vrcp.pop %v1270
        %v1290 = vrcp.pop %v1272
        %v1291 = vrcp.pop %v1274
        %v1292 = vrcp.pop %v1276
        %v1293 = vmul.f32 %v1214, %v1277
        %v1294 = vmul.f32 %v1216, %v1278
        %v1295 = vmul.f32 %v1218, %v1279
        %v1296 = vmul.f32 %v1220, %v1280
        %v1297 = vmul.f32 %v1222, %v1281
        %v1298 = vmul.f32 %v1224, %v1282
        %v1299 = vmul.f32 %v1226, %v1283
        %v1300 = vmul.f32 %v1228, %v1284
        %v1301 = vmul.f32 %v1230, %v1285
        %v1302 = vmul.f32 %v1232, %v1286
        %v1303 = vmul.f32 %v1234, %v1287
        %v1304 = vmul.f32 %v1236, %v1288
        %v1305 = vmul.f32 %v1238, %v1289
        %v1306 = vmul.f32 %v1240, %v1290
        %v1307 = vmul.f32 %v1242, %v1291
        %v1308 = vmul.f32 %v1244, %v1292
        %v1309 = vpack.c.bf16 %v1294, %v1293
        %v1310 = vpack.c.bf16 %v1296, %v1295
        %v1311 = vpack.c.bf16 %v1298, %v1297
        %v1312 = vpack.c.bf16 %v1300, %v1299
        %v1313 = vpack.c.bf16 %v1302, %v1301
        %v1314 = vpack.c.bf16 %v1304, %v1303
        %v1315 = vpack.c.bf16 %v1306, %v1305
        %v1316 = vpack.c.bf16 %v1308, %v1307
        %1317 = vmatpush.bf16.msra.mxu0 %v1316
        %1318 = vmatpush.bf16.msra.mxu0 %v1315
        %1319 = vmatpush.bf16.msra.mxu0 %v1314
        %1320 = vmatpush.bf16.msra.mxu0 %v1313
        %1321 = vmatpush.bf16.msra.mxu0 %v1312
        %1322 = vmatpush.bf16.msra.mxu0 %v1311
        %1323 = vmatpush.bf16.msra.mxu0 %v1310
        %1324 = vmatpush.bf16.msra.mxu0 %v1309
        %1325 = vmatmul.bf16.gmra.mxu0 %v374
        %v1326 = vpop.f32.mrf.mxu0
        %v1327 = vadd.f32 0.0, %v1326
        %v1328 = vpop.f32.mrf.mxu0
        %v1329 = vadd.f32 0.0, %v1328
        %1330 = vmatmul.bf16.gmra.mxu0 %v375
        %v1331 = vpop.f32.mrf.mxu0
        %v1332 = vadd.f32 0.0, %v1331
        %v1333 = vpop.f32.mrf.mxu0
        %v1334 = vadd.f32 0.0, %v1333
        %1335 = vdwg.mxu0
        %s1336 = sld [smem:[#allocation2]]
        %v1337 = vstv %s1336
        %v1338 = vmul.f32 %v1337, %v1327
        %v1339 = vmul.f32 %v1337, %v1329
        %v1340 = vmul.f32 %v1337, %v1332
        %v1341 = vmul.f32 %v1337, %v1334
        %1342 = vxpose.xlu0.b32.start [1/16] %v198, 128
        %1343 = vxpose.xlu0.b32.cont [2/16] %v199, 128
        %1344 = vxpose.xlu0.b32.cont [3/16] %v200, 128
        %1345 = vxpose.xlu0.b32.cont [4/16] %v201, 128
        %1346 = vxpose.xlu0.b32.cont [5/16] %v202, 128
        %1347 = vxpose.xlu0.b32.cont [6/16] %v203, 128
        %1348 = vxpose.xlu0.b32.cont [7/16] %v204, 128
        %1349 = vxpose.xlu0.b32.cont [8/16] %v205, 128
        %1350 = vxpose.xlu0.b32.cont [9/16] %v206, 128
        %1351 = vxpose.xlu0.b32.cont [10/16] %v207, 128
        %1352 = vxpose.xlu0.b32.cont [11/16] %v208, 128
        %1353 = vxpose.xlu0.b32.cont [12/16] %v209, 128
        %1354 = vxpose.xlu0.b32.cont [13/16] %v210, 128
        %1355 = vxpose.xlu0.b32.cont [14/16] %v211, 128
        %1356 = vxpose.xlu0.b32.cont [15/16] %v212, 128
        %1357 = vxpose.xlu0.b32.end [16/16] %v213, 128
        %v1358 = vpop.trf.xlu0
        %v1359 = vpop.trf.xlu0
        %v1360 = vpop.trf.xlu0
        %v1361 = vpop.trf.xlu0
        %v1362 = vpop.trf.xlu0
        %v1363 = vpop.trf.xlu0
        %v1364 = vpop.trf.xlu0
        %v1365 = vpop.trf.xlu0
        %v1366 = vpop.trf.xlu0
        %v1367 = vpop.trf.xlu0
        %v1368 = vpop.trf.xlu0
        %v1369 = vpop.trf.xlu0
        %v1370 = vpop.trf.xlu0
        %v1371 = vpop.trf.xlu0
        %v1372 = vpop.trf.xlu0
        %v1373 = vpop.trf.xlu0
        %v1374 = vadd.f32 %v1338, %v1358
        %v1375 = vadd.f32 %v1339, %v1359
        %v1376 = vadd.f32 %v1340, %v1360
        %v1377 = vadd.f32 %v1341, %v1361
        %1378 = vst [vmem:[%s191] sm:$0xff] %v1374
        %1379 = vst [vmem:[%s191 + $0x8] sm:$0xff] %v1375
        %1380 = vst [vmem:[%s191 + $0x10] sm:$0xff] %v1376
        %1381 = vst [vmem:[%s191 + $0x18] sm:$0xff] %v1377
        %s1382 = sand.u32 %s116, 1
        %s1383 = scalar_lea.sflag [#allocation4], %s1382
        %s1384 = sand.u32 %s116, 1
        %s1385 = smul.addr %s1384, 32
        %s1386 = scalar_lea.vmem [#allocation3], %s1385
        // Predicated region
        $region37: #{tpu_custom_call.1} parent=35 // pred_check
          %p1387 = pneg %p126
        $region38: #{tpu_custom_call.1} parent=35 // pred_check_branch
          %1389 = sbr.rel (%p1387) target = $region40
        $region39: #{tpu_custom_call.1} parent=35 // pred_region
          %1391 = vsyncadd %s1383, 0
          %s1392 = smul.addr %s19, 4
          %s1393 = smul.addr %s1392, 8
          %s1394 = scalar_lea.hbm %s4, %s1393
          %s1395 = sshll.u32 %s1386, 4
          %s1396 = int_to_ptr.vmem [resolvable:$true] %s1395
          %s1397 = sshll.u32 %s1394, 4
          %s1398 = int_to_ptr.hbm [resolvable:$true] %s1397
          %1403 = dma.vmem_to_hbm [thread:$0]  %s1396, 512, %s1398, %s1383, 128, 128, 8
        $region40: #{tpu_custom_call.1} parent=35 // pred_fallthru
          _
      $region36: #{tpu_custom_call.1} parent=5 // pred_fallthru
        _
      %p1404 = scmp.le.s32.totalorder 2, %s14
      // Predicated region
      $region41: #{tpu_custom_call.1} parent=5 // pred_check
        %p1405 = pneg %p1404
      $region42: #{tpu_custom_call.1} parent=5 // pred_check_branch
        %1407 = sbr.rel (%p1405) target = $region44
      $region43: #{tpu_custom_call.1} parent=5 // pred_region
        %s1408 = ssub.s32 %s14, 2
        // Predicated region
        $region45: #{tpu_custom_call.1} parent=43 // pred_check
          %p1409 = pneg %p132
        $region46: #{tpu_custom_call.1} parent=43 // pred_check_branch
          %1411 = sbr.rel (%p1409) target = $region48
        $region47: #{tpu_custom_call.1} parent=43 // pred_region
          %s1412 = sand.u32 %s117, 1
          %s1413 = scalar_lea.sflag [#allocation4], %s1412
          %s1414 = sand.u32 %s117, 1
          %s1415 = smul.addr %s1414, 32
          %s1416 = scalar_lea.vmem [#allocation3], %s1415
          %1418 = dma.done %s1413, 512
        $region48: #{tpu_custom_call.1} parent=43 // pred_fallthru
          _
      $region44: #{tpu_custom_call.1} parent=5 // pred_fallthru
        _
    $region6: #{tpu_custom_call.1} parent=1 // loop_footer
      %s18 = sadd.s32 1, %s14
    $region7: #{tpu_custom_call.1} parent=1 // loop_footer_branch
      %13 = sbr.rel target = $region3
    $region8: #{tpu_custom_call.1} parent=1 // loop_exit
      _
    %1419 = vsyncpa [#allocation4], 1
    %s1420 = scalar_lea.sflag [#allocation4], 1
    %1421 = vsyncpa %s1420, 1

</llo_original>
